<compile_context>
chip_gen: v5e
topology: v5e:2x2
jax: 0.10.0
libtpu: 0.0.40
codegen_flags: <defaults>
</compile_context>

<pallas_src>
import numpy as np
import jax
import jax.numpy as jnp
from jax.experimental import pallas as pl
from jax.experimental.pallas import tpu as pltpu

_W_DT = jnp.bfloat16          # weight / matmul-operand dtype
_OUT_LANES = 128              # packed output slab width (mean lanes 0:A, v lane A)


def _round_up(x, m):
    return (x + m - 1) // m * m


# ----------------------------------------------------------------------------
# Pallas kernel: whole MLP (fused actor + critic) for one batch tile.
# Weights are VMEM-resident (constant block index across the batch grid).
# ----------------------------------------------------------------------------
def qnetwork_kernel(state_ref,
                    w1, b1,
                    wfc2, bfc2, wfc3, bfc3, wfc4, bfc4,
                    wl2, bl2, wl3, bl3, wl4, bl4,
                    w5a, w5c, b5,
                    out_ref):
    P1 = wfc2.shape[0]                      # padded fc1_units (static)
    x = state_ref[...]                      # (TB, S) f32

    def lin(h, w_r, b_r):
        # bf16 operands, f32 accumulation; bias add in f32.
        return jnp.dot(h.astype(_W_DT), w_r[...],
                       preferred_element_type=jnp.float32) + b_r[...]

    # ----- fused layer 1 (fc1 | l1 share the same input) -----
    h1 = jnp.maximum(lin(x, w1, b1), 0.0)   # (TB, 2*P1)
    a = h1[:, :P1]                          # actor stream
    c = h1[:, P1:]                          # critic stream

    # ----- actor head -----
    a = jnp.maximum(lin(a, wfc2, bfc2), 0.0)
    a = jnp.maximum(lin(a, wfc3, bfc3), 0.0)
    a = jnp.tanh(lin(a, wfc4, bfc4))

    # ----- critic head -----
    c = jnp.maximum(lin(c, wl2, bl2), 0.0)
    c = jnp.maximum(lin(c, wl3, bl3), 0.0)
    c = lin(c, wl4, bl4)                    # no activation (matches torch)

    # ----- packed output: mean in lanes 0:A (via w5a), v in lane A (via w5c) -----
    out = (jnp.dot(a.astype(_W_DT), w5a[...], preferred_element_type=jnp.float32)
           + jnp.dot(c.astype(_W_DT), w5c[...], preferred_element_type=jnp.float32)
           + b5[...])
    out_ref[...] = out                      # (TB, 128) unmasked lane-dense store


# ----------------------------------------------------------------------------
# Parameter init (deterministic, PyTorch-Linear-style uniform; weights stored
# pre-transposed as (in_features, out_features)).
# ----------------------------------------------------------------------------
_LAYERS = ['fc1', 'fc2', 'fc3', 'fc4', 'fc5', 'l1', 'l2', 'l3', 'l4', 'l5']


def init_params(key, state_size, action_size, fc1_units=202, fc2_units=202):
    dims = {
        'fc1': (state_size, fc1_units), 'fc2': (fc1_units, 404),
        'fc3': (404, 404),              'fc4': (404, fc2_units),
        'fc5': (fc2_units, action_size),
        'l1':  (state_size, fc1_units), 'l2':  (fc1_units, 404),
        'l3':  (404, 404),              'l4':  (404, fc2_units),
        'l5':  (fc2_units, 1),
    }
    params = {}
    for name in _LAYERS:
        fan_in, fan_out = dims[name]
        key, kw, kb = jax.random.split(key, 3)
        bound = 1.0 / np.sqrt(fan_in)
        w = jax.random.uniform(kw, (fan_in, fan_out), jnp.float32, -bound, bound)
        b = jax.random.uniform(kb, (fan_out,), jnp.float32, -bound, bound)
        params[name] = (w, b)
    params['std'] = jnp.ones((action_size,), jnp.float32)
    return params


# ----------------------------------------------------------------------------
# One-time preparation: pad to (8,128)-friendly shapes, cast weights to bf16,
# fuse fc1/l1 and pack the fc5/l5 heads into a 128-lane output slab.
# ----------------------------------------------------------------------------
def prepare_params(params):
    S, fc1_units = params['fc1'][0].shape
    H = params['fc2'][0].shape[1]            # 404
    fc2_units = params['fc4'][0].shape[1]
    A = params['fc5'][0].shape[1]
    assert A + 1 <= _OUT_LANES

    P1 = _round_up(fc1_units, 128)           # 256
    PH = _round_up(H, 128)                   # 512
    P2 = _round_up(fc2_units, 128)           # 256
    PO = _OUT_LANES

    def pw(w, rows, cols):                   # cast THEN pad -> padding is exactly 0
        w = w.astype(_W_DT)
        return jnp.pad(w, ((0, rows - w.shape[0]), (0, cols - w.shape[1])))

    def pb(b, cols):
        b = jnp.asarray(b, jnp.float32).reshape(1, -1)
        return jnp.pad(b, ((0, 0), (0, cols - b.shape[1])))

    wfc1, bfc1 = params['fc1']
    wl1, bl1 = params['l1']
    w1 = jnp.concatenate([pw(wfc1, S, P1), pw(wl1, S, P1)], axis=1)    # (S, 2*P1)
    b1 = jnp.concatenate([pb(bfc1, P1), pb(bl1, P1)], axis=1)          # (1, 2*P1)

    wfc5, bfc5 = params['fc5']
    wl5, bl5 = params['l5']
    w5a = pw(wfc5, P2, PO)                                             # mean -> lanes 0:A
    w5c = jnp.pad(wl5.astype(_W_DT),
                  ((0, P2 - wl5.shape[0]), (A, PO - A - 1)))           # v -> lane A
    b5 = pb(bfc5, PO) + jnp.pad(jnp.asarray(bl5, jnp.float32).reshape(1, -1),
                                ((0, 0), (A, PO - A - 1)))

    prep = {
        'w1': w1, 'b1': b1,
        'wfc2': pw(*params['fc2'][:1], P1, PH) if False else pw(params['fc2'][0], P1, PH),
        'bfc2': pb(params['fc2'][1], PH),
        'wfc3': pw(params['fc3'][0], PH, PH), 'bfc3': pb(params['fc3'][1], PH),
        'wfc4': pw(params['fc4'][0], PH, P2), 'bfc4': pb(params['fc4'][1], P2),
        'wl2': pw(params['l2'][0], P1, PH),   'bl2': pb(params['l2'][1], PH),
        'wl3': pw(params['l3'][0], PH, PH),   'bl3': pb(params['l3'][1], PH),
        'wl4': pw(params['l4'][0], PH, P2),   'bl4': pb(params['l4'][1], P2),
        'w5a': w5a, 'w5c': w5c, 'b5': b5,
        'std': jnp.asarray(params['std'], jnp.float32),
    }
    return jax.tree_util.tree_map(jnp.asarray, prep)


_KERNEL_ARG_ORDER = ('w1', 'b1',
                     'wfc2', 'bfc2', 'wfc3', 'bfc3', 'wfc4', 'bfc4',
                     'wl2', 'bl2', 'wl3', 'bl3', 'wl4', 'bl4',
                     'w5a', 'w5c', 'b5')


# ----------------------------------------------------------------------------
# Forward: batch-tiled grid, weight blocks VMEM-resident across grid steps.
# Returns (mean, scale, v).
# ----------------------------------------------------------------------------
@jax.jit
def qnetwork_forward(state, prep):
    B, S = state.shape
    A = prep['std'].shape[-1]
    PO = prep['b5'].shape[-1]

    # Batch tiling: single tile for small batches, 256-row tiles for rollouts.
    if B <= 256:
        TB = _round_up(max(B, 8), 8)
        Bp = TB
    else:
        TB = 256
        Bp = _round_up(B, TB)
    num_tiles = Bp // TB

    state_p = jnp.pad(state, ((0, Bp - B), (0, 0)))
    weight_args = [prep[k] for k in _KERNEL_ARG_ORDER]

    def const_spec(arr):
        return pl.BlockSpec(arr.shape, lambda i: (0, 0))   # resident across batch tiles

    in_specs = ([pl.BlockSpec((TB, S), lambda i: (i, 0))]
                + [const_spec(a) for a in weight_args])
    out_specs = pl.BlockSpec((TB, PO), lambda i: (i, 0))

    # VMEM budget: (double-buffered) args + I/O tiles + headroom -- a few MiB,
    # well under v7x's 64 MiB physical VMEM.
    arg_bytes = sum(int(np.prod(a.shape)) * a.dtype.itemsize for a in weight_args)
    tile_bytes = TB * S * 4 + TB * PO * 4
    vmem_limit = int(2 * (arg_bytes + tile_bytes) + (4 << 20))

    # Only shard the batch grid across TCs when the batch is big enough to
    # amortize each core's one-time weight DMA.
    semantics = ("parallel",) if (num_tiles >= 2 and B >= 512) else ("arbitrary",)

    out_p = pl.pallas_call(
        qnetwork_kernel,
        out_shape=jax.ShapeDtypeStruct((Bp, PO), jnp.float32),
        grid=(num_tiles,),
        in_specs=in_specs,
        out_specs=out_specs,
        compiler_params=pltpu.CompilerParams(
            dimension_semantics=semantics,
            vmem_limit_bytes=vmem_limit),
    )(state_p, *weight_args)

    mean = out_p[:B, :A]
    v = out_p[:B, A:A + 1]
    # scale = softplus(exp(std)): state-independent, overflow-safe, done here.
    scale = jnp.broadcast_to(jax.nn.softplus(jnp.exp(prep['std'])).reshape(1, A),
                             mean.shape)
    return mean, scale, v


# ----------------------------------------------------------------------------
# Pure-JAX reference (emulates the kernel's bf16 matmul operands / f32 accum).
# ----------------------------------------------------------------------------
def ref_forward(state, params):
    def lin(x, name):
        w, b = params[name]
        return jnp.dot(x.astype(_W_DT), w.astype(_W_DT),
                       preferred_element_type=jnp.float32) + b

    a = jax.nn.relu(lin(state, 'fc1'))
    a = jax.nn.relu(lin(a, 'fc2'))
    a = jax.nn.relu(lin(a, 'fc3'))
    a = jnp.tanh(lin(a, 'fc4'))
    mean = lin(a, 'fc5')

    v = jax.nn.relu(lin(state, 'l1'))
    v = jax.nn.relu(lin(v, 'l2'))
    v = jax.nn.relu(lin(v, 'l3'))
    v = lin(v, 'l4')
    v = lin(v, 'l5')

    scale = jnp.broadcast_to(jax.nn.softplus(jnp.exp(params['std'])).reshape(1, -1),
                             mean.shape)
    return mean, scale, v


if __name__ == "__main__":
    key = jax.random.PRNGKey(0)
    k_param, k_state = jax.random.split(key)

    state_size, action_size, batch = 32, 8, 4
    params = init_params(k_param, state_size, action_size)
    prep = prepare_params(params)                       # one-time pad + bf16 cast
    prep = jax.block_until_ready(prep)

    state = jax.random.normal(k_state, (batch, state_size), jnp.float32)

    mean, scale, v = qnetwork_forward(state, prep)
    jax.block_until_ready((mean, scale, v))

    rm, rs, rv = ref_forward(state, params)
    assert mean.shape == (batch, action_size)
    assert scale.shape == (batch, action_size)
    assert v.shape == (batch, 1)
    assert np.allclose(np.asarray(mean), np.asarray(rm), atol=2e-2, rtol=2e-2)
    assert np.allclose(np.asarray(scale), np.asarray(rs), atol=1e-5, rtol=1e-5)
    assert np.allclose(np.asarray(v), np.asarray(rv), atol=2e-2, rtol=2e-2)

    print("KERNEL_OK")
</pallas_src>

<mosaic_0001>
module attributes {stable_mosaic.version = 11 : i64} {
  func.func @qnetwork_kernel(%arg0: i32, %arg1: memref<8x32xf32, #tpu.memory_space<vmem>>, %arg2: memref<32x512xbf16, #tpu.memory_space<vmem>>, %arg3: memref<1x512xf32, #tpu.memory_space<vmem>>, %arg4: memref<256x512xbf16, #tpu.memory_space<vmem>>, %arg5: memref<1x512xf32, #tpu.memory_space<vmem>>, %arg6: memref<512x512xbf16, #tpu.memory_space<vmem>>, %arg7: memref<1x512xf32, #tpu.memory_space<vmem>>, %arg8: memref<512x256xbf16, #tpu.memory_space<vmem>>, %arg9: memref<1x256xf32, #tpu.memory_space<vmem>>, %arg10: memref<256x512xbf16, #tpu.memory_space<vmem>>, %arg11: memref<1x512xf32, #tpu.memory_space<vmem>>, %arg12: memref<512x512xbf16, #tpu.memory_space<vmem>>, %arg13: memref<1x512xf32, #tpu.memory_space<vmem>>, %arg14: memref<512x256xbf16, #tpu.memory_space<vmem>>, %arg15: memref<1x256xf32, #tpu.memory_space<vmem>>, %arg16: memref<256x128xbf16, #tpu.memory_space<vmem>>, %arg17: memref<256x128xbf16, #tpu.memory_space<vmem>>, %arg18: memref<1x128xf32, #tpu.memory_space<vmem>>, %arg19: memref<8x128xf32, #tpu.memory_space<vmem>>) attributes {dimension_semantics = [#tpu.dimension_semantics<arbitrary>], iteration_bounds = array<i64: 1>, scalar_prefetch = 0 : i64, scratch_operands = 0 : i64, tpu.core_type = #tpu.core_type<tc>, window_params = [{transform_indices = @transform_0, window_bounds = array<i64: 8, 32>}, {pipeline_mode = #tpu.pipeline_mode<synchronous>, transform_indices = @transform_1, window_bounds = array<i64: 32, 512>}, {pipeline_mode = #tpu.pipeline_mode<synchronous>, transform_indices = @transform_2, window_bounds = array<i64: 1, 512>}, {pipeline_mode = #tpu.pipeline_mode<synchronous>, transform_indices = @transform_3, window_bounds = array<i64: 256, 512>}, {pipeline_mode = #tpu.pipeline_mode<synchronous>, transform_indices = @transform_4, window_bounds = array<i64: 1, 512>}, {pipeline_mode = #tpu.pipeline_mode<synchronous>, transform_indices = @transform_5, window_bounds = array<i64: 512, 512>}, {pipeline_mode = #tpu.pipeline_mode<synchronous>, transform_indices = @transform_6, window_bounds = array<i64: 1, 512>}, {pipeline_mode = #tpu.pipeline_mode<synchronous>, transform_indices = @transform_7, window_bounds = array<i64: 512, 256>}, {pipeline_mode = #tpu.pipeline_mode<synchronous>, transform_indices = @transform_8, window_bounds = array<i64: 1, 256>}, {pipeline_mode = #tpu.pipeline_mode<synchronous>, transform_indices = @transform_9, window_bounds = array<i64: 256, 512>}, {pipeline_mode = #tpu.pipeline_mode<synchronous>, transform_indices = @transform_10, window_bounds = array<i64: 1, 512>}, {pipeline_mode = #tpu.pipeline_mode<synchronous>, transform_indices = @transform_11, window_bounds = array<i64: 512, 512>}, {pipeline_mode = #tpu.pipeline_mode<synchronous>, transform_indices = @transform_12, window_bounds = array<i64: 1, 512>}, {pipeline_mode = #tpu.pipeline_mode<synchronous>, transform_indices = @transform_13, window_bounds = array<i64: 512, 256>}, {pipeline_mode = #tpu.pipeline_mode<synchronous>, transform_indices = @transform_14, window_bounds = array<i64: 1, 256>}, {pipeline_mode = #tpu.pipeline_mode<synchronous>, transform_indices = @transform_15, window_bounds = array<i64: 256, 128>}, {pipeline_mode = #tpu.pipeline_mode<synchronous>, transform_indices = @transform_16, window_bounds = array<i64: 256, 128>}, {pipeline_mode = #tpu.pipeline_mode<synchronous>, transform_indices = @transform_17, window_bounds = array<i64: 1, 128>}, {transform_indices = @transform_18, window_bounds = array<i64: 8, 128>}]} {
    %c0 = arith.constant 0 : index
    %c0_0 = arith.constant 0 : index
    %0 = vector.load %arg1[%c0, %c0_0] : memref<8x32xf32, #tpu.memory_space<vmem>>, vector<8x32xf32>
    %1 = arith.truncf %0 : vector<8x32xf32> to vector<8x32xbf16>
    %c0_1 = arith.constant 0 : index
    %c0_2 = arith.constant 0 : index
    %2 = vector.load %arg2[%c0_1, %c0_2] : memref<32x512xbf16, #tpu.memory_space<vmem>>, vector<32x512xbf16>
    %cst = arith.constant dense<0.000000e+00> : vector<8x512xf32>
    %3 = tpu.matmul %1, %2, %cst {dimension_numbers = #tpu.dot_dimension_numbers<[1], [0], [0], [1], [0, 0, 1, 1], [], []>} : vector<8x32xbf16>, vector<32x512xbf16>, vector<8x512xf32> -> vector<8x512xf32>
    %c0_3 = arith.constant 0 : index
    %c0_4 = arith.constant 0 : index
    %4 = vector.load %arg3[%c0_3, %c0_4] : memref<1x512xf32, #tpu.memory_space<vmem>>, vector<1x512xf32>
    %5 = vector.broadcast %4 : vector<1x512xf32> to vector<8x512xf32>
    %6 = arith.addf %3, %5 : vector<8x512xf32>
    %cst_5 = arith.constant 0.000000e+00 : f32
    %7 = vector.broadcast %cst_5 : f32 to vector<8x512xf32>
    %8 = arith.maximumf %6, %7 : vector<8x512xf32>
    %9 = vector.extract_strided_slice %8 {offsets = [0, 0], sizes = [8, 256], strides = [1, 1]} : vector<8x512xf32> to vector<8x256xf32>
    %10 = vector.extract_strided_slice %8 {offsets = [0, 256], sizes = [8, 256], strides = [1, 1]} : vector<8x512xf32> to vector<8x256xf32>
    %11 = arith.truncf %9 : vector<8x256xf32> to vector<8x256xbf16>
    %c0_6 = arith.constant 0 : index
    %c0_7 = arith.constant 0 : index
    %12 = vector.load %arg4[%c0_6, %c0_7] : memref<256x512xbf16, #tpu.memory_space<vmem>>, vector<256x512xbf16>
    %cst_8 = arith.constant dense<0.000000e+00> : vector<8x512xf32>
    %13 = tpu.matmul %11, %12, %cst_8 {dimension_numbers = #tpu.dot_dimension_numbers<[1], [0], [0], [1], [0, 0, 1, 1], [], []>} : vector<8x256xbf16>, vector<256x512xbf16>, vector<8x512xf32> -> vector<8x512xf32>
    %c0_9 = arith.constant 0 : index
    %c0_10 = arith.constant 0 : index
    %14 = vector.load %arg5[%c0_9, %c0_10] : memref<1x512xf32, #tpu.memory_space<vmem>>, vector<1x512xf32>
    %15 = vector.broadcast %14 : vector<1x512xf32> to vector<8x512xf32>
    %16 = arith.addf %13, %15 : vector<8x512xf32>
    %cst_11 = arith.constant 0.000000e+00 : f32
    %17 = vector.broadcast %cst_11 : f32 to vector<8x512xf32>
    %18 = arith.maximumf %16, %17 : vector<8x512xf32>
    %19 = arith.truncf %18 : vector<8x512xf32> to vector<8x512xbf16>
    %c0_12 = arith.constant 0 : index
    %c0_13 = arith.constant 0 : index
    %20 = vector.load %arg6[%c0_12, %c0_13] : memref<512x512xbf16, #tpu.memory_space<vmem>>, vector<512x512xbf16>
    %cst_14 = arith.constant dense<0.000000e+00> : vector<8x512xf32>
    %21 = tpu.matmul %19, %20, %cst_14 {dimension_numbers = #tpu.dot_dimension_numbers<[1], [0], [0], [1], [0, 0, 1, 1], [], []>} : vector<8x512xbf16>, vector<512x512xbf16>, vector<8x512xf32> -> vector<8x512xf32>
    %c0_15 = arith.constant 0 : index
    %c0_16 = arith.constant 0 : index
    %22 = vector.load %arg7[%c0_15, %c0_16] : memref<1x512xf32, #tpu.memory_space<vmem>>, vector<1x512xf32>
    %23 = vector.broadcast %22 : vector<1x512xf32> to vector<8x512xf32>
    %24 = arith.addf %21, %23 : vector<8x512xf32>
    %cst_17 = arith.constant 0.000000e+00 : f32
    %25 = vector.broadcast %cst_17 : f32 to vector<8x512xf32>
    %26 = arith.maximumf %24, %25 : vector<8x512xf32>
    %27 = arith.truncf %26 : vector<8x512xf32> to vector<8x512xbf16>
    %c0_18 = arith.constant 0 : index
    %c0_19 = arith.constant 0 : index
    %28 = vector.load %arg8[%c0_18, %c0_19] : memref<512x256xbf16, #tpu.memory_space<vmem>>, vector<512x256xbf16>
    %cst_20 = arith.constant dense<0.000000e+00> : vector<8x256xf32>
    %29 = tpu.matmul %27, %28, %cst_20 {dimension_numbers = #tpu.dot_dimension_numbers<[1], [0], [0], [1], [0, 0, 1, 1], [], []>} : vector<8x512xbf16>, vector<512x256xbf16>, vector<8x256xf32> -> vector<8x256xf32>
    %c0_21 = arith.constant 0 : index
    %c0_22 = arith.constant 0 : index
    %30 = vector.load %arg9[%c0_21, %c0_22] : memref<1x256xf32, #tpu.memory_space<vmem>>, vector<1x256xf32>
    %31 = vector.broadcast %30 : vector<1x256xf32> to vector<8x256xf32>
    %32 = arith.addf %29, %31 : vector<8x256xf32>
    %33 = math.tanh %32 : vector<8x256xf32>
    %34 = arith.truncf %10 : vector<8x256xf32> to vector<8x256xbf16>
    %c0_23 = arith.constant 0 : index
    %c0_24 = arith.constant 0 : index
    %35 = vector.load %arg10[%c0_23, %c0_24] : memref<256x512xbf16, #tpu.memory_space<vmem>>, vector<256x512xbf16>
    %cst_25 = arith.constant dense<0.000000e+00> : vector<8x512xf32>
    %36 = tpu.matmul %34, %35, %cst_25 {dimension_numbers = #tpu.dot_dimension_numbers<[1], [0], [0], [1], [0, 0, 1, 1], [], []>} : vector<8x256xbf16>, vector<256x512xbf16>, vector<8x512xf32> -> vector<8x512xf32>
    %c0_26 = arith.constant 0 : index
    %c0_27 = arith.constant 0 : index
    %37 = vector.load %arg11[%c0_26, %c0_27] : memref<1x512xf32, #tpu.memory_space<vmem>>, vector<1x512xf32>
    %38 = vector.broadcast %37 : vector<1x512xf32> to vector<8x512xf32>
    %39 = arith.addf %36, %38 : vector<8x512xf32>
    %cst_28 = arith.constant 0.000000e+00 : f32
    %40 = vector.broadcast %cst_28 : f32 to vector<8x512xf32>
    %41 = arith.maximumf %39, %40 : vector<8x512xf32>
    %42 = arith.truncf %41 : vector<8x512xf32> to vector<8x512xbf16>
    %c0_29 = arith.constant 0 : index
    %c0_30 = arith.constant 0 : index
    %43 = vector.load %arg12[%c0_29, %c0_30] : memref<512x512xbf16, #tpu.memory_space<vmem>>, vector<512x512xbf16>
    %cst_31 = arith.constant dense<0.000000e+00> : vector<8x512xf32>
    %44 = tpu.matmul %42, %43, %cst_31 {dimension_numbers = #tpu.dot_dimension_numbers<[1], [0], [0], [1], [0, 0, 1, 1], [], []>} : vector<8x512xbf16>, vector<512x512xbf16>, vector<8x512xf32> -> vector<8x512xf32>
    %c0_32 = arith.constant 0 : index
    %c0_33 = arith.constant 0 : index
    %45 = vector.load %arg13[%c0_32, %c0_33] : memref<1x512xf32, #tpu.memory_space<vmem>>, vector<1x512xf32>
    %46 = vector.broadcast %45 : vector<1x512xf32> to vector<8x512xf32>
    %47 = arith.addf %44, %46 : vector<8x512xf32>
    %cst_34 = arith.constant 0.000000e+00 : f32
    %48 = vector.broadcast %cst_34 : f32 to vector<8x512xf32>
    %49 = arith.maximumf %47, %48 : vector<8x512xf32>
    %50 = arith.truncf %49 : vector<8x512xf32> to vector<8x512xbf16>
    %c0_35 = arith.constant 0 : index
    %c0_36 = arith.constant 0 : index
    %51 = vector.load %arg14[%c0_35, %c0_36] : memref<512x256xbf16, #tpu.memory_space<vmem>>, vector<512x256xbf16>
    %cst_37 = arith.constant dense<0.000000e+00> : vector<8x256xf32>
    %52 = tpu.matmul %50, %51, %cst_37 {dimension_numbers = #tpu.dot_dimension_numbers<[1], [0], [0], [1], [0, 0, 1, 1], [], []>} : vector<8x512xbf16>, vector<512x256xbf16>, vector<8x256xf32> -> vector<8x256xf32>
    %c0_38 = arith.constant 0 : index
    %c0_39 = arith.constant 0 : index
    %53 = vector.load %arg15[%c0_38, %c0_39] : memref<1x256xf32, #tpu.memory_space<vmem>>, vector<1x256xf32>
    %54 = vector.broadcast %53 : vector<1x256xf32> to vector<8x256xf32>
    %55 = arith.addf %52, %54 : vector<8x256xf32>
    %56 = arith.truncf %33 : vector<8x256xf32> to vector<8x256xbf16>
    %c0_40 = arith.constant 0 : index
    %c0_41 = arith.constant 0 : index
    %57 = vector.load %arg16[%c0_40, %c0_41] : memref<256x128xbf16, #tpu.memory_space<vmem>>, vector<256x128xbf16>
    %cst_42 = arith.constant dense<0.000000e+00> : vector<8x128xf32>
    %58 = tpu.matmul %56, %57, %cst_42 {dimension_numbers = #tpu.dot_dimension_numbers<[1], [0], [0], [1], [0, 0, 1, 1], [], []>} : vector<8x256xbf16>, vector<256x128xbf16>, vector<8x128xf32> -> vector<8x128xf32>
    %59 = arith.truncf %55 : vector<8x256xf32> to vector<8x256xbf16>
    %c0_43 = arith.constant 0 : index
    %c0_44 = arith.constant 0 : index
    %60 = vector.load %arg17[%c0_43, %c0_44] : memref<256x128xbf16, #tpu.memory_space<vmem>>, vector<256x128xbf16>
    %cst_45 = arith.constant dense<0.000000e+00> : vector<8x128xf32>
    %61 = tpu.matmul %59, %60, %cst_45 {dimension_numbers = #tpu.dot_dimension_numbers<[1], [0], [0], [1], [0, 0, 1, 1], [], []>} : vector<8x256xbf16>, vector<256x128xbf16>, vector<8x128xf32> -> vector<8x128xf32>
    %62 = arith.addf %58, %61 : vector<8x128xf32>
    %c0_46 = arith.constant 0 : index
    %c0_47 = arith.constant 0 : index
    %63 = vector.load %arg18[%c0_46, %c0_47] : memref<1x128xf32, #tpu.memory_space<vmem>>, vector<1x128xf32>
    %64 = vector.broadcast %63 : vector<1x128xf32> to vector<8x128xf32>
    %65 = arith.addf %62, %64 : vector<8x128xf32>
    %c0_48 = arith.constant 0 : index
    %c0_49 = arith.constant 0 : index
    %66 = vector.load %arg19[%c0_48, %c0_49] : memref<8x128xf32, #tpu.memory_space<vmem>>, vector<8x128xf32>
    tpu.vector_store %arg19[%c0_48, %c0_49], %65 {strides = array<i32>} : memref<8x128xf32, #tpu.memory_space<vmem>>, vector<8x128xf32>,
    return
  }
  func.func @transform_0(%arg0: i32) -> (i32, i32) {
    %c0_i32 = arith.constant 0 : i32
    %c0_i32_0 = arith.constant 0 : i32
    return %arg0, %c0_i32 : i32, i32
  }
  func.func @transform_1(%arg0: i32) -> (i32, i32) {
    %c0_i32 = arith.constant 0 : i32
    %c0_i32_0 = arith.constant 0 : i32
    %c0_i32_1 = arith.constant 0 : i32
    return %c0_i32, %c0_i32_0 : i32, i32
  }
  func.func @transform_2(%arg0: i32) -> (i32, i32) {
    %c0_i32 = arith.constant 0 : i32
    %c0_i32_0 = arith.constant 0 : i32
    %c0_i32_1 = arith.constant 0 : i32
    return %c0_i32, %c0_i32_0 : i32, i32
  }
  func.func @transform_3(%arg0: i32) -> (i32, i32) {
    %c0_i32 = arith.constant 0 : i32
    %c0_i32_0 = arith.constant 0 : i32
    %c0_i32_1 = arith.constant 0 : i32
    return %c0_i32, %c0_i32_0 : i32, i32
  }
  func.func @transform_4(%arg0: i32) -> (i32, i32) {
    %c0_i32 = arith.constant 0 : i32
    %c0_i32_0 = arith.constant 0 : i32
    %c0_i32_1 = arith.constant 0 : i32
    return %c0_i32, %c0_i32_0 : i32, i32
  }
  func.func @transform_5(%arg0: i32) -> (i32, i32) {
    %c0_i32 = arith.constant 0 : i32
    %c0_i32_0 = arith.constant 0 : i32
    %c0_i32_1 = arith.constant 0 : i32
    return %c0_i32, %c0_i32_0 : i32, i32
  }
  func.func @transform_6(%arg0: i32) -> (i32, i32) {
    %c0_i32 = arith.constant 0 : i32
    %c0_i32_0 = arith.constant 0 : i32
    %c0_i32_1 = arith.constant 0 : i32
    return %c0_i32, %c0_i32_0 : i32, i32
  }
  func.func @transform_7(%arg0: i32) -> (i32, i32) {
    %c0_i32 = arith.constant 0 : i32
    %c0_i32_0 = arith.constant 0 : i32
    %c0_i32_1 = arith.constant 0 : i32
    return %c0_i32, %c0_i32_0 : i32, i32
  }
  func.func @transform_8(%arg0: i32) -> (i32, i32) {
    %c0_i32 = arith.constant 0 : i32
    %c0_i32_0 = arith.constant 0 : i32
    %c0_i32_1 = arith.constant 0 : i32
    return %c0_i32, %c0_i32_0 : i32, i32
  }
  func.func @transform_9(%arg0: i32) -> (i32, i32) {
    %c0_i32 = arith.constant 0 : i32
    %c0_i32_0 = arith.constant 0 : i32
    %c0_i32_1 = arith.constant 0 : i32
    return %c0_i32, %c0_i32_0 : i32, i32
  }
  func.func @transform_10(%arg0: i32) -> (i32, i32) {
    %c0_i32 = arith.constant 0 : i32
    %c0_i32_0 = arith.constant 0 : i32
    %c0_i32_1 = arith.constant 0 : i32
    return %c0_i32, %c0_i32_0 : i32, i32
  }
  func.func @transform_11(%arg0: i32) -> (i32, i32) {
    %c0_i32 = arith.constant 0 : i32
    %c0_i32_0 = arith.constant 0 : i32
    %c0_i32_1 = arith.constant 0 : i32
    return %c0_i32, %c0_i32_0 : i32, i32
  }
  func.func @transform_12(%arg0: i32) -> (i32, i32) {
    %c0_i32 = arith.constant 0 : i32
    %c0_i32_0 = arith.constant 0 : i32
    %c0_i32_1 = arith.constant 0 : i32
    return %c0_i32, %c0_i32_0 : i32, i32
  }
  func.func @transform_13(%arg0: i32) -> (i32, i32) {
    %c0_i32 = arith.constant 0 : i32
    %c0_i32_0 = arith.constant 0 : i32
    %c0_i32_1 = arith.constant 0 : i32
    return %c0_i32, %c0_i32_0 : i32, i32
  }
  func.func @transform_14(%arg0: i32) -> (i32, i32) {
    %c0_i32 = arith.constant 0 : i32
    %c0_i32_0 = arith.constant 0 : i32
    %c0_i32_1 = arith.constant 0 : i32
    return %c0_i32, %c0_i32_0 : i32, i32
  }
  func.func @transform_15(%arg0: i32) -> (i32, i32) {
    %c0_i32 = arith.constant 0 : i32
    %c0_i32_0 = arith.constant 0 : i32
    %c0_i32_1 = arith.constant 0 : i32
    return %c0_i32, %c0_i32_0 : i32, i32
  }
  func.func @transform_16(%arg0: i32) -> (i32, i32) {
    %c0_i32 = arith.constant 0 : i32
    %c0_i32_0 = arith.constant 0 : i32
    %c0_i32_1 = arith.constant 0 : i32
    return %c0_i32, %c0_i32_0 : i32, i32
  }
  func.func @transform_17(%arg0: i32) -> (i32, i32) {
    %c0_i32 = arith.constant 0 : i32
    %c0_i32_0 = arith.constant 0 : i32
    %c0_i32_1 = arith.constant 0 : i32
    return %c0_i32, %c0_i32_0 : i32, i32
  }
  func.func @transform_18(%arg0: i32) -> (i32, i32) {
    %c0_i32 = arith.constant 0 : i32
    %c0_i32_0 = arith.constant 0 : i32
    return %arg0, %c0_i32 : i32, i32
  }
}

</mosaic_0001>

<llo_original>
// kernel: qnetwork_forward.1
$region0: #{qnetwork_forward.1}
  #allocation0 [shape = 'u32[]', space=smem, size = 0x4, offset = 0x4, fixed_abs, tag = 'smem constant byte address 0x4 - core index']
  #allocation1 [shape = 'u32[72,128]{1,0:T(1,128)}', space=vmem, size = 0x9000, scoped, tag = 'internal scratch']
  %s0 = inlined_call_operand.vmem [shape: f32[8,32], index: 0, kind: input, shape index: {}]
  %s1 = inlined_call_operand.hbm [shape: bf16[32,512], index: 1, kind: input, shape index: {}]
  %s2 = inlined_call_operand.vmem [shape: f32[1,512], index: 2, kind: input, shape index: {}]
  %s3 = inlined_call_operand.hbm [shape: bf16[256,512], index: 3, kind: input, shape index: {}]
  %s4 = inlined_call_operand.vmem [shape: f32[1,512], index: 4, kind: input, shape index: {}]
  %s5 = inlined_call_operand.hbm [shape: bf16[512,512], index: 5, kind: input, shape index: {}]
  %s6 = inlined_call_operand.vmem [shape: f32[1,512], index: 6, kind: input, shape index: {}]
  %s7 = inlined_call_operand.hbm [shape: bf16[512,256], index: 7, kind: input, shape index: {}]
  %s8 = inlined_call_operand.vmem [shape: f32[1,256], index: 8, kind: input, shape index: {}]
  %s9 = inlined_call_operand.hbm [shape: bf16[256,512], index: 9, kind: input, shape index: {}]
  %s10 = inlined_call_operand.vmem [shape: f32[1,512], index: 10, kind: input, shape index: {}]
  %s11 = inlined_call_operand.hbm [shape: bf16[512,512], index: 11, kind: input, shape index: {}]
  %s12 = inlined_call_operand.hbm [shape: f32[1,512], index: 12, kind: input, shape index: {}]
  %s13 = inlined_call_operand.hbm [shape: bf16[512,256], index: 13, kind: input, shape index: {}]
  %s14 = inlined_call_operand.hbm [shape: f32[1,256], index: 14, kind: input, shape index: {}]
  %s15 = inlined_call_operand.hbm [shape: bf16[256,128], index: 15, kind: input, shape index: {}]
  %s16 = inlined_call_operand.hbm [shape: bf16[256,128], index: 16, kind: input, shape index: {}]
  %s17 = inlined_call_operand.vmem [shape: f32[1,128], index: 17, kind: input, shape index: {}]
  %s18 = inlined_call_operand.vmem [shape: f32[8,128], index: 18, kind: output, shape index: {}]
  %s19 = sld [smem:[#allocation0]]
  $region126: #{qnetwork_forward.1} parent=0
    _
  %s21 = ssub.s32 1, %s19
  %s22 = scalar_select 0, %s21, %s19
  $region1: #{qnetwork_forward.1} parent=0
    #allocation2 [shape = 'u8[32768]{0}', space=vmem, size = 0x8000, scoped, tag = 'input window, operand 1, single buffered']
    #allocation3 [shape = 's32[1]{0}', space=sflag, size = 0x4, scoped, tag = 'scoped memory for qnetwork_forward.1']
    #allocation4 [shape = 'u8[262144]{0}', space=vmem, size = 0x40000, scoped, tag = 'input window, operand 3, single buffered']
    #allocation5 [shape = 's32[1]{0}', space=sflag, size = 0x4, scoped, tag = 'scoped memory for qnetwork_forward.1']
    #allocation6 [shape = 'u8[524288]{0}', space=vmem, size = 0x80000, scoped, tag = 'input window, operand 5, single buffered']
    #allocation7 [shape = 'u8[262144]{0}', space=vmem, size = 0x40000, scoped, tag = 'input window, operand 7, single buffered']
    #allocation8 [shape = 's32[1]{0}', space=sflag, size = 0x4, scoped, tag = 'scoped memory for qnetwork_forward.1']
    #allocation9 [shape = 'u8[262144]{0}', space=vmem, size = 0x40000, scoped, tag = 'input window, operand 9, single buffered']
    #allocation10 [shape = 'u8[524288]{0}', space=vmem, size = 0x80000, scoped, tag = 'input window, operand 11, single buffered']
    #allocation11 [shape = 's32[1]{0}', space=sflag, size = 0x4, scoped, tag = 'scoped memory for qnetwork_forward.1']
    #allocation12 [shape = 'u8[2048]{0}', space=vmem, size = 0x800, scoped, tag = 'input window, operand 12, single buffered']
    #allocation13 [shape = 'u8[262144]{0}', space=vmem, size = 0x40000, scoped, tag = 'input window, operand 13, single buffered']
    #allocation14 [shape = 's32[1]{0}', space=sflag, size = 0x4, scoped, tag = 'scoped memory for qnetwork_forward.1']
    #allocation15 [shape = 'u8[1024]{0}', space=vmem, size = 0x400, scoped, tag = 'input window, operand 14, single buffered']
    #allocation16 [shape = 'u8[65536]{0}', space=vmem, size = 0x10000, scoped, tag = 'input window, operand 15, single buffered']
    #allocation17 [shape = 's32[1]{0}', space=sflag, size = 0x4, scoped, tag = 'scoped memory for qnetwork_forward.1']
    #allocation18 [shape = 'u8[65536]{0}', space=vmem, size = 0x10000, scoped, tag = 'input window, operand 16, single buffered']
    %23 = vsyncpa [#allocation3], 0
    %24 = vsyncpa [#allocation5], 0
    %25 = vsyncpa [#allocation8], 0
    %26 = vsyncpa [#allocation11], 0
    %27 = vsyncpa [#allocation14], 0
    %28 = vsyncpa [#allocation17], 0
    // Predicated region
    $region2: #{qnetwork_forward.1} parent=1 // pred_check
      _
    $region3: #{qnetwork_forward.1} parent=1 // pred_check_branch
      %30 = sbr.rel (0) target = $region5
    $region4: #{qnetwork_forward.1} parent=1 // pred_region
      _
    $region5: #{qnetwork_forward.1} parent=1 // pred_fallthru
      _
    // Predicated region
    $region6: #{qnetwork_forward.1} parent=1 // pred_check
      _
    $region7: #{qnetwork_forward.1} parent=1 // pred_check_branch
      %32 = sbr.rel (0) target = $region9
    $region8: #{qnetwork_forward.1} parent=1 // pred_region
      %34 = vsyncadd [#allocation3], 0
      %s35 = sshll.u32 %s1, 4
      %s36 = int_to_ptr.hbm [resolvable:$true] %s35
      %s37 = sshll.u32 [#allocation2], 4
      %s38 = int_to_ptr.vmem [resolvable:$true] %s37
      %43 = dma.hbm_to_vmem [thread:$0]  %s36, 1024, %s38, [#allocation3], 256, 256, 16
    $region9: #{qnetwork_forward.1} parent=1 // pred_fallthru
      _
    // Predicated region
    $region10: #{qnetwork_forward.1} parent=1 // pred_check
      _
    $region11: #{qnetwork_forward.1} parent=1 // pred_check_branch
      %45 = sbr.rel (0) target = $region13
    $region12: #{qnetwork_forward.1} parent=1 // pred_region
      _
    $region13: #{qnetwork_forward.1} parent=1 // pred_fallthru
      _
    // Predicated region
    $region14: #{qnetwork_forward.1} parent=1 // pred_check
      _
    $region15: #{qnetwork_forward.1} parent=1 // pred_check_branch
      %47 = sbr.rel (0) target = $region17
    $region16: #{qnetwork_forward.1} parent=1 // pred_region
      %49 = vsyncadd [#allocation5], 0
      %s50 = sshll.u32 %s3, 4
      %s51 = int_to_ptr.hbm [resolvable:$true] %s50
      %s52 = sshll.u32 [#allocation4], 4
      %s53 = int_to_ptr.vmem [resolvable:$true] %s52
      %58 = dma.hbm_to_vmem [thread:$0]  %s51, 8192, %s53, [#allocation5], 256, 256, 16
    $region17: #{qnetwork_forward.1} parent=1 // pred_fallthru
      _
    // Predicated region
    $region18: #{qnetwork_forward.1} parent=1 // pred_check
      _
    $region19: #{qnetwork_forward.1} parent=1 // pred_check_branch
      %60 = sbr.rel (0) target = $region21
    $region20: #{qnetwork_forward.1} parent=1 // pred_region
      _
    $region21: #{qnetwork_forward.1} parent=1 // pred_fallthru
      _
    // Predicated region
    $region22: #{qnetwork_forward.1} parent=1 // pred_check
      _
    $region23: #{qnetwork_forward.1} parent=1 // pred_check_branch
      %62 = sbr.rel (0) target = $region25
    $region24: #{qnetwork_forward.1} parent=1 // pred_region
      %64 = vsyncadd [#allocation5], 0
      %s65 = sshll.u32 %s5, 4
      %s66 = int_to_ptr.hbm [resolvable:$true] %s65
      %s67 = sshll.u32 [#allocation6], 4
      %s68 = int_to_ptr.vmem [resolvable:$true] %s67
      %73 = dma.hbm_to_vmem [thread:$0]  %s66, 16384, %s68, [#allocation5], 256, 256, 16
    $region25: #{qnetwork_forward.1} parent=1 // pred_fallthru
      _
    // Predicated region
    $region26: #{qnetwork_forward.1} parent=1 // pred_check
      _
    $region27: #{qnetwork_forward.1} parent=1 // pred_check_branch
      %75 = sbr.rel (0) target = $region29
    $region28: #{qnetwork_forward.1} parent=1 // pred_region
      _
    $region29: #{qnetwork_forward.1} parent=1 // pred_fallthru
      _
    // Predicated region
    $region30: #{qnetwork_forward.1} parent=1 // pred_check
      _
    $region31: #{qnetwork_forward.1} parent=1 // pred_check_branch
      %77 = sbr.rel (0) target = $region33
    $region32: #{qnetwork_forward.1} parent=1 // pred_region
      %79 = vsyncadd [#allocation8], 0
      %s80 = sshll.u32 %s7, 4
      %s81 = int_to_ptr.hbm [resolvable:$true] %s80
      %s82 = sshll.u32 [#allocation7], 4
      %s83 = int_to_ptr.vmem [resolvable:$true] %s82
      %88 = dma.hbm_to_vmem [thread:$0]  %s81, 8192, %s83, [#allocation8], 128, 128, 8
    $region33: #{qnetwork_forward.1} parent=1 // pred_fallthru
      _
    // Predicated region
    $region34: #{qnetwork_forward.1} parent=1 // pred_check
      _
    $region35: #{qnetwork_forward.1} parent=1 // pred_check_branch
      %90 = sbr.rel (0) target = $region37
    $region36: #{qnetwork_forward.1} parent=1 // pred_region
      _
    $region37: #{qnetwork_forward.1} parent=1 // pred_fallthru
      _
    // Predicated region
    $region38: #{qnetwork_forward.1} parent=1 // pred_check
      _
    $region39: #{qnetwork_forward.1} parent=1 // pred_check_branch
      %92 = sbr.rel (0) target = $region41
    $region40: #{qnetwork_forward.1} parent=1 // pred_region
      %94 = vsyncadd [#allocation8], 0
      %s95 = sshll.u32 %s9, 4
      %s96 = int_to_ptr.hbm [resolvable:$true] %s95
      %s97 = sshll.u32 [#allocation9], 4
      %s98 = int_to_ptr.vmem [resolvable:$true] %s97
      %103 = dma.hbm_to_vmem [thread:$0]  %s96, 8192, %s98, [#allocation8], 256, 256, 16
    $region41: #{qnetwork_forward.1} parent=1 // pred_fallthru
      _
    // Predicated region
    $region42: #{qnetwork_forward.1} parent=1 // pred_check
      _
    $region43: #{qnetwork_forward.1} parent=1 // pred_check_branch
      %105 = sbr.rel (0) target = $region45
    $region44: #{qnetwork_forward.1} parent=1 // pred_region
      _
    $region45: #{qnetwork_forward.1} parent=1 // pred_fallthru
      _
    // Predicated region
    $region46: #{qnetwork_forward.1} parent=1 // pred_check
      _
    $region47: #{qnetwork_forward.1} parent=1 // pred_check_branch
      %107 = sbr.rel (0) target = $region49
    $region48: #{qnetwork_forward.1} parent=1 // pred_region
      %109 = vsyncadd [#allocation11], 0
      %s110 = sshll.u32 %s11, 4
      %s111 = int_to_ptr.hbm [resolvable:$true] %s110
      %s112 = sshll.u32 [#allocation10], 4
      %s113 = int_to_ptr.vmem [resolvable:$true] %s112
      %118 = dma.hbm_to_vmem [thread:$0]  %s111, 16384, %s113, [#allocation11], 256, 256, 16
    $region49: #{qnetwork_forward.1} parent=1 // pred_fallthru
      _
    // Predicated region
    $region50: #{qnetwork_forward.1} parent=1 // pred_check
      _
    $region51: #{qnetwork_forward.1} parent=1 // pred_check_branch
      %120 = sbr.rel (0) target = $region53
    $region52: #{qnetwork_forward.1} parent=1 // pred_region
      %122 = vsyncadd [#allocation11], 0
      %s124 = sshll.u32 %s12, 4
      %s125 = int_to_ptr.hbm [resolvable:$true] %s124
      %s126 = sshll.u32 [#allocation12], 4
      %s127 = int_to_ptr.vmem [resolvable:$true] %s126
      %129 = dma.hbm_to_vmem [thread:$0]  %s125, 64, %s127, [#allocation11]
    $region53: #{qnetwork_forward.1} parent=1 // pred_fallthru
      _
    // Predicated region
    $region54: #{qnetwork_forward.1} parent=1 // pred_check
      _
    $region55: #{qnetwork_forward.1} parent=1 // pred_check_branch
      %131 = sbr.rel (0) target = $region57
    $region56: #{qnetwork_forward.1} parent=1 // pred_region
      %133 = vsyncadd [#allocation14], 0
      %s134 = sshll.u32 %s13, 4
      %s135 = int_to_ptr.hbm [resolvable:$true] %s134
      %s136 = sshll.u32 [#allocation13], 4
      %s137 = int_to_ptr.vmem [resolvable:$true] %s136
      %142 = dma.hbm_to_vmem [thread:$0]  %s135, 8192, %s137, [#allocation14], 128, 128, 8
    $region57: #{qnetwork_forward.1} parent=1 // pred_fallthru
      _
    // Predicated region
    $region58: #{qnetwork_forward.1} parent=1 // pred_check
      _
    $region59: #{qnetwork_forward.1} parent=1 // pred_check_branch
      %144 = sbr.rel (0) target = $region61
    $region60: #{qnetwork_forward.1} parent=1 // pred_region
      %146 = vsyncadd [#allocation14], 0
      %s148 = sshll.u32 %s14, 4
      %s149 = int_to_ptr.hbm [resolvable:$true] %s148
      %s150 = sshll.u32 [#allocation15], 4
      %s151 = int_to_ptr.vmem [resolvable:$true] %s150
      %153 = dma.hbm_to_vmem [thread:$0]  %s149, 32, %s151, [#allocation14]
    $region61: #{qnetwork_forward.1} parent=1 // pred_fallthru
      _
    // Predicated region
    $region62: #{qnetwork_forward.1} parent=1 // pred_check
      _
    $region63: #{qnetwork_forward.1} parent=1 // pred_check_branch
      %155 = sbr.rel (0) target = $region65
    $region64: #{qnetwork_forward.1} parent=1 // pred_region
      %157 = vsyncadd [#allocation17], 0
      %s158 = sshll.u32 %s15, 4
      %s159 = int_to_ptr.hbm [resolvable:$true] %s158
      %s160 = sshll.u32 [#allocation16], 4
      %s161 = int_to_ptr.vmem [resolvable:$true] %s160
      %166 = dma.hbm_to_vmem [thread:$0]  %s159, 2048, %s161, [#allocation17], 64, 64, 4
    $region65: #{qnetwork_forward.1} parent=1 // pred_fallthru
      _
    // Predicated region
    $region66: #{qnetwork_forward.1} parent=1 // pred_check
      _
    $region67: #{qnetwork_forward.1} parent=1 // pred_check_branch
      %168 = sbr.rel (0) target = $region69
    $region68: #{qnetwork_forward.1} parent=1 // pred_region
      %170 = vsyncadd [#allocation17], 0
      %s171 = sshll.u32 %s16, 4
      %s172 = int_to_ptr.hbm [resolvable:$true] %s171
      %s173 = sshll.u32 [#allocation18], 4
      %s174 = int_to_ptr.vmem [resolvable:$true] %s173
      %179 = dma.hbm_to_vmem [thread:$0]  %s172, 2048, %s174, [#allocation17], 64, 64, 4
    $region69: #{qnetwork_forward.1} parent=1 // pred_fallthru
      _
    // Predicated region
    $region70: #{qnetwork_forward.1} parent=1 // pred_check
      _
    $region71: #{qnetwork_forward.1} parent=1 // pred_check_branch
      %181 = sbr.rel (0) target = $region73
    $region72: #{qnetwork_forward.1} parent=1 // pred_region
      _
    $region73: #{qnetwork_forward.1} parent=1 // pred_fallthru
      _
    // Predicated region
    $region74: #{qnetwork_forward.1} parent=1 // pred_check
      _
    $region75: #{qnetwork_forward.1} parent=1 // pred_check_branch
      %183 = sbr.rel (0) target = $region77
    $region76: #{qnetwork_forward.1} parent=1 // pred_region
      %185 = dma.done [#allocation3], 1024
    $region77: #{qnetwork_forward.1} parent=1 // pred_fallthru
      _
    // Predicated region
    $region78: #{qnetwork_forward.1} parent=1 // pred_check
      _
    $region79: #{qnetwork_forward.1} parent=1 // pred_check_branch
      %187 = sbr.rel (0) target = $region81
    $region80: #{qnetwork_forward.1} parent=1 // pred_region
      %189 = dma.done [#allocation5], 8192
    $region81: #{qnetwork_forward.1} parent=1 // pred_fallthru
      _
    // Predicated region
    $region82: #{qnetwork_forward.1} parent=1 // pred_check
      _
    $region83: #{qnetwork_forward.1} parent=1 // pred_check_branch
      %191 = sbr.rel (0) target = $region85
    $region84: #{qnetwork_forward.1} parent=1 // pred_region
      %193 = dma.done [#allocation5], 16384
    $region85: #{qnetwork_forward.1} parent=1 // pred_fallthru
      _
    // Predicated region
    $region86: #{qnetwork_forward.1} parent=1 // pred_check
      _
    $region87: #{qnetwork_forward.1} parent=1 // pred_check_branch
      %195 = sbr.rel (0) target = $region89
    $region88: #{qnetwork_forward.1} parent=1 // pred_region
      %197 = dma.done [#allocation8], 8192
    $region89: #{qnetwork_forward.1} parent=1 // pred_fallthru
      _
    // Predicated region
    $region90: #{qnetwork_forward.1} parent=1 // pred_check
      _
    $region91: #{qnetwork_forward.1} parent=1 // pred_check_branch
      %199 = sbr.rel (0) target = $region93
    $region92: #{qnetwork_forward.1} parent=1 // pred_region
      %201 = dma.done [#allocation8], 8192
    $region93: #{qnetwork_forward.1} parent=1 // pred_fallthru
      _
    // Predicated region
    $region94: #{qnetwork_forward.1} parent=1 // pred_check
      _
    $region95: #{qnetwork_forward.1} parent=1 // pred_check_branch
      %203 = sbr.rel (0) target = $region97
    $region96: #{qnetwork_forward.1} parent=1 // pred_region
      %205 = dma.done [#allocation11], 16384
    $region97: #{qnetwork_forward.1} parent=1 // pred_fallthru
      _
    // Predicated region
    $region98: #{qnetwork_forward.1} parent=1 // pred_check
      _
    $region99: #{qnetwork_forward.1} parent=1 // pred_check_branch
      %207 = sbr.rel (0) target = $region101
    $region100: #{qnetwork_forward.1} parent=1 // pred_region
      %209 = dma.done [#allocation11], 64
    $region101: #{qnetwork_forward.1} parent=1 // pred_fallthru
      _
    // Predicated region
    $region102: #{qnetwork_forward.1} parent=1 // pred_check
      _
    $region103: #{qnetwork_forward.1} parent=1 // pred_check_branch
      %211 = sbr.rel (0) target = $region105
    $region104: #{qnetwork_forward.1} parent=1 // pred_region
      %213 = dma.done [#allocation14], 8192
    $region105: #{qnetwork_forward.1} parent=1 // pred_fallthru
      _
    // Predicated region
    $region106: #{qnetwork_forward.1} parent=1 // pred_check
      _
    $region107: #{qnetwork_forward.1} parent=1 // pred_check_branch
      %215 = sbr.rel (0) target = $region109
    $region108: #{qnetwork_forward.1} parent=1 // pred_region
      %217 = dma.done [#allocation14], 32
    $region109: #{qnetwork_forward.1} parent=1 // pred_fallthru
      _
    // Predicated region
    $region110: #{qnetwork_forward.1} parent=1 // pred_check
      _
    $region111: #{qnetwork_forward.1} parent=1 // pred_check_branch
      %219 = sbr.rel (0) target = $region113
    $region112: #{qnetwork_forward.1} parent=1 // pred_region
      %221 = dma.done [#allocation17], 2048
    $region113: #{qnetwork_forward.1} parent=1 // pred_fallthru
      _
    // Predicated region
    $region114: #{qnetwork_forward.1} parent=1 // pred_check
      _
    $region115: #{qnetwork_forward.1} parent=1 // pred_check_branch
      %223 = sbr.rel (0) target = $region117
    $region116: #{qnetwork_forward.1} parent=1 // pred_region
      %225 = dma.done [#allocation17], 2048
    $region117: #{qnetwork_forward.1} parent=1 // pred_fallthru
      _
    %v227 = vld [vmem:[%s0] sm:$0xff]
    %v228 = vpack.c.bf16 %v227, %v227
    %v229 = vld [vmem:[#allocation2] sm:$0xff]
    %v230 = vld [vmem:[#allocation2 + $0x8] sm:$0xff]
    %v231 = vld [vmem:[#allocation2 + $0x10] sm:$0xff]
    %v232 = vld [vmem:[#allocation2 + $0x18] sm:$0xff]
    %v233 = vld [vmem:[#allocation2 + $0x20] sm:$0xff]
    %v234 = vld [vmem:[#allocation2 + $0x28] sm:$0xff]
    %v235 = vld [vmem:[#allocation2 + $0x30] sm:$0xff]
    %v236 = vld [vmem:[#allocation2 + $0x38] sm:$0xff]
    %v237 = vld [vmem:[%s2] sm:$0xf]
    %v239 = vperm.slane %v237, 0
    %v240 = vperm.slane %v237, 1
    %v241 = vperm.slane %v237, 2
    %v242 = vperm.slane %v237, 3
    %v255 = vunpack.c.l.b16 %v229
    %v256 = vunpack.c.h.b16 %v229
    %v257 = vunpack.c.l.b16 %v230
    %v258 = vunpack.c.h.b16 %v230
    %v259 = vunpack.c.l.b16 %v231
    %v260 = vunpack.c.h.b16 %v231
    %v261 = vunpack.c.l.b16 %v232
    %v262 = vunpack.c.h.b16 %v232
    %v263 = vunpack.c.l.b16 %v233
    %v264 = vunpack.c.h.b16 %v233
    %v265 = vunpack.c.l.b16 %v234
    %v266 = vunpack.c.h.b16 %v234
    %v267 = vunpack.c.l.b16 %v235
    %v268 = vunpack.c.h.b16 %v235
    %v269 = vunpack.c.l.b16 %v236
    %v270 = vunpack.c.h.b16 %v236
    %v271 = vpack.c.b16 %v259, %v255
    %v272 = vpack.c.b16 %v260, %v256
    %v273 = vpack.c.b16 %v261, %v257
    %v274 = vpack.c.b16 %v262, %v258
    %v275 = vpack.c.b16 %v267, %v263
    %v276 = vpack.c.b16 %v268, %v264
    %v277 = vpack.c.b16 %v269, %v265
    %v278 = vpack.c.b16 %v270, %v266
    %vm287 = vcmask 261120
    %v289 = vsel %vm287, %v228, 0
    %291 = vmatpush.bf16.msra.mxu0 0
    %292 = vmatpush.bf16.msra.mxu0 0
    %293 = vmatpush.bf16.msra.mxu0 0
    %294 = vmatpush.bf16.msra.mxu0 0
    %295 = vmatpush.bf16.msra.mxu0 0
    %296 = vmatpush.bf16.msra.mxu0 0
    %297 = vmatpush.bf16.msra.mxu0 %v275
    %298 = vmatpush.bf16.msra.mxu0 %v271
    %299 = vmatmul.bf16.gmra.mxu0 %v289
    %v300 = vpop.f32.mrf.mxu0
    %v301 = vadd.f32 %v239, %v300
    %v302 = vpop.f32.mrf.mxu0
    %303 = vdwg.mxu0
    %304 = vmatpush.bf16.msra.mxu0 0
    %305 = vmatpush.bf16.msra.mxu0 0
    %306 = vmatpush.bf16.msra.mxu0 0
    %307 = vmatpush.bf16.msra.mxu0 0
    %308 = vmatpush.bf16.msra.mxu0 0
    %309 = vmatpush.bf16.msra.mxu0 0
    %310 = vmatpush.bf16.msra.mxu0 %v276
    %311 = vmatpush.bf16.msra.mxu0 %v272
    %312 = vmatmul.bf16.gmra.mxu0 %v289
    %v313 = vpop.f32.mrf.mxu0
    %v314 = vadd.f32 %v240, %v313
    %v315 = vpop.f32.mrf.mxu0
    %316 = vdwg.mxu0
    %317 = vmatpush.bf16.msra.mxu0 0
    %318 = vmatpush.bf16.msra.mxu0 0
    %319 = vmatpush.bf16.msra.mxu0 0
    %320 = vmatpush.bf16.msra.mxu0 0
    %321 = vmatpush.bf16.msra.mxu0 0
    %322 = vmatpush.bf16.msra.mxu0 0
    %323 = vmatpush.bf16.msra.mxu0 %v277
    %324 = vmatpush.bf16.msra.mxu0 %v273
    %325 = vmatmul.bf16.gmra.mxu0 %v289
    %v326 = vpop.f32.mrf.mxu0
    %v327 = vadd.f32 %v241, %v326
    %v328 = vpop.f32.mrf.mxu0
    %329 = vdwg.mxu0
    %330 = vmatpush.bf16.msra.mxu0 0
    %331 = vmatpush.bf16.msra.mxu0 0
    %332 = vmatpush.bf16.msra.mxu0 0
    %333 = vmatpush.bf16.msra.mxu0 0
    %334 = vmatpush.bf16.msra.mxu0 0
    %335 = vmatpush.bf16.msra.mxu0 0
    %336 = vmatpush.bf16.msra.mxu0 %v278
    %337 = vmatpush.bf16.msra.mxu0 %v274
    %338 = vmatmul.bf16.gmra.mxu0 %v289
    %v339 = vpop.f32.mrf.mxu0
    %v340 = vadd.f32 %v242, %v339
    %v341 = vpop.f32.mrf.mxu0
    %342 = vdwg.mxu0
    %v343 = vmax.f32 %v301, 0.0
    %v344 = vmax.f32 %v314, 0.0
    %v345 = vmax.f32 %v327, 0.0
    %v346 = vmax.f32 %v340, 0.0
    %v347 = vpack.c.bf16 %v343, %v343
    %v348 = vpack.c.bf16 %v344, %v344
    %v349 = vld [vmem:[#allocation4] sm:$0xff]
    %v350 = vld [vmem:[#allocation4 + $0x8] sm:$0xff]
    %v351 = vld [vmem:[#allocation4 + $0x10] sm:$0xff]
    %v352 = vld [vmem:[#allocation4 + $0x18] sm:$0xff]
    %v353 = vld [vmem:[#allocation4 + $0x20] sm:$0xff]
    %v354 = vld [vmem:[#allocation4 + $0x28] sm:$0xff]
    %v355 = vld [vmem:[#allocation4 + $0x30] sm:$0xff]
    %v356 = vld [vmem:[#allocation4 + $0x38] sm:$0xff]
    %v357 = vld [vmem:[#allocation4 + $0x40] sm:$0xff]
    %v358 = vld [vmem:[#allocation4 + $0x48] sm:$0xff]
    %v359 = vld [vmem:[#allocation4 + $0x50] sm:$0xff]
    %v360 = vld [vmem:[#allocation4 + $0x58] sm:$0xff]
    %v361 = vld [vmem:[#allocation4 + $0x60] sm:$0xff]
    %v362 = vld [vmem:[#allocation4 + $0x68] sm:$0xff]
    %v363 = vld [vmem:[#allocation4 + $0x70] sm:$0xff]
    %v364 = vld [vmem:[#allocation4 + $0x78] sm:$0xff]
    %v365 = vld [vmem:[#allocation4 + $0x80] sm:$0xff]
    %v366 = vld [vmem:[#allocation4 + $0x88] sm:$0xff]
    %v367 = vld [vmem:[#allocation4 + $0x90] sm:$0xff]
    %v368 = vld [vmem:[#allocation4 + $0x98] sm:$0xff]
    %v369 = vld [vmem:[#allocation4 + $0xa0] sm:$0xff]
    %v370 = vld [vmem:[#allocation4 + $0xa8] sm:$0xff]
    %v371 = vld [vmem:[#allocation4 + $0xb0] sm:$0xff]
    %v372 = vld [vmem:[#allocation4 + $0xb8] sm:$0xff]
    %v373 = vld [vmem:[#allocation4 + $0xc0] sm:$0xff]
    %v374 = vld [vmem:[#allocation4 + $0xc8] sm:$0xff]
    %v375 = vld [vmem:[#allocation4 + $0xd0] sm:$0xff]
    %v376 = vld [vmem:[#allocation4 + $0xd8] sm:$0xff]
    %v377 = vld [vmem:[#allocation4 + $0xe0] sm:$0xff]
    %v378 = vld [vmem:[#allocation4 + $0xe8] sm:$0xff]
    %v379 = vld [vmem:[#allocation4 + $0xf0] sm:$0xff]
    %v380 = vld [vmem:[#allocation4 + $0xf8] sm:$0xff]
    %v381 = vld [vmem:[#allocation4 + $0x100] sm:$0xff]
    %v382 = vld [vmem:[#allocation4 + $0x108] sm:$0xff]
    %v383 = vld [vmem:[#allocation4 + $0x110] sm:$0xff]
    %v384 = vld [vmem:[#allocation4 + $0x118] sm:$0xff]
    %v385 = vld [vmem:[#allocation4 + $0x120] sm:$0xff]
    %v386 = vld [vmem:[#allocation4 + $0x128] sm:$0xff]
    %v387 = vld [vmem:[#allocation4 + $0x130] sm:$0xff]
    %v388 = vld [vmem:[#allocation4 + $0x138] sm:$0xff]
    %v389 = vld [vmem:[#allocation4 + $0x140] sm:$0xff]
    %v390 = vld [vmem:[#allocation4 + $0x148] sm:$0xff]
    %v391 = vld [vmem:[#allocation4 + $0x150] sm:$0xff]
    %v392 = vld [vmem:[#allocation4 + $0x158] sm:$0xff]
    %v393 = vld [vmem:[#allocation4 + $0x160] sm:$0xff]
    %v394 = vld [vmem:[#allocation4 + $0x168] sm:$0xff]
    %v395 = vld [vmem:[#allocation4 + $0x170] sm:$0xff]
    %v396 = vld [vmem:[#allocation4 + $0x178] sm:$0xff]
    %v397 = vld [vmem:[#allocation4 + $0x180] sm:$0xff]
    %v398 = vld [vmem:[#allocation4 + $0x188] sm:$0xff]
    %v399 = vld [vmem:[#allocation4 + $0x190] sm:$0xff]
    %v400 = vld [vmem:[#allocation4 + $0x198] sm:$0xff]
    %v401 = vld [vmem:[#allocation4 + $0x1a0] sm:$0xff]
    %v402 = vld [vmem:[#allocation4 + $0x1a8] sm:$0xff]
    %v403 = vld [vmem:[#allocation4 + $0x1b0] sm:$0xff]
    %v404 = vld [vmem:[#allocation4 + $0x1b8] sm:$0xff]
    %v405 = vld [vmem:[#allocation4 + $0x1c0] sm:$0xff]
    %v406 = vld [vmem:[#allocation4 + $0x1c8] sm:$0xff]
    %v407 = vld [vmem:[#allocation4 + $0x1d0] sm:$0xff]
    %v408 = vld [vmem:[#allocation4 + $0x1d8] sm:$0xff]
    %v409 = vld [vmem:[#allocation4 + $0x1e0] sm:$0xff]
    %v410 = vld [vmem:[#allocation4 + $0x1e8] sm:$0xff]
    %v411 = vld [vmem:[#allocation4 + $0x1f0] sm:$0xff]
    %v412 = vld [vmem:[#allocation4 + $0x1f8] sm:$0xff]
    %v413 = vld [vmem:[%s4] sm:$0xf]
    %v415 = vperm.slane %v413, 0
    %v416 = vperm.slane %v413, 1
    %v417 = vperm.slane %v413, 2
    %v418 = vperm.slane %v413, 3
    %v487 = vunpack.c.l.b16 %v349
    %v488 = vunpack.c.h.b16 %v349
    %v489 = vunpack.c.l.b16 %v350
    %v490 = vunpack.c.h.b16 %v350
    %v491 = vunpack.c.l.b16 %v351
    %v492 = vunpack.c.h.b16 %v351
    %v493 = vunpack.c.l.b16 %v352
    %v494 = vunpack.c.h.b16 %v352
    %v495 = vunpack.c.l.b16 %v353
    %v496 = vunpack.c.h.b16 %v353
    %v497 = vunpack.c.l.b16 %v354
    %v498 = vunpack.c.h.b16 %v354
    %v499 = vunpack.c.l.b16 %v355
    %v500 = vunpack.c.h.b16 %v355
    %v501 = vunpack.c.l.b16 %v356
    %v502 = vunpack.c.h.b16 %v356
    %v503 = vunpack.c.l.b16 %v357
    %v504 = vunpack.c.h.b16 %v357
    %v505 = vunpack.c.l.b16 %v358
    %v506 = vunpack.c.h.b16 %v358
    %v507 = vunpack.c.l.b16 %v359
    %v508 = vunpack.c.h.b16 %v359
    %v509 = vunpack.c.l.b16 %v360
    %v510 = vunpack.c.h.b16 %v360
    %v511 = vunpack.c.l.b16 %v361
    %v512 = vunpack.c.h.b16 %v361
    %v513 = vunpack.c.l.b16 %v362
    %v514 = vunpack.c.h.b16 %v362
    %v515 = vunpack.c.l.b16 %v363
    %v516 = vunpack.c.h.b16 %v363
    %v517 = vunpack.c.l.b16 %v364
    %v518 = vunpack.c.h.b16 %v364
    %v519 = vunpack.c.l.b16 %v365
    %v520 = vunpack.c.h.b16 %v365
    %v521 = vunpack.c.l.b16 %v366
    %v522 = vunpack.c.h.b16 %v366
    %v523 = vunpack.c.l.b16 %v367
    %v524 = vunpack.c.h.b16 %v367
    %v525 = vunpack.c.l.b16 %v368
    %v526 = vunpack.c.h.b16 %v368
    %v527 = vunpack.c.l.b16 %v369
    %v528 = vunpack.c.h.b16 %v369
    %v529 = vunpack.c.l.b16 %v370
    %v530 = vunpack.c.h.b16 %v370
    %v531 = vunpack.c.l.b16 %v371
    %v532 = vunpack.c.h.b16 %v371
    %v533 = vunpack.c.l.b16 %v372
    %v534 = vunpack.c.h.b16 %v372
    %v535 = vunpack.c.l.b16 %v373
    %v536 = vunpack.c.h.b16 %v373
    %v537 = vunpack.c.l.b16 %v374
    %v538 = vunpack.c.h.b16 %v374
    %v539 = vunpack.c.l.b16 %v375
    %v540 = vunpack.c.h.b16 %v375
    %v541 = vunpack.c.l.b16 %v376
    %v542 = vunpack.c.h.b16 %v376
    %v543 = vunpack.c.l.b16 %v377
    %v544 = vunpack.c.h.b16 %v377
    %v545 = vunpack.c.l.b16 %v378
    %v546 = vunpack.c.h.b16 %v378
    %v547 = vunpack.c.l.b16 %v379
    %v548 = vunpack.c.h.b16 %v379
    %v549 = vunpack.c.l.b16 %v380
    %v550 = vunpack.c.h.b16 %v380
    %v551 = vunpack.c.l.b16 %v381
    %v552 = vunpack.c.h.b16 %v381
    %v553 = vunpack.c.l.b16 %v382
    %v554 = vunpack.c.h.b16 %v382
    %v555 = vunpack.c.l.b16 %v383
    %v556 = vunpack.c.h.b16 %v383
    %v557 = vunpack.c.l.b16 %v384
    %v558 = vunpack.c.h.b16 %v384
    %v559 = vunpack.c.l.b16 %v385
    %v560 = vunpack.c.h.b16 %v385
    %v561 = vunpack.c.l.b16 %v386
    %v562 = vunpack.c.h.b16 %v386
    %v563 = vunpack.c.l.b16 %v387
    %v564 = vunpack.c.h.b16 %v387
    %v565 = vunpack.c.l.b16 %v388
    %v566 = vunpack.c.h.b16 %v388
    %v567 = vunpack.c.l.b16 %v389
    %v568 = vunpack.c.h.b16 %v389
    %v569 = vunpack.c.l.b16 %v390
    %v570 = vunpack.c.h.b16 %v390
    %v571 = vunpack.c.l.b16 %v391
    %v572 = vunpack.c.h.b16 %v391
    %v573 = vunpack.c.l.b16 %v392
    %v574 = vunpack.c.h.b16 %v392
    %v575 = vunpack.c.l.b16 %v393
    %v576 = vunpack.c.h.b16 %v393
    %v577 = vunpack.c.l.b16 %v394
    %v578 = vunpack.c.h.b16 %v394
    %v579 = vunpack.c.l.b16 %v395
    %v580 = vunpack.c.h.b16 %v395
    %v581 = vunpack.c.l.b16 %v396
    %v582 = vunpack.c.h.b16 %v396
    %v583 = vunpack.c.l.b16 %v397
    %v584 = vunpack.c.h.b16 %v397
    %v585 = vunpack.c.l.b16 %v398
    %v586 = vunpack.c.h.b16 %v398
    %v587 = vunpack.c.l.b16 %v399
    %v588 = vunpack.c.h.b16 %v399
    %v589 = vunpack.c.l.b16 %v400
    %v590 = vunpack.c.h.b16 %v400
    %v591 = vunpack.c.l.b16 %v401
    %v592 = vunpack.c.h.b16 %v401
    %v593 = vunpack.c.l.b16 %v402
    %v594 = vunpack.c.h.b16 %v402
    %v595 = vunpack.c.l.b16 %v403
    %v596 = vunpack.c.h.b16 %v403
    %v597 = vunpack.c.l.b16 %v404
    %v598 = vunpack.c.h.b16 %v404
    %v599 = vunpack.c.l.b16 %v405
    %v600 = vunpack.c.h.b16 %v405
    %v601 = vunpack.c.l.b16 %v406
    %v602 = vunpack.c.h.b16 %v406
    %v603 = vunpack.c.l.b16 %v407
    %v604 = vunpack.c.h.b16 %v407
    %v605 = vunpack.c.l.b16 %v408
    %v606 = vunpack.c.h.b16 %v408
    %v607 = vunpack.c.l.b16 %v409
    %v608 = vunpack.c.h.b16 %v409
    %v609 = vunpack.c.l.b16 %v410
    %v610 = vunpack.c.h.b16 %v410
    %v611 = vunpack.c.l.b16 %v411
    %v612 = vunpack.c.h.b16 %v411
    %v613 = vunpack.c.l.b16 %v412
    %v614 = vunpack.c.h.b16 %v412
    %v615 = vpack.c.b16 %v491, %v487
    %v616 = vpack.c.b16 %v492, %v488
    %v617 = vpack.c.b16 %v493, %v489
    %v618 = vpack.c.b16 %v494, %v490
    %v619 = vpack.c.b16 %v499, %v495
    %v620 = vpack.c.b16 %v500, %v496
    %v621 = vpack.c.b16 %v501, %v497
    %v622 = vpack.c.b16 %v502, %v498
    %v623 = vpack.c.b16 %v507, %v503
    %v624 = vpack.c.b16 %v508, %v504
    %v625 = vpack.c.b16 %v509, %v505
    %v626 = vpack.c.b16 %v510, %v506
    %v627 = vpack.c.b16 %v515, %v511
    %v628 = vpack.c.b16 %v516, %v512
    %v629 = vpack.c.b16 %v517, %v513
    %v630 = vpack.c.b16 %v518, %v514
    %v631 = vpack.c.b16 %v523, %v519
    %v632 = vpack.c.b16 %v524, %v520
    %v633 = vpack.c.b16 %v525, %v521
    %v634 = vpack.c.b16 %v526, %v522
    %v635 = vpack.c.b16 %v531, %v527
    %v636 = vpack.c.b16 %v532, %v528
    %v637 = vpack.c.b16 %v533, %v529
    %v638 = vpack.c.b16 %v534, %v530
    %v639 = vpack.c.b16 %v539, %v535
    %v640 = vpack.c.b16 %v540, %v536
    %v641 = vpack.c.b16 %v541, %v537
    %v642 = vpack.c.b16 %v542, %v538
    %v643 = vpack.c.b16 %v547, %v543
    %v644 = vpack.c.b16 %v548, %v544
    %v645 = vpack.c.b16 %v549, %v545
    %v646 = vpack.c.b16 %v550, %v546
    %v647 = vpack.c.b16 %v555, %v551
    %v648 = vpack.c.b16 %v556, %v552
    %v649 = vpack.c.b16 %v557, %v553
    %v650 = vpack.c.b16 %v558, %v554
    %v651 = vpack.c.b16 %v563, %v559
    %v652 = vpack.c.b16 %v564, %v560
    %v653 = vpack.c.b16 %v565, %v561
    %v654 = vpack.c.b16 %v566, %v562
    %v655 = vpack.c.b16 %v571, %v567
    %v656 = vpack.c.b16 %v572, %v568
    %v657 = vpack.c.b16 %v573, %v569
    %v658 = vpack.c.b16 %v574, %v570
    %v659 = vpack.c.b16 %v579, %v575
    %v660 = vpack.c.b16 %v580, %v576
    %v661 = vpack.c.b16 %v581, %v577
    %v662 = vpack.c.b16 %v582, %v578
    %v663 = vpack.c.b16 %v587, %v583
    %v664 = vpack.c.b16 %v588, %v584
    %v665 = vpack.c.b16 %v589, %v585
    %v666 = vpack.c.b16 %v590, %v586
    %v667 = vpack.c.b16 %v595, %v591
    %v668 = vpack.c.b16 %v596, %v592
    %v669 = vpack.c.b16 %v597, %v593
    %v670 = vpack.c.b16 %v598, %v594
    %v671 = vpack.c.b16 %v603, %v599
    %v672 = vpack.c.b16 %v604, %v600
    %v673 = vpack.c.b16 %v605, %v601
    %v674 = vpack.c.b16 %v606, %v602
    %v675 = vpack.c.b16 %v611, %v607
    %v676 = vpack.c.b16 %v612, %v608
    %v677 = vpack.c.b16 %v613, %v609
    %v678 = vpack.c.b16 %v614, %v610
    %743 = vmatpush.bf16.msra.mxu0 %v643
    %744 = vmatpush.bf16.msra.mxu0 %v639
    %745 = vmatpush.bf16.msra.mxu0 %v635
    %746 = vmatpush.bf16.msra.mxu0 %v631
    %747 = vmatpush.bf16.msra.mxu0 %v627
    %748 = vmatpush.bf16.msra.mxu0 %v623
    %749 = vmatpush.bf16.msra.mxu0 %v619
    %750 = vmatpush.bf16.msra.mxu0 %v615
    %751 = vmatmul.bf16.gmra.mxu0 %v347
    %v752 = vpop.f32.mrf.mxu0
    %v753 = vadd.f32 %v415, %v752
    %v754 = vpop.f32.mrf.mxu0
    %755 = vdwg.mxu0
    %756 = vmatpush.bf16.msra.mxu0 %v675
    %757 = vmatpush.bf16.msra.mxu0 %v671
    %758 = vmatpush.bf16.msra.mxu0 %v667
    %759 = vmatpush.bf16.msra.mxu0 %v663
    %760 = vmatpush.bf16.msra.mxu0 %v659
    %761 = vmatpush.bf16.msra.mxu0 %v655
    %762 = vmatpush.bf16.msra.mxu0 %v651
    %763 = vmatpush.bf16.msra.mxu0 %v647
    %764 = vmatmul.bf16.gmra.mxu0 %v348
    %v765 = vpop.f32.mrf.mxu0
    %v766 = vadd.f32 %v753, %v765
    %v767 = vpop.f32.mrf.mxu0
    %768 = vdwg.mxu0
    %769 = vmatpush.bf16.msra.mxu0 %v644
    %770 = vmatpush.bf16.msra.mxu0 %v640
    %771 = vmatpush.bf16.msra.mxu0 %v636
    %772 = vmatpush.bf16.msra.mxu0 %v632
    %773 = vmatpush.bf16.msra.mxu0 %v628
    %774 = vmatpush.bf16.msra.mxu0 %v624
    %775 = vmatpush.bf16.msra.mxu0 %v620
    %776 = vmatpush.bf16.msra.mxu0 %v616
    %777 = vmatmul.bf16.gmra.mxu0 %v347
    %v778 = vpop.f32.mrf.mxu0
    %v779 = vadd.f32 %v416, %v778
    %v780 = vpop.f32.mrf.mxu0
    %781 = vdwg.mxu0
    %782 = vmatpush.bf16.msra.mxu0 %v676
    %783 = vmatpush.bf16.msra.mxu0 %v672
    %784 = vmatpush.bf16.msra.mxu0 %v668
    %785 = vmatpush.bf16.msra.mxu0 %v664
    %786 = vmatpush.bf16.msra.mxu0 %v660
    %787 = vmatpush.bf16.msra.mxu0 %v656
    %788 = vmatpush.bf16.msra.mxu0 %v652
    %789 = vmatpush.bf16.msra.mxu0 %v648
    %790 = vmatmul.bf16.gmra.mxu0 %v348
    %v791 = vpop.f32.mrf.mxu0
    %v792 = vadd.f32 %v779, %v791
    %v793 = vpop.f32.mrf.mxu0
    %794 = vdwg.mxu0
    %795 = vmatpush.bf16.msra.mxu0 %v645
    %796 = vmatpush.bf16.msra.mxu0 %v641
    %797 = vmatpush.bf16.msra.mxu0 %v637
    %798 = vmatpush.bf16.msra.mxu0 %v633
    %799 = vmatpush.bf16.msra.mxu0 %v629
    %800 = vmatpush.bf16.msra.mxu0 %v625
    %801 = vmatpush.bf16.msra.mxu0 %v621
    %802 = vmatpush.bf16.msra.mxu0 %v617
    %803 = vmatmul.bf16.gmra.mxu0 %v347
    %v804 = vpop.f32.mrf.mxu0
    %v805 = vadd.f32 %v417, %v804
    %v806 = vpop.f32.mrf.mxu0
    %807 = vdwg.mxu0
    %808 = vmatpush.bf16.msra.mxu0 %v677
    %809 = vmatpush.bf16.msra.mxu0 %v673
    %810 = vmatpush.bf16.msra.mxu0 %v669
    %811 = vmatpush.bf16.msra.mxu0 %v665
    %812 = vmatpush.bf16.msra.mxu0 %v661
    %813 = vmatpush.bf16.msra.mxu0 %v657
    %814 = vmatpush.bf16.msra.mxu0 %v653
    %815 = vmatpush.bf16.msra.mxu0 %v649
    %816 = vmatmul.bf16.gmra.mxu0 %v348
    %v817 = vpop.f32.mrf.mxu0
    %v818 = vadd.f32 %v805, %v817
    %v819 = vpop.f32.mrf.mxu0
    %820 = vdwg.mxu0
    %821 = vmatpush.bf16.msra.mxu0 %v646
    %822 = vmatpush.bf16.msra.mxu0 %v642
    %823 = vmatpush.bf16.msra.mxu0 %v638
    %824 = vmatpush.bf16.msra.mxu0 %v634
    %825 = vmatpush.bf16.msra.mxu0 %v630
    %826 = vmatpush.bf16.msra.mxu0 %v626
    %827 = vmatpush.bf16.msra.mxu0 %v622
    %828 = vmatpush.bf16.msra.mxu0 %v618
    %829 = vmatmul.bf16.gmra.mxu0 %v347
    %v830 = vpop.f32.mrf.mxu0
    %v831 = vadd.f32 %v418, %v830
    %v832 = vpop.f32.mrf.mxu0
    %833 = vdwg.mxu0
    %834 = vmatpush.bf16.msra.mxu0 %v678
    %835 = vmatpush.bf16.msra.mxu0 %v674
    %836 = vmatpush.bf16.msra.mxu0 %v670
    %837 = vmatpush.bf16.msra.mxu0 %v666
    %838 = vmatpush.bf16.msra.mxu0 %v662
    %839 = vmatpush.bf16.msra.mxu0 %v658
    %840 = vmatpush.bf16.msra.mxu0 %v654
    %841 = vmatpush.bf16.msra.mxu0 %v650
    %842 = vmatmul.bf16.gmra.mxu0 %v348
    %v843 = vpop.f32.mrf.mxu0
    %v844 = vadd.f32 %v831, %v843
    %v845 = vpop.f32.mrf.mxu0
    %846 = vdwg.mxu0
    %v847 = vmax.f32 %v766, 0.0
    %v848 = vmax.f32 %v792, 0.0
    %v849 = vmax.f32 %v818, 0.0
    %v850 = vmax.f32 %v844, 0.0
    %v851 = vpack.c.bf16 %v847, %v847
    %v852 = vpack.c.bf16 %v848, %v848
    %v853 = vpack.c.bf16 %v849, %v849
    %v854 = vpack.c.bf16 %v850, %v850
    %v855 = vld [vmem:[#allocation6] sm:$0xff]
    %v856 = vld [vmem:[#allocation6 + $0x8] sm:$0xff]
    %v857 = vld [vmem:[#allocation6 + $0x10] sm:$0xff]
    %v858 = vld [vmem:[#allocation6 + $0x18] sm:$0xff]
    %v859 = vld [vmem:[#allocation6 + $0x20] sm:$0xff]
    %v860 = vld [vmem:[#allocation6 + $0x28] sm:$0xff]
    %v861 = vld [vmem:[#allocation6 + $0x30] sm:$0xff]
    %v862 = vld [vmem:[#allocation6 + $0x38] sm:$0xff]
    %v863 = vld [vmem:[#allocation6 + $0x40] sm:$0xff]
    %v864 = vld [vmem:[#allocation6 + $0x48] sm:$0xff]
    %v865 = vld [vmem:[#allocation6 + $0x50] sm:$0xff]
    %v866 = vld [vmem:[#allocation6 + $0x58] sm:$0xff]
    %v867 = vld [vmem:[#allocation6 + $0x60] sm:$0xff]
    %v868 = vld [vmem:[#allocation6 + $0x68] sm:$0xff]
    %v869 = vld [vmem:[#allocation6 + $0x70] sm:$0xff]
    %v870 = vld [vmem:[#allocation6 + $0x78] sm:$0xff]
    %v871 = vld [vmem:[#allocation6 + $0x80] sm:$0xff]
    %v872 = vld [vmem:[#allocation6 + $0x88] sm:$0xff]
    %v873 = vld [vmem:[#allocation6 + $0x90] sm:$0xff]
    %v874 = vld [vmem:[#allocation6 + $0x98] sm:$0xff]
    %v875 = vld [vmem:[#allocation6 + $0xa0] sm:$0xff]
    %v876 = vld [vmem:[#allocation6 + $0xa8] sm:$0xff]
    %v877 = vld [vmem:[#allocation6 + $0xb0] sm:$0xff]
    %v878 = vld [vmem:[#allocation6 + $0xb8] sm:$0xff]
    %v879 = vld [vmem:[#allocation6 + $0xc0] sm:$0xff]
    %v880 = vld [vmem:[#allocation6 + $0xc8] sm:$0xff]
    %v881 = vld [vmem:[#allocation6 + $0xd0] sm:$0xff]
    %v882 = vld [vmem:[#allocation6 + $0xd8] sm:$0xff]
    %v883 = vld [vmem:[#allocation6 + $0xe0] sm:$0xff]
    %v884 = vld [vmem:[#allocation6 + $0xe8] sm:$0xff]
    %v885 = vld [vmem:[#allocation6 + $0xf0] sm:$0xff]
    %v886 = vld [vmem:[#allocation6 + $0xf8] sm:$0xff]
    %v887 = vld [vmem:[#allocation6 + $0x100] sm:$0xff]
    %v888 = vld [vmem:[#allocation6 + $0x108] sm:$0xff]
    %v889 = vld [vmem:[#allocation6 + $0x110] sm:$0xff]
    %v890 = vld [vmem:[#allocation6 + $0x118] sm:$0xff]
    %v891 = vld [vmem:[#allocation6 + $0x120] sm:$0xff]
    %v892 = vld [vmem:[#allocation6 + $0x128] sm:$0xff]
    %v893 = vld [vmem:[#allocation6 + $0x130] sm:$0xff]
    %v894 = vld [vmem:[#allocation6 + $0x138] sm:$0xff]
    %v895 = vld [vmem:[#allocation6 + $0x140] sm:$0xff]
    %v896 = vld [vmem:[#allocation6 + $0x148] sm:$0xff]
    %v897 = vld [vmem:[#allocation6 + $0x150] sm:$0xff]
    %v898 = vld [vmem:[#allocation6 + $0x158] sm:$0xff]
    %v899 = vld [vmem:[#allocation6 + $0x160] sm:$0xff]
    %v900 = vld [vmem:[#allocation6 + $0x168] sm:$0xff]
    %v901 = vld [vmem:[#allocation6 + $0x170] sm:$0xff]
    %v902 = vld [vmem:[#allocation6 + $0x178] sm:$0xff]
    %v903 = vld [vmem:[#allocation6 + $0x180] sm:$0xff]
    %v904 = vld [vmem:[#allocation6 + $0x188] sm:$0xff]
    %v905 = vld [vmem:[#allocation6 + $0x190] sm:$0xff]
    %v906 = vld [vmem:[#allocation6 + $0x198] sm:$0xff]
    %v907 = vld [vmem:[#allocation6 + $0x1a0] sm:$0xff]
    %v908 = vld [vmem:[#allocation6 + $0x1a8] sm:$0xff]
    %v909 = vld [vmem:[#allocation6 + $0x1b0] sm:$0xff]
    %v910 = vld [vmem:[#allocation6 + $0x1b8] sm:$0xff]
    %v911 = vld [vmem:[#allocation6 + $0x1c0] sm:$0xff]
    %v912 = vld [vmem:[#allocation6 + $0x1c8] sm:$0xff]
    %v913 = vld [vmem:[#allocation6 + $0x1d0] sm:$0xff]
    %v914 = vld [vmem:[#allocation6 + $0x1d8] sm:$0xff]
    %v915 = vld [vmem:[#allocation6 + $0x1e0] sm:$0xff]
    %v916 = vld [vmem:[#allocation6 + $0x1e8] sm:$0xff]
    %v917 = vld [vmem:[#allocation6 + $0x1f0] sm:$0xff]
    %v918 = vld [vmem:[#allocation6 + $0x1f8] sm:$0xff]
    %v919 = vld [vmem:[#allocation6 + $0x200] sm:$0xff]
    %v920 = vld [vmem:[#allocation6 + $0x208] sm:$0xff]
    %v921 = vld [vmem:[#allocation6 + $0x210] sm:$0xff]
    %v922 = vld [vmem:[#allocation6 + $0x218] sm:$0xff]
    %v923 = vld [vmem:[#allocation6 + $0x220] sm:$0xff]
    %v924 = vld [vmem:[#allocation6 + $0x228] sm:$0xff]
    %v925 = vld [vmem:[#allocation6 + $0x230] sm:$0xff]
    %v926 = vld [vmem:[#allocation6 + $0x238] sm:$0xff]
    %v927 = vld [vmem:[#allocation6 + $0x240] sm:$0xff]
    %v928 = vld [vmem:[#allocation6 + $0x248] sm:$0xff]
    %v929 = vld [vmem:[#allocation6 + $0x250] sm:$0xff]
    %v930 = vld [vmem:[#allocation6 + $0x258] sm:$0xff]
    %v931 = vld [vmem:[#allocation6 + $0x260] sm:$0xff]
    %v932 = vld [vmem:[#allocation6 + $0x268] sm:$0xff]
    %v933 = vld [vmem:[#allocation6 + $0x270] sm:$0xff]
    %v934 = vld [vmem:[#allocation6 + $0x278] sm:$0xff]
    %v935 = vld [vmem:[#allocation6 + $0x280] sm:$0xff]
    %v936 = vld [vmem:[#allocation6 + $0x288] sm:$0xff]
    %v937 = vld [vmem:[#allocation6 + $0x290] sm:$0xff]
    %v938 = vld [vmem:[#allocation6 + $0x298] sm:$0xff]
    %v939 = vld [vmem:[#allocation6 + $0x2a0] sm:$0xff]
    %v940 = vld [vmem:[#allocation6 + $0x2a8] sm:$0xff]
    %v941 = vld [vmem:[#allocation6 + $0x2b0] sm:$0xff]
    %v942 = vld [vmem:[#allocation6 + $0x2b8] sm:$0xff]
    %v943 = vld [vmem:[#allocation6 + $0x2c0] sm:$0xff]
    %v944 = vld [vmem:[#allocation6 + $0x2c8] sm:$0xff]
    %v945 = vld [vmem:[#allocation6 + $0x2d0] sm:$0xff]
    %v946 = vld [vmem:[#allocation6 + $0x2d8] sm:$0xff]
    %v947 = vld [vmem:[#allocation6 + $0x2e0] sm:$0xff]
    %v948 = vld [vmem:[#allocation6 + $0x2e8] sm:$0xff]
    %v949 = vld [vmem:[#allocation6 + $0x2f0] sm:$0xff]
    %v950 = vld [vmem:[#allocation6 + $0x2f8] sm:$0xff]
    %v951 = vld [vmem:[#allocation6 + $0x300] sm:$0xff]
    %v952 = vld [vmem:[#allocation6 + $0x308] sm:$0xff]
    %v953 = vld [vmem:[#allocation6 + $0x310] sm:$0xff]
    %v954 = vld [vmem:[#allocation6 + $0x318] sm:$0xff]
    %v955 = vld [vmem:[#allocation6 + $0x320] sm:$0xff]
    %v956 = vld [vmem:[#allocation6 + $0x328] sm:$0xff]
    %v957 = vld [vmem:[#allocation6 + $0x330] sm:$0xff]
    %v958 = vld [vmem:[#allocation6 + $0x338] sm:$0xff]
    %v959 = vld [vmem:[#allocation6 + $0x340] sm:$0xff]
    %v960 = vld [vmem:[#allocation6 + $0x348] sm:$0xff]
    %v961 = vld [vmem:[#allocation6 + $0x350] sm:$0xff]
    %v962 = vld [vmem:[#allocation6 + $0x358] sm:$0xff]
    %v963 = vld [vmem:[#allocation6 + $0x360] sm:$0xff]
    %v964 = vld [vmem:[#allocation6 + $0x368] sm:$0xff]
    %v965 = vld [vmem:[#allocation6 + $0x370] sm:$0xff]
    %v966 = vld [vmem:[#allocation6 + $0x378] sm:$0xff]
    %v967 = vld [vmem:[#allocation6 + $0x380] sm:$0xff]
    %v968 = vld [vmem:[#allocation6 + $0x388] sm:$0xff]
    %v969 = vld [vmem:[#allocation6 + $0x390] sm:$0xff]
    %v970 = vld [vmem:[#allocation6 + $0x398] sm:$0xff]
    %v971 = vld [vmem:[#allocation6 + $0x3a0] sm:$0xff]
    %v972 = vld [vmem:[#allocation6 + $0x3a8] sm:$0xff]
    %v973 = vld [vmem:[#allocation6 + $0x3b0] sm:$0xff]
    %v974 = vld [vmem:[#allocation6 + $0x3b8] sm:$0xff]
    %v975 = vld [vmem:[#allocation6 + $0x3c0] sm:$0xff]
    %v976 = vld [vmem:[#allocation6 + $0x3c8] sm:$0xff]
    %v977 = vld [vmem:[#allocation6 + $0x3d0] sm:$0xff]
    %v978 = vld [vmem:[#allocation6 + $0x3d8] sm:$0xff]
    %v979 = vld [vmem:[#allocation6 + $0x3e0] sm:$0xff]
    %v980 = vld [vmem:[#allocation6 + $0x3e8] sm:$0xff]
    %v981 = vld [vmem:[#allocation6 + $0x3f0] sm:$0xff]
    %v982 = vld [vmem:[#allocation6 + $0x3f8] sm:$0xff]
    %v983 = vld [vmem:[%s6] sm:$0xf]
    %v985 = vperm.slane %v983, 0
    %v986 = vperm.slane %v983, 1
    %v987 = vperm.slane %v983, 2
    %v988 = vperm.slane %v983, 3
    %v1121 = vunpack.c.l.b16 %v855
    %v1122 = vunpack.c.h.b16 %v855
    %v1123 = vunpack.c.l.b16 %v856
    %v1124 = vunpack.c.h.b16 %v856
    %v1125 = vunpack.c.l.b16 %v857
    %v1126 = vunpack.c.h.b16 %v857
    %v1127 = vunpack.c.l.b16 %v858
    %v1128 = vunpack.c.h.b16 %v858
    %v1129 = vunpack.c.l.b16 %v859
    %v1130 = vunpack.c.h.b16 %v859
    %v1131 = vunpack.c.l.b16 %v860
    %v1132 = vunpack.c.h.b16 %v860
    %v1133 = vunpack.c.l.b16 %v861
    %v1134 = vunpack.c.h.b16 %v861
    %v1135 = vunpack.c.l.b16 %v862
    %v1136 = vunpack.c.h.b16 %v862
    %v1137 = vunpack.c.l.b16 %v863
    %v1138 = vunpack.c.h.b16 %v863
    %v1139 = vunpack.c.l.b16 %v864
    %v1140 = vunpack.c.h.b16 %v864
    %v1141 = vunpack.c.l.b16 %v865
    %v1142 = vunpack.c.h.b16 %v865
    %v1143 = vunpack.c.l.b16 %v866
    %v1144 = vunpack.c.h.b16 %v866
    %v1145 = vunpack.c.l.b16 %v867
    %v1146 = vunpack.c.h.b16 %v867
    %v1147 = vunpack.c.l.b16 %v868
    %v1148 = vunpack.c.h.b16 %v868
    %v1149 = vunpack.c.l.b16 %v869
    %v1150 = vunpack.c.h.b16 %v869
    %v1151 = vunpack.c.l.b16 %v870
    %v1152 = vunpack.c.h.b16 %v870
    %v1153 = vunpack.c.l.b16 %v871
    %v1154 = vunpack.c.h.b16 %v871
    %v1155 = vunpack.c.l.b16 %v872
    %v1156 = vunpack.c.h.b16 %v872
    %v1157 = vunpack.c.l.b16 %v873
    %v1158 = vunpack.c.h.b16 %v873
    %v1159 = vunpack.c.l.b16 %v874
    %v1160 = vunpack.c.h.b16 %v874
    %v1161 = vunpack.c.l.b16 %v875
    %v1162 = vunpack.c.h.b16 %v875
    %v1163 = vunpack.c.l.b16 %v876
    %v1164 = vunpack.c.h.b16 %v876
    %v1165 = vunpack.c.l.b16 %v877
    %v1166 = vunpack.c.h.b16 %v877
    %v1167 = vunpack.c.l.b16 %v878
    %v1168 = vunpack.c.h.b16 %v878
    %v1169 = vunpack.c.l.b16 %v879
    %v1170 = vunpack.c.h.b16 %v879
    %v1171 = vunpack.c.l.b16 %v880
    %v1172 = vunpack.c.h.b16 %v880
    %v1173 = vunpack.c.l.b16 %v881
    %v1174 = vunpack.c.h.b16 %v881
    %v1175 = vunpack.c.l.b16 %v882
    %v1176 = vunpack.c.h.b16 %v882
    %v1177 = vunpack.c.l.b16 %v883
    %v1178 = vunpack.c.h.b16 %v883
    %v1179 = vunpack.c.l.b16 %v884
    %v1180 = vunpack.c.h.b16 %v884
    %v1181 = vunpack.c.l.b16 %v885
    %v1182 = vunpack.c.h.b16 %v885
    %v1183 = vunpack.c.l.b16 %v886
    %v1184 = vunpack.c.h.b16 %v886
    %v1185 = vunpack.c.l.b16 %v887
    %v1186 = vunpack.c.h.b16 %v887
    %v1187 = vunpack.c.l.b16 %v888
    %v1188 = vunpack.c.h.b16 %v888
    %v1189 = vunpack.c.l.b16 %v889
    %v1190 = vunpack.c.h.b16 %v889
    %v1191 = vunpack.c.l.b16 %v890
    %v1192 = vunpack.c.h.b16 %v890
    %v1193 = vunpack.c.l.b16 %v891
    %v1194 = vunpack.c.h.b16 %v891
    %v1195 = vunpack.c.l.b16 %v892
    %v1196 = vunpack.c.h.b16 %v892
    %v1197 = vunpack.c.l.b16 %v893
    %v1198 = vunpack.c.h.b16 %v893
    %v1199 = vunpack.c.l.b16 %v894
    %v1200 = vunpack.c.h.b16 %v894
    %v1201 = vunpack.c.l.b16 %v895
    %v1202 = vunpack.c.h.b16 %v895
    %v1203 = vunpack.c.l.b16 %v896
    %v1204 = vunpack.c.h.b16 %v896
    %v1205 = vunpack.c.l.b16 %v897
    %v1206 = vunpack.c.h.b16 %v897
    %v1207 = vunpack.c.l.b16 %v898
    %v1208 = vunpack.c.h.b16 %v898
    %v1209 = vunpack.c.l.b16 %v899
    %v1210 = vunpack.c.h.b16 %v899
    %v1211 = vunpack.c.l.b16 %v900
    %v1212 = vunpack.c.h.b16 %v900
    %v1213 = vunpack.c.l.b16 %v901
    %v1214 = vunpack.c.h.b16 %v901
    %v1215 = vunpack.c.l.b16 %v902
    %v1216 = vunpack.c.h.b16 %v902
    %v1217 = vunpack.c.l.b16 %v903
    %v1218 = vunpack.c.h.b16 %v903
    %v1219 = vunpack.c.l.b16 %v904
    %v1220 = vunpack.c.h.b16 %v904
    %v1221 = vunpack.c.l.b16 %v905
    %v1222 = vunpack.c.h.b16 %v905
    %v1223 = vunpack.c.l.b16 %v906
    %v1224 = vunpack.c.h.b16 %v906
    %v1225 = vunpack.c.l.b16 %v907
    %v1226 = vunpack.c.h.b16 %v907
    %v1227 = vunpack.c.l.b16 %v908
    %v1228 = vunpack.c.h.b16 %v908
    %v1229 = vunpack.c.l.b16 %v909
    %v1230 = vunpack.c.h.b16 %v909
    %v1231 = vunpack.c.l.b16 %v910
    %v1232 = vunpack.c.h.b16 %v910
    %v1233 = vunpack.c.l.b16 %v911
    %v1234 = vunpack.c.h.b16 %v911
    %v1235 = vunpack.c.l.b16 %v912
    %v1236 = vunpack.c.h.b16 %v912
    %v1237 = vunpack.c.l.b16 %v913
    %v1238 = vunpack.c.h.b16 %v913
    %v1239 = vunpack.c.l.b16 %v914
    %v1240 = vunpack.c.h.b16 %v914
    %v1241 = vunpack.c.l.b16 %v915
    %v1242 = vunpack.c.h.b16 %v915
    %v1243 = vunpack.c.l.b16 %v916
    %v1244 = vunpack.c.h.b16 %v916
    %v1245 = vunpack.c.l.b16 %v917
    %v1246 = vunpack.c.h.b16 %v917
    %v1247 = vunpack.c.l.b16 %v918
    %v1248 = vunpack.c.h.b16 %v918
    %v1249 = vunpack.c.l.b16 %v919
    %v1250 = vunpack.c.h.b16 %v919
    %v1251 = vunpack.c.l.b16 %v920
    %v1252 = vunpack.c.h.b16 %v920
    %v1253 = vunpack.c.l.b16 %v921
    %v1254 = vunpack.c.h.b16 %v921
    %v1255 = vunpack.c.l.b16 %v922
    %v1256 = vunpack.c.h.b16 %v922
    %v1257 = vunpack.c.l.b16 %v923
    %v1258 = vunpack.c.h.b16 %v923
    %v1259 = vunpack.c.l.b16 %v924
    %v1260 = vunpack.c.h.b16 %v924
    %v1261 = vunpack.c.l.b16 %v925
    %v1262 = vunpack.c.h.b16 %v925
    %v1263 = vunpack.c.l.b16 %v926
    %v1264 = vunpack.c.h.b16 %v926
    %v1265 = vunpack.c.l.b16 %v927
    %v1266 = vunpack.c.h.b16 %v927
    %v1267 = vunpack.c.l.b16 %v928
    %v1268 = vunpack.c.h.b16 %v928
    %v1269 = vunpack.c.l.b16 %v929
    %v1270 = vunpack.c.h.b16 %v929
    %v1271 = vunpack.c.l.b16 %v930
    %v1272 = vunpack.c.h.b16 %v930
    %v1273 = vunpack.c.l.b16 %v931
    %v1274 = vunpack.c.h.b16 %v931
    %v1275 = vunpack.c.l.b16 %v932
    %v1276 = vunpack.c.h.b16 %v932
    %v1277 = vunpack.c.l.b16 %v933
    %v1278 = vunpack.c.h.b16 %v933
    %v1279 = vunpack.c.l.b16 %v934
    %v1280 = vunpack.c.h.b16 %v934
    %v1281 = vunpack.c.l.b16 %v935
    %v1282 = vunpack.c.h.b16 %v935
    %v1283 = vunpack.c.l.b16 %v936
    %v1284 = vunpack.c.h.b16 %v936
    %v1285 = vunpack.c.l.b16 %v937
    %v1286 = vunpack.c.h.b16 %v937
    %v1287 = vunpack.c.l.b16 %v938
    %v1288 = vunpack.c.h.b16 %v938
    %v1289 = vunpack.c.l.b16 %v939
    %v1290 = vunpack.c.h.b16 %v939
    %v1291 = vunpack.c.l.b16 %v940
    %v1292 = vunpack.c.h.b16 %v940
    %v1293 = vunpack.c.l.b16 %v941
    %v1294 = vunpack.c.h.b16 %v941
    %v1295 = vunpack.c.l.b16 %v942
    %v1296 = vunpack.c.h.b16 %v942
    %v1297 = vunpack.c.l.b16 %v943
    %v1298 = vunpack.c.h.b16 %v943
    %v1299 = vunpack.c.l.b16 %v944
    %v1300 = vunpack.c.h.b16 %v944
    %v1301 = vunpack.c.l.b16 %v945
    %v1302 = vunpack.c.h.b16 %v945
    %v1303 = vunpack.c.l.b16 %v946
    %v1304 = vunpack.c.h.b16 %v946
    %v1305 = vunpack.c.l.b16 %v947
    %v1306 = vunpack.c.h.b16 %v947
    %v1307 = vunpack.c.l.b16 %v948
    %v1308 = vunpack.c.h.b16 %v948
    %v1309 = vunpack.c.l.b16 %v949
    %v1310 = vunpack.c.h.b16 %v949
    %v1311 = vunpack.c.l.b16 %v950
    %v1312 = vunpack.c.h.b16 %v950
    %v1313 = vunpack.c.l.b16 %v951
    %v1314 = vunpack.c.h.b16 %v951
    %v1315 = vunpack.c.l.b16 %v952
    %v1316 = vunpack.c.h.b16 %v952
    %v1317 = vunpack.c.l.b16 %v953
    %v1318 = vunpack.c.h.b16 %v953
    %v1319 = vunpack.c.l.b16 %v954
    %v1320 = vunpack.c.h.b16 %v954
    %v1321 = vunpack.c.l.b16 %v955
    %v1322 = vunpack.c.h.b16 %v955
    %v1323 = vunpack.c.l.b16 %v956
    %v1324 = vunpack.c.h.b16 %v956
    %v1325 = vunpack.c.l.b16 %v957
    %v1326 = vunpack.c.h.b16 %v957
    %v1327 = vunpack.c.l.b16 %v958
    %v1328 = vunpack.c.h.b16 %v958
    %v1329 = vunpack.c.l.b16 %v959
    %v1330 = vunpack.c.h.b16 %v959
    %v1331 = vunpack.c.l.b16 %v960
    %v1332 = vunpack.c.h.b16 %v960
    %v1333 = vunpack.c.l.b16 %v961
    %v1334 = vunpack.c.h.b16 %v961
    %v1335 = vunpack.c.l.b16 %v962
    %v1336 = vunpack.c.h.b16 %v962
    %v1337 = vunpack.c.l.b16 %v963
    %v1338 = vunpack.c.h.b16 %v963
    %v1339 = vunpack.c.l.b16 %v964
    %v1340 = vunpack.c.h.b16 %v964
    %v1341 = vunpack.c.l.b16 %v965
    %v1342 = vunpack.c.h.b16 %v965
    %v1343 = vunpack.c.l.b16 %v966
    %v1344 = vunpack.c.h.b16 %v966
    %v1345 = vunpack.c.l.b16 %v967
    %v1346 = vunpack.c.h.b16 %v967
    %v1347 = vunpack.c.l.b16 %v968
    %v1348 = vunpack.c.h.b16 %v968
    %v1349 = vunpack.c.l.b16 %v969
    %v1350 = vunpack.c.h.b16 %v969
    %v1351 = vunpack.c.l.b16 %v970
    %v1352 = vunpack.c.h.b16 %v970
    %v1353 = vunpack.c.l.b16 %v971
    %v1354 = vunpack.c.h.b16 %v971
    %v1355 = vunpack.c.l.b16 %v972
    %v1356 = vunpack.c.h.b16 %v972
    %v1357 = vunpack.c.l.b16 %v973
    %v1358 = vunpack.c.h.b16 %v973
    %v1359 = vunpack.c.l.b16 %v974
    %v1360 = vunpack.c.h.b16 %v974
    %v1361 = vunpack.c.l.b16 %v975
    %v1362 = vunpack.c.h.b16 %v975
    %v1363 = vunpack.c.l.b16 %v976
    %v1364 = vunpack.c.h.b16 %v976
    %v1365 = vunpack.c.l.b16 %v977
    %v1366 = vunpack.c.h.b16 %v977
    %v1367 = vunpack.c.l.b16 %v978
    %v1368 = vunpack.c.h.b16 %v978
    %v1369 = vunpack.c.l.b16 %v979
    %v1370 = vunpack.c.h.b16 %v979
    %v1371 = vunpack.c.l.b16 %v980
    %v1372 = vunpack.c.h.b16 %v980
    %v1373 = vunpack.c.l.b16 %v981
    %v1374 = vunpack.c.h.b16 %v981
    %v1375 = vunpack.c.l.b16 %v982
    %v1376 = vunpack.c.h.b16 %v982
    %v1377 = vpack.c.b16 %v1125, %v1121
    %v1378 = vpack.c.b16 %v1126, %v1122
    %v1379 = vpack.c.b16 %v1127, %v1123
    %v1380 = vpack.c.b16 %v1128, %v1124
    %v1381 = vpack.c.b16 %v1133, %v1129
    %v1382 = vpack.c.b16 %v1134, %v1130
    %v1383 = vpack.c.b16 %v1135, %v1131
    %v1384 = vpack.c.b16 %v1136, %v1132
    %v1385 = vpack.c.b16 %v1141, %v1137
    %v1386 = vpack.c.b16 %v1142, %v1138
    %v1387 = vpack.c.b16 %v1143, %v1139
    %v1388 = vpack.c.b16 %v1144, %v1140
    %v1389 = vpack.c.b16 %v1149, %v1145
    %v1390 = vpack.c.b16 %v1150, %v1146
    %v1391 = vpack.c.b16 %v1151, %v1147
    %v1392 = vpack.c.b16 %v1152, %v1148
    %v1393 = vpack.c.b16 %v1157, %v1153
    %v1394 = vpack.c.b16 %v1158, %v1154
    %v1395 = vpack.c.b16 %v1159, %v1155
    %v1396 = vpack.c.b16 %v1160, %v1156
    %v1397 = vpack.c.b16 %v1165, %v1161
    %v1398 = vpack.c.b16 %v1166, %v1162
    %v1399 = vpack.c.b16 %v1167, %v1163
    %v1400 = vpack.c.b16 %v1168, %v1164
    %v1401 = vpack.c.b16 %v1173, %v1169
    %v1402 = vpack.c.b16 %v1174, %v1170
    %v1403 = vpack.c.b16 %v1175, %v1171
    %v1404 = vpack.c.b16 %v1176, %v1172
    %v1405 = vpack.c.b16 %v1181, %v1177
    %v1406 = vpack.c.b16 %v1182, %v1178
    %v1407 = vpack.c.b16 %v1183, %v1179
    %v1408 = vpack.c.b16 %v1184, %v1180
    %v1409 = vpack.c.b16 %v1189, %v1185
    %v1410 = vpack.c.b16 %v1190, %v1186
    %v1411 = vpack.c.b16 %v1191, %v1187
    %v1412 = vpack.c.b16 %v1192, %v1188
    %v1413 = vpack.c.b16 %v1197, %v1193
    %v1414 = vpack.c.b16 %v1198, %v1194
    %v1415 = vpack.c.b16 %v1199, %v1195
    %v1416 = vpack.c.b16 %v1200, %v1196
    %v1417 = vpack.c.b16 %v1205, %v1201
    %v1418 = vpack.c.b16 %v1206, %v1202
    %v1419 = vpack.c.b16 %v1207, %v1203
    %v1420 = vpack.c.b16 %v1208, %v1204
    %v1421 = vpack.c.b16 %v1213, %v1209
    %v1422 = vpack.c.b16 %v1214, %v1210
    %v1423 = vpack.c.b16 %v1215, %v1211
    %v1424 = vpack.c.b16 %v1216, %v1212
    %v1425 = vpack.c.b16 %v1221, %v1217
    %v1426 = vpack.c.b16 %v1222, %v1218
    %v1427 = vpack.c.b16 %v1223, %v1219
    %v1428 = vpack.c.b16 %v1224, %v1220
    %v1429 = vpack.c.b16 %v1229, %v1225
    %v1430 = vpack.c.b16 %v1230, %v1226
    %v1431 = vpack.c.b16 %v1231, %v1227
    %v1432 = vpack.c.b16 %v1232, %v1228
    %v1433 = vpack.c.b16 %v1237, %v1233
    %v1434 = vpack.c.b16 %v1238, %v1234
    %v1435 = vpack.c.b16 %v1239, %v1235
    %v1436 = vpack.c.b16 %v1240, %v1236
    %v1437 = vpack.c.b16 %v1245, %v1241
    %v1438 = vpack.c.b16 %v1246, %v1242
    %v1439 = vpack.c.b16 %v1247, %v1243
    %v1440 = vpack.c.b16 %v1248, %v1244
    %v1441 = vpack.c.b16 %v1253, %v1249
    %v1442 = vpack.c.b16 %v1254, %v1250
    %v1443 = vpack.c.b16 %v1255, %v1251
    %v1444 = vpack.c.b16 %v1256, %v1252
    %v1445 = vpack.c.b16 %v1261, %v1257
    %v1446 = vpack.c.b16 %v1262, %v1258
    %v1447 = vpack.c.b16 %v1263, %v1259
    %v1448 = vpack.c.b16 %v1264, %v1260
    %v1449 = vpack.c.b16 %v1269, %v1265
    %v1450 = vpack.c.b16 %v1270, %v1266
    %v1451 = vpack.c.b16 %v1271, %v1267
    %v1452 = vpack.c.b16 %v1272, %v1268
    %v1453 = vpack.c.b16 %v1277, %v1273
    %v1454 = vpack.c.b16 %v1278, %v1274
    %v1455 = vpack.c.b16 %v1279, %v1275
    %v1456 = vpack.c.b16 %v1280, %v1276
    %v1457 = vpack.c.b16 %v1285, %v1281
    %v1458 = vpack.c.b16 %v1286, %v1282
    %v1459 = vpack.c.b16 %v1287, %v1283
    %v1460 = vpack.c.b16 %v1288, %v1284
    %v1461 = vpack.c.b16 %v1293, %v1289
    %v1462 = vpack.c.b16 %v1294, %v1290
    %v1463 = vpack.c.b16 %v1295, %v1291
    %v1464 = vpack.c.b16 %v1296, %v1292
    %v1465 = vpack.c.b16 %v1301, %v1297
    %v1466 = vpack.c.b16 %v1302, %v1298
    %v1467 = vpack.c.b16 %v1303, %v1299
    %v1468 = vpack.c.b16 %v1304, %v1300
    %v1469 = vpack.c.b16 %v1309, %v1305
    %v1470 = vpack.c.b16 %v1310, %v1306
    %v1471 = vpack.c.b16 %v1311, %v1307
    %v1472 = vpack.c.b16 %v1312, %v1308
    %v1473 = vpack.c.b16 %v1317, %v1313
    %v1474 = vpack.c.b16 %v1318, %v1314
    %v1475 = vpack.c.b16 %v1319, %v1315
    %v1476 = vpack.c.b16 %v1320, %v1316
    %v1477 = vpack.c.b16 %v1325, %v1321
    %v1478 = vpack.c.b16 %v1326, %v1322
    %v1479 = vpack.c.b16 %v1327, %v1323
    %v1480 = vpack.c.b16 %v1328, %v1324
    %v1481 = vpack.c.b16 %v1333, %v1329
    %v1482 = vpack.c.b16 %v1334, %v1330
    %v1483 = vpack.c.b16 %v1335, %v1331
    %v1484 = vpack.c.b16 %v1336, %v1332
    %v1485 = vpack.c.b16 %v1341, %v1337
    %v1486 = vpack.c.b16 %v1342, %v1338
    %v1487 = vpack.c.b16 %v1343, %v1339
    %v1488 = vpack.c.b16 %v1344, %v1340
    %v1489 = vpack.c.b16 %v1349, %v1345
    %v1490 = vpack.c.b16 %v1350, %v1346
    %v1491 = vpack.c.b16 %v1351, %v1347
    %v1492 = vpack.c.b16 %v1352, %v1348
    %v1493 = vpack.c.b16 %v1357, %v1353
    %v1494 = vpack.c.b16 %v1358, %v1354
    %v1495 = vpack.c.b16 %v1359, %v1355
    %v1496 = vpack.c.b16 %v1360, %v1356
    %v1497 = vpack.c.b16 %v1365, %v1361
    %v1498 = vpack.c.b16 %v1366, %v1362
    %v1499 = vpack.c.b16 %v1367, %v1363
    %v1500 = vpack.c.b16 %v1368, %v1364
    %v1501 = vpack.c.b16 %v1373, %v1369
    %v1502 = vpack.c.b16 %v1374, %v1370
    %v1503 = vpack.c.b16 %v1375, %v1371
    %v1504 = vpack.c.b16 %v1376, %v1372
    %1633 = vmatpush.bf16.msra.mxu0 %v1405
    %1634 = vmatpush.bf16.msra.mxu0 %v1401
    %1635 = vmatpush.bf16.msra.mxu0 %v1397
    %1636 = vmatpush.bf16.msra.mxu0 %v1393
    %1637 = vmatpush.bf16.msra.mxu0 %v1389
    %1638 = vmatpush.bf16.msra.mxu0 %v1385
    %1639 = vmatpush.bf16.msra.mxu0 %v1381
    %1640 = vmatpush.bf16.msra.mxu0 %v1377
    %1641 = vmatmul.bf16.gmra.mxu0 %v851
    %v1642 = vpop.f32.mrf.mxu0
    %v1643 = vadd.f32 %v985, %v1642
    %v1644 = vpop.f32.mrf.mxu0
    %1645 = vdwg.mxu0
    %1646 = vmatpush.bf16.msra.mxu0 %v1437
    %1647 = vmatpush.bf16.msra.mxu0 %v1433
    %1648 = vmatpush.bf16.msra.mxu0 %v1429
    %1649 = vmatpush.bf16.msra.mxu0 %v1425
    %1650 = vmatpush.bf16.msra.mxu0 %v1421
    %1651 = vmatpush.bf16.msra.mxu0 %v1417
    %1652 = vmatpush.bf16.msra.mxu0 %v1413
    %1653 = vmatpush.bf16.msra.mxu0 %v1409
    %1654 = vmatmul.bf16.gmra.mxu0 %v852
    %v1655 = vpop.f32.mrf.mxu0
    %v1656 = vadd.f32 %v1643, %v1655
    %v1657 = vpop.f32.mrf.mxu0
    %1658 = vdwg.mxu0
    %1659 = vmatpush.bf16.msra.mxu0 %v1469
    %1660 = vmatpush.bf16.msra.mxu0 %v1465
    %1661 = vmatpush.bf16.msra.mxu0 %v1461
    %1662 = vmatpush.bf16.msra.mxu0 %v1457
    %1663 = vmatpush.bf16.msra.mxu0 %v1453
    %1664 = vmatpush.bf16.msra.mxu0 %v1449
    %1665 = vmatpush.bf16.msra.mxu0 %v1445
    %1666 = vmatpush.bf16.msra.mxu0 %v1441
    %1667 = vmatmul.bf16.gmra.mxu0 %v853
    %v1668 = vpop.f32.mrf.mxu0
    %v1669 = vadd.f32 %v1656, %v1668
    %v1670 = vpop.f32.mrf.mxu0
    %1671 = vdwg.mxu0
    %1672 = vmatpush.bf16.msra.mxu0 %v1501
    %1673 = vmatpush.bf16.msra.mxu0 %v1497
    %1674 = vmatpush.bf16.msra.mxu0 %v1493
    %1675 = vmatpush.bf16.msra.mxu0 %v1489
    %1676 = vmatpush.bf16.msra.mxu0 %v1485
    %1677 = vmatpush.bf16.msra.mxu0 %v1481
    %1678 = vmatpush.bf16.msra.mxu0 %v1477
    %1679 = vmatpush.bf16.msra.mxu0 %v1473
    %1680 = vmatmul.bf16.gmra.mxu0 %v854
    %v1681 = vpop.f32.mrf.mxu0
    %v1682 = vadd.f32 %v1669, %v1681
    %v1683 = vpop.f32.mrf.mxu0
    %1684 = vdwg.mxu0
    %1685 = vmatpush.bf16.msra.mxu0 %v1406
    %1686 = vmatpush.bf16.msra.mxu0 %v1402
    %1687 = vmatpush.bf16.msra.mxu0 %v1398
    %1688 = vmatpush.bf16.msra.mxu0 %v1394
    %1689 = vmatpush.bf16.msra.mxu0 %v1390
    %1690 = vmatpush.bf16.msra.mxu0 %v1386
    %1691 = vmatpush.bf16.msra.mxu0 %v1382
    %1692 = vmatpush.bf16.msra.mxu0 %v1378
    %1693 = vmatmul.bf16.gmra.mxu0 %v851
    %v1694 = vpop.f32.mrf.mxu0
    %v1695 = vadd.f32 %v986, %v1694
    %v1696 = vpop.f32.mrf.mxu0
    %1697 = vdwg.mxu0
    %1698 = vmatpush.bf16.msra.mxu0 %v1438
    %1699 = vmatpush.bf16.msra.mxu0 %v1434
    %1700 = vmatpush.bf16.msra.mxu0 %v1430
    %1701 = vmatpush.bf16.msra.mxu0 %v1426
    %1702 = vmatpush.bf16.msra.mxu0 %v1422
    %1703 = vmatpush.bf16.msra.mxu0 %v1418
    %1704 = vmatpush.bf16.msra.mxu0 %v1414
    %1705 = vmatpush.bf16.msra.mxu0 %v1410
    %1706 = vmatmul.bf16.gmra.mxu0 %v852
    %v1707 = vpop.f32.mrf.mxu0
    %v1708 = vadd.f32 %v1695, %v1707
    %v1709 = vpop.f32.mrf.mxu0
    %1710 = vdwg.mxu0
    %1711 = vmatpush.bf16.msra.mxu0 %v1470
    %1712 = vmatpush.bf16.msra.mxu0 %v1466
    %1713 = vmatpush.bf16.msra.mxu0 %v1462
    %1714 = vmatpush.bf16.msra.mxu0 %v1458
    %1715 = vmatpush.bf16.msra.mxu0 %v1454
    %1716 = vmatpush.bf16.msra.mxu0 %v1450
    %1717 = vmatpush.bf16.msra.mxu0 %v1446
    %1718 = vmatpush.bf16.msra.mxu0 %v1442
    %1719 = vmatmul.bf16.gmra.mxu0 %v853
    %v1720 = vpop.f32.mrf.mxu0
    %v1721 = vadd.f32 %v1708, %v1720
    %v1722 = vpop.f32.mrf.mxu0
    %1723 = vdwg.mxu0
    %1724 = vmatpush.bf16.msra.mxu0 %v1502
    %1725 = vmatpush.bf16.msra.mxu0 %v1498
    %1726 = vmatpush.bf16.msra.mxu0 %v1494
    %1727 = vmatpush.bf16.msra.mxu0 %v1490
    %1728 = vmatpush.bf16.msra.mxu0 %v1486
    %1729 = vmatpush.bf16.msra.mxu0 %v1482
    %1730 = vmatpush.bf16.msra.mxu0 %v1478
    %1731 = vmatpush.bf16.msra.mxu0 %v1474
    %1732 = vmatmul.bf16.gmra.mxu0 %v854
    %v1733 = vpop.f32.mrf.mxu0
    %v1734 = vadd.f32 %v1721, %v1733
    %v1735 = vpop.f32.mrf.mxu0
    %1736 = vdwg.mxu0
    %1737 = vmatpush.bf16.msra.mxu0 %v1407
    %1738 = vmatpush.bf16.msra.mxu0 %v1403
    %1739 = vmatpush.bf16.msra.mxu0 %v1399
    %1740 = vmatpush.bf16.msra.mxu0 %v1395
    %1741 = vmatpush.bf16.msra.mxu0 %v1391
    %1742 = vmatpush.bf16.msra.mxu0 %v1387
    %1743 = vmatpush.bf16.msra.mxu0 %v1383
    %1744 = vmatpush.bf16.msra.mxu0 %v1379
    %1745 = vmatmul.bf16.gmra.mxu0 %v851
    %v1746 = vpop.f32.mrf.mxu0
    %v1747 = vadd.f32 %v987, %v1746
    %v1748 = vpop.f32.mrf.mxu0
    %1749 = vdwg.mxu0
    %1750 = vmatpush.bf16.msra.mxu0 %v1439
    %1751 = vmatpush.bf16.msra.mxu0 %v1435
    %1752 = vmatpush.bf16.msra.mxu0 %v1431
    %1753 = vmatpush.bf16.msra.mxu0 %v1427
    %1754 = vmatpush.bf16.msra.mxu0 %v1423
    %1755 = vmatpush.bf16.msra.mxu0 %v1419
    %1756 = vmatpush.bf16.msra.mxu0 %v1415
    %1757 = vmatpush.bf16.msra.mxu0 %v1411
    %1758 = vmatmul.bf16.gmra.mxu0 %v852
    %v1759 = vpop.f32.mrf.mxu0
    %v1760 = vadd.f32 %v1747, %v1759
    %v1761 = vpop.f32.mrf.mxu0
    %1762 = vdwg.mxu0
    %1763 = vmatpush.bf16.msra.mxu0 %v1471
    %1764 = vmatpush.bf16.msra.mxu0 %v1467
    %1765 = vmatpush.bf16.msra.mxu0 %v1463
    %1766 = vmatpush.bf16.msra.mxu0 %v1459
    %1767 = vmatpush.bf16.msra.mxu0 %v1455
    %1768 = vmatpush.bf16.msra.mxu0 %v1451
    %1769 = vmatpush.bf16.msra.mxu0 %v1447
    %1770 = vmatpush.bf16.msra.mxu0 %v1443
    %1771 = vmatmul.bf16.gmra.mxu0 %v853
    %v1772 = vpop.f32.mrf.mxu0
    %v1773 = vadd.f32 %v1760, %v1772
    %v1774 = vpop.f32.mrf.mxu0
    %1775 = vdwg.mxu0
    %1776 = vmatpush.bf16.msra.mxu0 %v1503
    %1777 = vmatpush.bf16.msra.mxu0 %v1499
    %1778 = vmatpush.bf16.msra.mxu0 %v1495
    %1779 = vmatpush.bf16.msra.mxu0 %v1491
    %1780 = vmatpush.bf16.msra.mxu0 %v1487
    %1781 = vmatpush.bf16.msra.mxu0 %v1483
    %1782 = vmatpush.bf16.msra.mxu0 %v1479
    %1783 = vmatpush.bf16.msra.mxu0 %v1475
    %1784 = vmatmul.bf16.gmra.mxu0 %v854
    %v1785 = vpop.f32.mrf.mxu0
    %v1786 = vadd.f32 %v1773, %v1785
    %v1787 = vpop.f32.mrf.mxu0
    %1788 = vdwg.mxu0
    %1789 = vmatpush.bf16.msra.mxu0 %v1408
    %1790 = vmatpush.bf16.msra.mxu0 %v1404
    %1791 = vmatpush.bf16.msra.mxu0 %v1400
    %1792 = vmatpush.bf16.msra.mxu0 %v1396
    %1793 = vmatpush.bf16.msra.mxu0 %v1392
    %1794 = vmatpush.bf16.msra.mxu0 %v1388
    %1795 = vmatpush.bf16.msra.mxu0 %v1384
    %1796 = vmatpush.bf16.msra.mxu0 %v1380
    %1797 = vmatmul.bf16.gmra.mxu0 %v851
    %v1798 = vpop.f32.mrf.mxu0
    %v1799 = vadd.f32 %v988, %v1798
    %v1800 = vpop.f32.mrf.mxu0
    %1801 = vdwg.mxu0
    %1802 = vmatpush.bf16.msra.mxu0 %v1440
    %1803 = vmatpush.bf16.msra.mxu0 %v1436
    %1804 = vmatpush.bf16.msra.mxu0 %v1432
    %1805 = vmatpush.bf16.msra.mxu0 %v1428
    %1806 = vmatpush.bf16.msra.mxu0 %v1424
    %1807 = vmatpush.bf16.msra.mxu0 %v1420
    %1808 = vmatpush.bf16.msra.mxu0 %v1416
    %1809 = vmatpush.bf16.msra.mxu0 %v1412
    %1810 = vmatmul.bf16.gmra.mxu0 %v852
    %v1811 = vpop.f32.mrf.mxu0
    %v1812 = vadd.f32 %v1799, %v1811
    %v1813 = vpop.f32.mrf.mxu0
    %1814 = vdwg.mxu0
    %1815 = vmatpush.bf16.msra.mxu0 %v1472
    %1816 = vmatpush.bf16.msra.mxu0 %v1468
    %1817 = vmatpush.bf16.msra.mxu0 %v1464
    %1818 = vmatpush.bf16.msra.mxu0 %v1460
    %1819 = vmatpush.bf16.msra.mxu0 %v1456
    %1820 = vmatpush.bf16.msra.mxu0 %v1452
    %1821 = vmatpush.bf16.msra.mxu0 %v1448
    %1822 = vmatpush.bf16.msra.mxu0 %v1444
    %1823 = vmatmul.bf16.gmra.mxu0 %v853
    %v1824 = vpop.f32.mrf.mxu0
    %v1825 = vadd.f32 %v1812, %v1824
    %v1826 = vpop.f32.mrf.mxu0
    %1827 = vdwg.mxu0
    %1828 = vmatpush.bf16.msra.mxu0 %v1504
    %1829 = vmatpush.bf16.msra.mxu0 %v1500
    %1830 = vmatpush.bf16.msra.mxu0 %v1496
    %1831 = vmatpush.bf16.msra.mxu0 %v1492
    %1832 = vmatpush.bf16.msra.mxu0 %v1488
    %1833 = vmatpush.bf16.msra.mxu0 %v1484
    %1834 = vmatpush.bf16.msra.mxu0 %v1480
    %1835 = vmatpush.bf16.msra.mxu0 %v1476
    %1836 = vmatmul.bf16.gmra.mxu0 %v854
    %v1837 = vpop.f32.mrf.mxu0
    %v1838 = vadd.f32 %v1825, %v1837
    %v1839 = vpop.f32.mrf.mxu0
    %1840 = vdwg.mxu0
    %v1841 = vmax.f32 %v1682, 0.0
    %v1842 = vmax.f32 %v1734, 0.0
    %v1843 = vmax.f32 %v1786, 0.0
    %v1844 = vmax.f32 %v1838, 0.0
    %v1845 = vpack.c.bf16 %v1841, %v1841
    %v1846 = vpack.c.bf16 %v1842, %v1842
    %v1847 = vpack.c.bf16 %v1843, %v1843
    %v1848 = vpack.c.bf16 %v1844, %v1844
    %v1849 = vld [vmem:[#allocation7] sm:$0xff]
    %v1850 = vld [vmem:[#allocation7 + $0x8] sm:$0xff]
    %v1851 = vld [vmem:[#allocation7 + $0x10] sm:$0xff]
    %v1852 = vld [vmem:[#allocation7 + $0x18] sm:$0xff]
    %v1853 = vld [vmem:[#allocation7 + $0x20] sm:$0xff]
    %v1854 = vld [vmem:[#allocation7 + $0x28] sm:$0xff]
    %v1855 = vld [vmem:[#allocation7 + $0x30] sm:$0xff]
    %v1856 = vld [vmem:[#allocation7 + $0x38] sm:$0xff]
    %v1857 = vld [vmem:[#allocation7 + $0x40] sm:$0xff]
    %v1858 = vld [vmem:[#allocation7 + $0x48] sm:$0xff]
    %v1859 = vld [vmem:[#allocation7 + $0x50] sm:$0xff]
    %v1860 = vld [vmem:[#allocation7 + $0x58] sm:$0xff]
    %v1861 = vld [vmem:[#allocation7 + $0x60] sm:$0xff]
    %v1862 = vld [vmem:[#allocation7 + $0x68] sm:$0xff]
    %v1863 = vld [vmem:[#allocation7 + $0x70] sm:$0xff]
    %v1864 = vld [vmem:[#allocation7 + $0x78] sm:$0xff]
    %v1865 = vld [vmem:[#allocation7 + $0x80] sm:$0xff]
    %v1866 = vld [vmem:[#allocation7 + $0x88] sm:$0xff]
    %v1867 = vld [vmem:[#allocation7 + $0x90] sm:$0xff]
    %v1868 = vld [vmem:[#allocation7 + $0x98] sm:$0xff]
    %v1869 = vld [vmem:[#allocation7 + $0xa0] sm:$0xff]
    %v1870 = vld [vmem:[#allocation7 + $0xa8] sm:$0xff]
    %v1871 = vld [vmem:[#allocation7 + $0xb0] sm:$0xff]
    %v1872 = vld [vmem:[#allocation7 + $0xb8] sm:$0xff]
    %v1873 = vld [vmem:[#allocation7 + $0xc0] sm:$0xff]
    %v1874 = vld [vmem:[#allocation7 + $0xc8] sm:$0xff]
    %v1875 = vld [vmem:[#allocation7 + $0xd0] sm:$0xff]
    %v1876 = vld [vmem:[#allocation7 + $0xd8] sm:$0xff]
    %v1877 = vld [vmem:[#allocation7 + $0xe0] sm:$0xff]
    %v1878 = vld [vmem:[#allocation7 + $0xe8] sm:$0xff]
    %v1879 = vld [vmem:[#allocation7 + $0xf0] sm:$0xff]
    %v1880 = vld [vmem:[#allocation7 + $0xf8] sm:$0xff]
    %v1881 = vld [vmem:[#allocation7 + $0x100] sm:$0xff]
    %v1882 = vld [vmem:[#allocation7 + $0x108] sm:$0xff]
    %v1883 = vld [vmem:[#allocation7 + $0x110] sm:$0xff]
    %v1884 = vld [vmem:[#allocation7 + $0x118] sm:$0xff]
    %v1885 = vld [vmem:[#allocation7 + $0x120] sm:$0xff]
    %v1886 = vld [vmem:[#allocation7 + $0x128] sm:$0xff]
    %v1887 = vld [vmem:[#allocation7 + $0x130] sm:$0xff]
    %v1888 = vld [vmem:[#allocation7 + $0x138] sm:$0xff]
    %v1889 = vld [vmem:[#allocation7 + $0x140] sm:$0xff]
    %v1890 = vld [vmem:[#allocation7 + $0x148] sm:$0xff]
    %v1891 = vld [vmem:[#allocation7 + $0x150] sm:$0xff]
    %v1892 = vld [vmem:[#allocation7 + $0x158] sm:$0xff]
    %v1893 = vld [vmem:[#allocation7 + $0x160] sm:$0xff]
    %v1894 = vld [vmem:[#allocation7 + $0x168] sm:$0xff]
    %v1895 = vld [vmem:[#allocation7 + $0x170] sm:$0xff]
    %v1896 = vld [vmem:[#allocation7 + $0x178] sm:$0xff]
    %v1897 = vld [vmem:[#allocation7 + $0x180] sm:$0xff]
    %v1898 = vld [vmem:[#allocation7 + $0x188] sm:$0xff]
    %v1899 = vld [vmem:[#allocation7 + $0x190] sm:$0xff]
    %v1900 = vld [vmem:[#allocation7 + $0x198] sm:$0xff]
    %v1901 = vld [vmem:[#allocation7 + $0x1a0] sm:$0xff]
    %v1902 = vld [vmem:[#allocation7 + $0x1a8] sm:$0xff]
    %v1903 = vld [vmem:[#allocation7 + $0x1b0] sm:$0xff]
    %v1904 = vld [vmem:[#allocation7 + $0x1b8] sm:$0xff]
    %v1905 = vld [vmem:[#allocation7 + $0x1c0] sm:$0xff]
    %v1906 = vld [vmem:[#allocation7 + $0x1c8] sm:$0xff]
    %v1907 = vld [vmem:[#allocation7 + $0x1d0] sm:$0xff]
    %v1908 = vld [vmem:[#allocation7 + $0x1d8] sm:$0xff]
    %v1909 = vld [vmem:[#allocation7 + $0x1e0] sm:$0xff]
    %v1910 = vld [vmem:[#allocation7 + $0x1e8] sm:$0xff]
    %v1911 = vld [vmem:[#allocation7 + $0x1f0] sm:$0xff]
    %v1912 = vld [vmem:[#allocation7 + $0x1f8] sm:$0xff]
    %v1913 = vld [vmem:[%s8] sm:$0x3]
    %v1915 = vperm.slane %v1913, 0
    %v1916 = vperm.slane %v1913, 1
    %v1983 = vunpack.c.l.b16 %v1849
    %v1984 = vunpack.c.h.b16 %v1849
    %v1985 = vunpack.c.l.b16 %v1850
    %v1986 = vunpack.c.h.b16 %v1850
    %v1987 = vunpack.c.l.b16 %v1851
    %v1988 = vunpack.c.h.b16 %v1851
    %v1989 = vunpack.c.l.b16 %v1852
    %v1990 = vunpack.c.h.b16 %v1852
    %v1991 = vunpack.c.l.b16 %v1853
    %v1992 = vunpack.c.h.b16 %v1853
    %v1993 = vunpack.c.l.b16 %v1854
    %v1994 = vunpack.c.h.b16 %v1854
    %v1995 = vunpack.c.l.b16 %v1855
    %v1996 = vunpack.c.h.b16 %v1855
    %v1997 = vunpack.c.l.b16 %v1856
    %v1998 = vunpack.c.h.b16 %v1856
    %v1999 = vunpack.c.l.b16 %v1857
    %v2000 = vunpack.c.h.b16 %v1857
    %v2001 = vunpack.c.l.b16 %v1858
    %v2002 = vunpack.c.h.b16 %v1858
    %v2003 = vunpack.c.l.b16 %v1859
    %v2004 = vunpack.c.h.b16 %v1859
    %v2005 = vunpack.c.l.b16 %v1860
    %v2006 = vunpack.c.h.b16 %v1860
    %v2007 = vunpack.c.l.b16 %v1861
    %v2008 = vunpack.c.h.b16 %v1861
    %v2009 = vunpack.c.l.b16 %v1862
    %v2010 = vunpack.c.h.b16 %v1862
    %v2011 = vunpack.c.l.b16 %v1863
    %v2012 = vunpack.c.h.b16 %v1863
    %v2013 = vunpack.c.l.b16 %v1864
    %v2014 = vunpack.c.h.b16 %v1864
    %v2015 = vunpack.c.l.b16 %v1865
    %v2016 = vunpack.c.h.b16 %v1865
    %v2017 = vunpack.c.l.b16 %v1866
    %v2018 = vunpack.c.h.b16 %v1866
    %v2019 = vunpack.c.l.b16 %v1867
    %v2020 = vunpack.c.h.b16 %v1867
    %v2021 = vunpack.c.l.b16 %v1868
    %v2022 = vunpack.c.h.b16 %v1868
    %v2023 = vunpack.c.l.b16 %v1869
    %v2024 = vunpack.c.h.b16 %v1869
    %v2025 = vunpack.c.l.b16 %v1870
    %v2026 = vunpack.c.h.b16 %v1870
    %v2027 = vunpack.c.l.b16 %v1871
    %v2028 = vunpack.c.h.b16 %v1871
    %v2029 = vunpack.c.l.b16 %v1872
    %v2030 = vunpack.c.h.b16 %v1872
    %v2031 = vunpack.c.l.b16 %v1873
    %v2032 = vunpack.c.h.b16 %v1873
    %v2033 = vunpack.c.l.b16 %v1874
    %v2034 = vunpack.c.h.b16 %v1874
    %v2035 = vunpack.c.l.b16 %v1875
    %v2036 = vunpack.c.h.b16 %v1875
    %v2037 = vunpack.c.l.b16 %v1876
    %v2038 = vunpack.c.h.b16 %v1876
    %v2039 = vunpack.c.l.b16 %v1877
    %v2040 = vunpack.c.h.b16 %v1877
    %v2041 = vunpack.c.l.b16 %v1878
    %v2042 = vunpack.c.h.b16 %v1878
    %v2043 = vunpack.c.l.b16 %v1879
    %v2044 = vunpack.c.h.b16 %v1879
    %v2045 = vunpack.c.l.b16 %v1880
    %v2046 = vunpack.c.h.b16 %v1880
    %v2047 = vunpack.c.l.b16 %v1881
    %v2048 = vunpack.c.h.b16 %v1881
    %v2049 = vunpack.c.l.b16 %v1882
    %v2050 = vunpack.c.h.b16 %v1882
    %v2051 = vunpack.c.l.b16 %v1883
    %v2052 = vunpack.c.h.b16 %v1883
    %v2053 = vunpack.c.l.b16 %v1884
    %v2054 = vunpack.c.h.b16 %v1884
    %v2055 = vunpack.c.l.b16 %v1885
    %v2056 = vunpack.c.h.b16 %v1885
    %v2057 = vunpack.c.l.b16 %v1886
    %v2058 = vunpack.c.h.b16 %v1886
    %v2059 = vunpack.c.l.b16 %v1887
    %v2060 = vunpack.c.h.b16 %v1887
    %v2061 = vunpack.c.l.b16 %v1888
    %v2062 = vunpack.c.h.b16 %v1888
    %v2063 = vunpack.c.l.b16 %v1889
    %v2064 = vunpack.c.h.b16 %v1889
    %v2065 = vunpack.c.l.b16 %v1890
    %v2066 = vunpack.c.h.b16 %v1890
    %v2067 = vunpack.c.l.b16 %v1891
    %v2068 = vunpack.c.h.b16 %v1891
    %v2069 = vunpack.c.l.b16 %v1892
    %v2070 = vunpack.c.h.b16 %v1892
    %v2071 = vunpack.c.l.b16 %v1893
    %v2072 = vunpack.c.h.b16 %v1893
    %v2073 = vunpack.c.l.b16 %v1894
    %v2074 = vunpack.c.h.b16 %v1894
    %v2075 = vunpack.c.l.b16 %v1895
    %v2076 = vunpack.c.h.b16 %v1895
    %v2077 = vunpack.c.l.b16 %v1896
    %v2078 = vunpack.c.h.b16 %v1896
    %v2079 = vunpack.c.l.b16 %v1897
    %v2080 = vunpack.c.h.b16 %v1897
    %v2081 = vunpack.c.l.b16 %v1898
    %v2082 = vunpack.c.h.b16 %v1898
    %v2083 = vunpack.c.l.b16 %v1899
    %v2084 = vunpack.c.h.b16 %v1899
    %v2085 = vunpack.c.l.b16 %v1900
    %v2086 = vunpack.c.h.b16 %v1900
    %v2087 = vunpack.c.l.b16 %v1901
    %v2088 = vunpack.c.h.b16 %v1901
    %v2089 = vunpack.c.l.b16 %v1902
    %v2090 = vunpack.c.h.b16 %v1902
    %v2091 = vunpack.c.l.b16 %v1903
    %v2092 = vunpack.c.h.b16 %v1903
    %v2093 = vunpack.c.l.b16 %v1904
    %v2094 = vunpack.c.h.b16 %v1904
    %v2095 = vunpack.c.l.b16 %v1905
    %v2096 = vunpack.c.h.b16 %v1905
    %v2097 = vunpack.c.l.b16 %v1906
    %v2098 = vunpack.c.h.b16 %v1906
    %v2099 = vunpack.c.l.b16 %v1907
    %v2100 = vunpack.c.h.b16 %v1907
    %v2101 = vunpack.c.l.b16 %v1908
    %v2102 = vunpack.c.h.b16 %v1908
    %v2103 = vunpack.c.l.b16 %v1909
    %v2104 = vunpack.c.h.b16 %v1909
    %v2105 = vunpack.c.l.b16 %v1910
    %v2106 = vunpack.c.h.b16 %v1910
    %v2107 = vunpack.c.l.b16 %v1911
    %v2108 = vunpack.c.h.b16 %v1911
    %v2109 = vunpack.c.l.b16 %v1912
    %v2110 = vunpack.c.h.b16 %v1912
    %v2111 = vpack.c.b16 %v1985, %v1983
    %v2112 = vpack.c.b16 %v1986, %v1984
    %v2113 = vpack.c.b16 %v1989, %v1987
    %v2114 = vpack.c.b16 %v1990, %v1988
    %v2115 = vpack.c.b16 %v1993, %v1991
    %v2116 = vpack.c.b16 %v1994, %v1992
    %v2117 = vpack.c.b16 %v1997, %v1995
    %v2118 = vpack.c.b16 %v1998, %v1996
    %v2119 = vpack.c.b16 %v2001, %v1999
    %v2120 = vpack.c.b16 %v2002, %v2000
    %v2121 = vpack.c.b16 %v2005, %v2003
    %v2122 = vpack.c.b16 %v2006, %v2004
    %v2123 = vpack.c.b16 %v2009, %v2007
    %v2124 = vpack.c.b16 %v2010, %v2008
    %v2125 = vpack.c.b16 %v2013, %v2011
    %v2126 = vpack.c.b16 %v2014, %v2012
    %v2127 = vpack.c.b16 %v2017, %v2015
    %v2128 = vpack.c.b16 %v2018, %v2016
    %v2129 = vpack.c.b16 %v2021, %v2019
    %v2130 = vpack.c.b16 %v2022, %v2020
    %v2131 = vpack.c.b16 %v2025, %v2023
    %v2132 = vpack.c.b16 %v2026, %v2024
    %v2133 = vpack.c.b16 %v2029, %v2027
    %v2134 = vpack.c.b16 %v2030, %v2028
    %v2135 = vpack.c.b16 %v2033, %v2031
    %v2136 = vpack.c.b16 %v2034, %v2032
    %v2137 = vpack.c.b16 %v2037, %v2035
    %v2138 = vpack.c.b16 %v2038, %v2036
    %v2139 = vpack.c.b16 %v2041, %v2039
    %v2140 = vpack.c.b16 %v2042, %v2040
    %v2141 = vpack.c.b16 %v2045, %v2043
    %v2142 = vpack.c.b16 %v2046, %v2044
    %v2143 = vpack.c.b16 %v2049, %v2047
    %v2144 = vpack.c.b16 %v2050, %v2048
    %v2145 = vpack.c.b16 %v2053, %v2051
    %v2146 = vpack.c.b16 %v2054, %v2052
    %v2147 = vpack.c.b16 %v2057, %v2055
    %v2148 = vpack.c.b16 %v2058, %v2056
    %v2149 = vpack.c.b16 %v2061, %v2059
    %v2150 = vpack.c.b16 %v2062, %v2060
    %v2151 = vpack.c.b16 %v2065, %v2063
    %v2152 = vpack.c.b16 %v2066, %v2064
    %v2153 = vpack.c.b16 %v2069, %v2067
    %v2154 = vpack.c.b16 %v2070, %v2068
    %v2155 = vpack.c.b16 %v2073, %v2071
    %v2156 = vpack.c.b16 %v2074, %v2072
    %v2157 = vpack.c.b16 %v2077, %v2075
    %v2158 = vpack.c.b16 %v2078, %v2076
    %v2159 = vpack.c.b16 %v2081, %v2079
    %v2160 = vpack.c.b16 %v2082, %v2080
    %v2161 = vpack.c.b16 %v2085, %v2083
    %v2162 = vpack.c.b16 %v2086, %v2084
    %v2163 = vpack.c.b16 %v2089, %v2087
    %v2164 = vpack.c.b16 %v2090, %v2088
    %v2165 = vpack.c.b16 %v2093, %v2091
    %v2166 = vpack.c.b16 %v2094, %v2092
    %v2167 = vpack.c.b16 %v2097, %v2095
    %v2168 = vpack.c.b16 %v2098, %v2096
    %v2169 = vpack.c.b16 %v2101, %v2099
    %v2170 = vpack.c.b16 %v2102, %v2100
    %v2171 = vpack.c.b16 %v2105, %v2103
    %v2172 = vpack.c.b16 %v2106, %v2104
    %v2173 = vpack.c.b16 %v2109, %v2107
    %v2174 = vpack.c.b16 %v2110, %v2108
    %2239 = vmatpush.bf16.msra.mxu0 %v2125
    %2240 = vmatpush.bf16.msra.mxu0 %v2123
    %2241 = vmatpush.bf16.msra.mxu0 %v2121
    %2242 = vmatpush.bf16.msra.mxu0 %v2119
    %2243 = vmatpush.bf16.msra.mxu0 %v2117
    %2244 = vmatpush.bf16.msra.mxu0 %v2115
    %2245 = vmatpush.bf16.msra.mxu0 %v2113
    %2246 = vmatpush.bf16.msra.mxu0 %v2111
    %2247 = vmatmul.bf16.gmra.mxu0 %v1845
    %v2248 = vpop.f32.mrf.mxu0
    %v2249 = vadd.f32 %v1915, %v2248
    %v2250 = vpop.f32.mrf.mxu0
    %2251 = vdwg.mxu0
    %2252 = vmatpush.bf16.msra.mxu0 %v2141
    %2253 = vmatpush.bf16.msra.mxu0 %v2139
    %2254 = vmatpush.bf16.msra.mxu0 %v2137
    %2255 = vmatpush.bf16.msra.mxu0 %v2135
    %2256 = vmatpush.bf16.msra.mxu0 %v2133
    %2257 = vmatpush.bf16.msra.mxu0 %v2131
    %2258 = vmatpush.bf16.msra.mxu0 %v2129
    %2259 = vmatpush.bf16.msra.mxu0 %v2127
    %2260 = vmatmul.bf16.gmra.mxu0 %v1846
    %v2261 = vpop.f32.mrf.mxu0
    %v2262 = vadd.f32 %v2249, %v2261
    %v2263 = vpop.f32.mrf.mxu0
    %2264 = vdwg.mxu0
    %2265 = vmatpush.bf16.msra.mxu0 %v2157
    %2266 = vmatpush.bf16.msra.mxu0 %v2155
    %2267 = vmatpush.bf16.msra.mxu0 %v2153
    %2268 = vmatpush.bf16.msra.mxu0 %v2151
    %2269 = vmatpush.bf16.msra.mxu0 %v2149
    %2270 = vmatpush.bf16.msra.mxu0 %v2147
    %2271 = vmatpush.bf16.msra.mxu0 %v2145
    %2272 = vmatpush.bf16.msra.mxu0 %v2143
    %2273 = vmatmul.bf16.gmra.mxu0 %v1847
    %v2274 = vpop.f32.mrf.mxu0
    %v2275 = vadd.f32 %v2262, %v2274
    %v2276 = vpop.f32.mrf.mxu0
    %2277 = vdwg.mxu0
    %2278 = vmatpush.bf16.msra.mxu0 %v2173
    %2279 = vmatpush.bf16.msra.mxu0 %v2171
    %2280 = vmatpush.bf16.msra.mxu0 %v2169
    %2281 = vmatpush.bf16.msra.mxu0 %v2167
    %2282 = vmatpush.bf16.msra.mxu0 %v2165
    %2283 = vmatpush.bf16.msra.mxu0 %v2163
    %2284 = vmatpush.bf16.msra.mxu0 %v2161
    %2285 = vmatpush.bf16.msra.mxu0 %v2159
    %2286 = vmatmul.bf16.gmra.mxu0 %v1848
    %v2287 = vpop.f32.mrf.mxu0
    %v2288 = vadd.f32 %v2275, %v2287
    %v2289 = vpop.f32.mrf.mxu0
    %2290 = vdwg.mxu0
    %2291 = vmatpush.bf16.msra.mxu0 %v2126
    %2292 = vmatpush.bf16.msra.mxu0 %v2124
    %2293 = vmatpush.bf16.msra.mxu0 %v2122
    %2294 = vmatpush.bf16.msra.mxu0 %v2120
    %2295 = vmatpush.bf16.msra.mxu0 %v2118
    %2296 = vmatpush.bf16.msra.mxu0 %v2116
    %2297 = vmatpush.bf16.msra.mxu0 %v2114
    %2298 = vmatpush.bf16.msra.mxu0 %v2112
    %2299 = vmatmul.bf16.gmra.mxu0 %v1845
    %v2300 = vpop.f32.mrf.mxu0
    %v2301 = vadd.f32 %v1916, %v2300
    %v2302 = vpop.f32.mrf.mxu0
    %2303 = vdwg.mxu0
    %2304 = vmatpush.bf16.msra.mxu0 %v2142
    %2305 = vmatpush.bf16.msra.mxu0 %v2140
    %2306 = vmatpush.bf16.msra.mxu0 %v2138
    %2307 = vmatpush.bf16.msra.mxu0 %v2136
    %2308 = vmatpush.bf16.msra.mxu0 %v2134
    %2309 = vmatpush.bf16.msra.mxu0 %v2132
    %2310 = vmatpush.bf16.msra.mxu0 %v2130
    %2311 = vmatpush.bf16.msra.mxu0 %v2128
    %2312 = vmatmul.bf16.gmra.mxu0 %v1846
    %v2313 = vpop.f32.mrf.mxu0
    %v2314 = vadd.f32 %v2301, %v2313
    %v2315 = vpop.f32.mrf.mxu0
    %2316 = vdwg.mxu0
    %2317 = vmatpush.bf16.msra.mxu0 %v2158
    %2318 = vmatpush.bf16.msra.mxu0 %v2156
    %2319 = vmatpush.bf16.msra.mxu0 %v2154
    %2320 = vmatpush.bf16.msra.mxu0 %v2152
    %2321 = vmatpush.bf16.msra.mxu0 %v2150
    %2322 = vmatpush.bf16.msra.mxu0 %v2148
    %2323 = vmatpush.bf16.msra.mxu0 %v2146
    %2324 = vmatpush.bf16.msra.mxu0 %v2144
    %2325 = vmatmul.bf16.gmra.mxu0 %v1847
    %v2326 = vpop.f32.mrf.mxu0
    %v2327 = vadd.f32 %v2314, %v2326
    %v2328 = vpop.f32.mrf.mxu0
    %2329 = vdwg.mxu0
    %2330 = vmatpush.bf16.msra.mxu0 %v2174
    %2331 = vmatpush.bf16.msra.mxu0 %v2172
    %2332 = vmatpush.bf16.msra.mxu0 %v2170
    %2333 = vmatpush.bf16.msra.mxu0 %v2168
    %2334 = vmatpush.bf16.msra.mxu0 %v2166
    %2335 = vmatpush.bf16.msra.mxu0 %v2164
    %2336 = vmatpush.bf16.msra.mxu0 %v2162
    %2337 = vmatpush.bf16.msra.mxu0 %v2160
    %2338 = vmatmul.bf16.gmra.mxu0 %v1848
    %v2339 = vpop.f32.mrf.mxu0
    %v2340 = vadd.f32 %v2327, %v2339
    %v2341 = vpop.f32.mrf.mxu0
    %2342 = vdwg.mxu0
    %v2343 = vtanh.pop %v2288
    %v2344 = vtanh.pop %v2340
    %v2345 = vpack.c.bf16 %v345, %v345
    %v2346 = vpack.c.bf16 %v346, %v346
    %v2347 = vld [vmem:[#allocation9] sm:$0xff]
    %v2348 = vld [vmem:[#allocation9 + $0x8] sm:$0xff]
    %v2349 = vld [vmem:[#allocation9 + $0x10] sm:$0xff]
    %v2350 = vld [vmem:[#allocation9 + $0x18] sm:$0xff]
    %v2351 = vld [vmem:[#allocation9 + $0x20] sm:$0xff]
    %v2352 = vld [vmem:[#allocation9 + $0x28] sm:$0xff]
    %v2353 = vld [vmem:[#allocation9 + $0x30] sm:$0xff]
    %v2354 = vld [vmem:[#allocation9 + $0x38] sm:$0xff]
    %v2355 = vld [vmem:[#allocation9 + $0x40] sm:$0xff]
    %v2356 = vld [vmem:[#allocation9 + $0x48] sm:$0xff]
    %v2357 = vld [vmem:[#allocation9 + $0x50] sm:$0xff]
    %v2358 = vld [vmem:[#allocation9 + $0x58] sm:$0xff]
    %v2359 = vld [vmem:[#allocation9 + $0x60] sm:$0xff]
    %v2360 = vld [vmem:[#allocation9 + $0x68] sm:$0xff]
    %v2361 = vld [vmem:[#allocation9 + $0x70] sm:$0xff]
    %v2362 = vld [vmem:[#allocation9 + $0x78] sm:$0xff]
    %v2363 = vld [vmem:[#allocation9 + $0x80] sm:$0xff]
    %v2364 = vld [vmem:[#allocation9 + $0x88] sm:$0xff]
    %v2365 = vld [vmem:[#allocation9 + $0x90] sm:$0xff]
    %v2366 = vld [vmem:[#allocation9 + $0x98] sm:$0xff]
    %v2367 = vld [vmem:[#allocation9 + $0xa0] sm:$0xff]
    %v2368 = vld [vmem:[#allocation9 + $0xa8] sm:$0xff]
    %v2369 = vld [vmem:[#allocation9 + $0xb0] sm:$0xff]
    %v2370 = vld [vmem:[#allocation9 + $0xb8] sm:$0xff]
    %v2371 = vld [vmem:[#allocation9 + $0xc0] sm:$0xff]
    %v2372 = vld [vmem:[#allocation9 + $0xc8] sm:$0xff]
    %v2373 = vld [vmem:[#allocation9 + $0xd0] sm:$0xff]
    %v2374 = vld [vmem:[#allocation9 + $0xd8] sm:$0xff]
    %v2375 = vld [vmem:[#allocation9 + $0xe0] sm:$0xff]
    %v2376 = vld [vmem:[#allocation9 + $0xe8] sm:$0xff]
    %v2377 = vld [vmem:[#allocation9 + $0xf0] sm:$0xff]
    %v2378 = vld [vmem:[#allocation9 + $0xf8] sm:$0xff]
    %v2379 = vld [vmem:[#allocation9 + $0x100] sm:$0xff]
    %v2380 = vld [vmem:[#allocation9 + $0x108] sm:$0xff]
    %v2381 = vld [vmem:[#allocation9 + $0x110] sm:$0xff]
    %v2382 = vld [vmem:[#allocation9 + $0x118] sm:$0xff]
    %v2383 = vld [vmem:[#allocation9 + $0x120] sm:$0xff]
    %v2384 = vld [vmem:[#allocation9 + $0x128] sm:$0xff]
    %v2385 = vld [vmem:[#allocation9 + $0x130] sm:$0xff]
    %v2386 = vld [vmem:[#allocation9 + $0x138] sm:$0xff]
    %v2387 = vld [vmem:[#allocation9 + $0x140] sm:$0xff]
    %v2388 = vld [vmem:[#allocation9 + $0x148] sm:$0xff]
    %v2389 = vld [vmem:[#allocation9 + $0x150] sm:$0xff]
    %v2390 = vld [vmem:[#allocation9 + $0x158] sm:$0xff]
    %v2391 = vld [vmem:[#allocation9 + $0x160] sm:$0xff]
    %v2392 = vld [vmem:[#allocation9 + $0x168] sm:$0xff]
    %v2393 = vld [vmem:[#allocation9 + $0x170] sm:$0xff]
    %v2394 = vld [vmem:[#allocation9 + $0x178] sm:$0xff]
    %v2395 = vld [vmem:[#allocation9 + $0x180] sm:$0xff]
    %v2396 = vld [vmem:[#allocation9 + $0x188] sm:$0xff]
    %v2397 = vld [vmem:[#allocation9 + $0x190] sm:$0xff]
    %v2398 = vld [vmem:[#allocation9 + $0x198] sm:$0xff]
    %v2399 = vld [vmem:[#allocation9 + $0x1a0] sm:$0xff]
    %v2400 = vld [vmem:[#allocation9 + $0x1a8] sm:$0xff]
    %v2401 = vld [vmem:[#allocation9 + $0x1b0] sm:$0xff]
    %v2402 = vld [vmem:[#allocation9 + $0x1b8] sm:$0xff]
    %v2403 = vld [vmem:[#allocation9 + $0x1c0] sm:$0xff]
    %v2404 = vld [vmem:[#allocation9 + $0x1c8] sm:$0xff]
    %v2405 = vld [vmem:[#allocation9 + $0x1d0] sm:$0xff]
    %v2406 = vld [vmem:[#allocation9 + $0x1d8] sm:$0xff]
    %v2407 = vld [vmem:[#allocation9 + $0x1e0] sm:$0xff]
    %v2408 = vld [vmem:[#allocation9 + $0x1e8] sm:$0xff]
    %v2409 = vld [vmem:[#allocation9 + $0x1f0] sm:$0xff]
    %v2410 = vld [vmem:[#allocation9 + $0x1f8] sm:$0xff]
    %v2411 = vld [vmem:[%s10] sm:$0xf]
    %v2413 = vperm.slane %v2411, 0
    %v2414 = vperm.slane %v2411, 1
    %v2415 = vperm.slane %v2411, 2
    %v2416 = vperm.slane %v2411, 3
    %v2485 = vunpack.c.l.b16 %v2347
    %v2486 = vunpack.c.h.b16 %v2347
    %v2487 = vunpack.c.l.b16 %v2348
    %v2488 = vunpack.c.h.b16 %v2348
    %v2489 = vunpack.c.l.b16 %v2349
    %v2490 = vunpack.c.h.b16 %v2349
    %v2491 = vunpack.c.l.b16 %v2350
    %v2492 = vunpack.c.h.b16 %v2350
    %v2493 = vunpack.c.l.b16 %v2351
    %v2494 = vunpack.c.h.b16 %v2351
    %v2495 = vunpack.c.l.b16 %v2352
    %v2496 = vunpack.c.h.b16 %v2352
    %v2497 = vunpack.c.l.b16 %v2353
    %v2498 = vunpack.c.h.b16 %v2353
    %v2499 = vunpack.c.l.b16 %v2354
    %v2500 = vunpack.c.h.b16 %v2354
    %v2501 = vunpack.c.l.b16 %v2355
    %v2502 = vunpack.c.h.b16 %v2355
    %v2503 = vunpack.c.l.b16 %v2356
    %v2504 = vunpack.c.h.b16 %v2356
    %v2505 = vunpack.c.l.b16 %v2357
    %v2506 = vunpack.c.h.b16 %v2357
    %v2507 = vunpack.c.l.b16 %v2358
    %v2508 = vunpack.c.h.b16 %v2358
    %v2509 = vunpack.c.l.b16 %v2359
    %v2510 = vunpack.c.h.b16 %v2359
    %v2511 = vunpack.c.l.b16 %v2360
    %v2512 = vunpack.c.h.b16 %v2360
    %v2513 = vunpack.c.l.b16 %v2361
    %v2514 = vunpack.c.h.b16 %v2361
    %v2515 = vunpack.c.l.b16 %v2362
    %v2516 = vunpack.c.h.b16 %v2362
    %v2517 = vunpack.c.l.b16 %v2363
    %v2518 = vunpack.c.h.b16 %v2363
    %v2519 = vunpack.c.l.b16 %v2364
    %v2520 = vunpack.c.h.b16 %v2364
    %v2521 = vunpack.c.l.b16 %v2365
    %v2522 = vunpack.c.h.b16 %v2365
    %v2523 = vunpack.c.l.b16 %v2366
    %v2524 = vunpack.c.h.b16 %v2366
    %v2525 = vunpack.c.l.b16 %v2367
    %v2526 = vunpack.c.h.b16 %v2367
    %v2527 = vunpack.c.l.b16 %v2368
    %v2528 = vunpack.c.h.b16 %v2368
    %v2529 = vunpack.c.l.b16 %v2369
    %v2530 = vunpack.c.h.b16 %v2369
    %v2531 = vunpack.c.l.b16 %v2370
    %v2532 = vunpack.c.h.b16 %v2370
    %v2533 = vunpack.c.l.b16 %v2371
    %v2534 = vunpack.c.h.b16 %v2371
    %v2535 = vunpack.c.l.b16 %v2372
    %v2536 = vunpack.c.h.b16 %v2372
    %v2537 = vunpack.c.l.b16 %v2373
    %v2538 = vunpack.c.h.b16 %v2373
    %v2539 = vunpack.c.l.b16 %v2374
    %v2540 = vunpack.c.h.b16 %v2374
    %v2541 = vunpack.c.l.b16 %v2375
    %v2542 = vunpack.c.h.b16 %v2375
    %v2543 = vunpack.c.l.b16 %v2376
    %v2544 = vunpack.c.h.b16 %v2376
    %v2545 = vunpack.c.l.b16 %v2377
    %v2546 = vunpack.c.h.b16 %v2377
    %v2547 = vunpack.c.l.b16 %v2378
    %v2548 = vunpack.c.h.b16 %v2378
    %v2549 = vunpack.c.l.b16 %v2379
    %v2550 = vunpack.c.h.b16 %v2379
    %v2551 = vunpack.c.l.b16 %v2380
    %v2552 = vunpack.c.h.b16 %v2380
    %v2553 = vunpack.c.l.b16 %v2381
    %v2554 = vunpack.c.h.b16 %v2381
    %v2555 = vunpack.c.l.b16 %v2382
    %v2556 = vunpack.c.h.b16 %v2382
    %v2557 = vunpack.c.l.b16 %v2383
    %v2558 = vunpack.c.h.b16 %v2383
    %v2559 = vunpack.c.l.b16 %v2384
    %v2560 = vunpack.c.h.b16 %v2384
    %v2561 = vunpack.c.l.b16 %v2385
    %v2562 = vunpack.c.h.b16 %v2385
    %v2563 = vunpack.c.l.b16 %v2386
    %v2564 = vunpack.c.h.b16 %v2386
    %v2565 = vunpack.c.l.b16 %v2387
    %v2566 = vunpack.c.h.b16 %v2387
    %v2567 = vunpack.c.l.b16 %v2388
    %v2568 = vunpack.c.h.b16 %v2388
    %v2569 = vunpack.c.l.b16 %v2389
    %v2570 = vunpack.c.h.b16 %v2389
    %v2571 = vunpack.c.l.b16 %v2390
    %v2572 = vunpack.c.h.b16 %v2390
    %v2573 = vunpack.c.l.b16 %v2391
    %v2574 = vunpack.c.h.b16 %v2391
    %v2575 = vunpack.c.l.b16 %v2392
    %v2576 = vunpack.c.h.b16 %v2392
    %v2577 = vunpack.c.l.b16 %v2393
    %v2578 = vunpack.c.h.b16 %v2393
    %v2579 = vunpack.c.l.b16 %v2394
    %v2580 = vunpack.c.h.b16 %v2394
    %v2581 = vunpack.c.l.b16 %v2395
    %v2582 = vunpack.c.h.b16 %v2395
    %v2583 = vunpack.c.l.b16 %v2396
    %v2584 = vunpack.c.h.b16 %v2396
    %v2585 = vunpack.c.l.b16 %v2397
    %v2586 = vunpack.c.h.b16 %v2397
    %v2587 = vunpack.c.l.b16 %v2398
    %v2588 = vunpack.c.h.b16 %v2398
    %v2589 = vunpack.c.l.b16 %v2399
    %v2590 = vunpack.c.h.b16 %v2399
    %v2591 = vunpack.c.l.b16 %v2400
    %v2592 = vunpack.c.h.b16 %v2400
    %v2593 = vunpack.c.l.b16 %v2401
    %v2594 = vunpack.c.h.b16 %v2401
    %v2595 = vunpack.c.l.b16 %v2402
    %v2596 = vunpack.c.h.b16 %v2402
    %v2597 = vunpack.c.l.b16 %v2403
    %v2598 = vunpack.c.h.b16 %v2403
    %v2599 = vunpack.c.l.b16 %v2404
    %v2600 = vunpack.c.h.b16 %v2404
    %v2601 = vunpack.c.l.b16 %v2405
    %v2602 = vunpack.c.h.b16 %v2405
    %v2603 = vunpack.c.l.b16 %v2406
    %v2604 = vunpack.c.h.b16 %v2406
    %v2605 = vunpack.c.l.b16 %v2407
    %v2606 = vunpack.c.h.b16 %v2407
    %v2607 = vunpack.c.l.b16 %v2408
    %v2608 = vunpack.c.h.b16 %v2408
    %v2609 = vunpack.c.l.b16 %v2409
    %v2610 = vunpack.c.h.b16 %v2409
    %v2611 = vunpack.c.l.b16 %v2410
    %v2612 = vunpack.c.h.b16 %v2410
    %v2613 = vpack.c.b16 %v2489, %v2485
    %v2614 = vpack.c.b16 %v2490, %v2486
    %v2615 = vpack.c.b16 %v2491, %v2487
    %v2616 = vpack.c.b16 %v2492, %v2488
    %v2617 = vpack.c.b16 %v2497, %v2493
    %v2618 = vpack.c.b16 %v2498, %v2494
    %v2619 = vpack.c.b16 %v2499, %v2495
    %v2620 = vpack.c.b16 %v2500, %v2496
    %v2621 = vpack.c.b16 %v2505, %v2501
    %v2622 = vpack.c.b16 %v2506, %v2502
    %v2623 = vpack.c.b16 %v2507, %v2503
    %v2624 = vpack.c.b16 %v2508, %v2504
    %v2625 = vpack.c.b16 %v2513, %v2509
    %v2626 = vpack.c.b16 %v2514, %v2510
    %v2627 = vpack.c.b16 %v2515, %v2511
    %v2628 = vpack.c.b16 %v2516, %v2512
    %v2629 = vpack.c.b16 %v2521, %v2517
    %v2630 = vpack.c.b16 %v2522, %v2518
    %v2631 = vpack.c.b16 %v2523, %v2519
    %v2632 = vpack.c.b16 %v2524, %v2520
    %v2633 = vpack.c.b16 %v2529, %v2525
    %v2634 = vpack.c.b16 %v2530, %v2526
    %v2635 = vpack.c.b16 %v2531, %v2527
    %v2636 = vpack.c.b16 %v2532, %v2528
    %v2637 = vpack.c.b16 %v2537, %v2533
    %v2638 = vpack.c.b16 %v2538, %v2534
    %v2639 = vpack.c.b16 %v2539, %v2535
    %v2640 = vpack.c.b16 %v2540, %v2536
    %v2641 = vpack.c.b16 %v2545, %v2541
    %v2642 = vpack.c.b16 %v2546, %v2542
    %v2643 = vpack.c.b16 %v2547, %v2543
    %v2644 = vpack.c.b16 %v2548, %v2544
    %v2645 = vpack.c.b16 %v2553, %v2549
    %v2646 = vpack.c.b16 %v2554, %v2550
    %v2647 = vpack.c.b16 %v2555, %v2551
    %v2648 = vpack.c.b16 %v2556, %v2552
    %v2649 = vpack.c.b16 %v2561, %v2557
    %v2650 = vpack.c.b16 %v2562, %v2558
    %v2651 = vpack.c.b16 %v2563, %v2559
    %v2652 = vpack.c.b16 %v2564, %v2560
    %v2653 = vpack.c.b16 %v2569, %v2565
    %v2654 = vpack.c.b16 %v2570, %v2566
    %v2655 = vpack.c.b16 %v2571, %v2567
    %v2656 = vpack.c.b16 %v2572, %v2568
    %v2657 = vpack.c.b16 %v2577, %v2573
    %v2658 = vpack.c.b16 %v2578, %v2574
    %v2659 = vpack.c.b16 %v2579, %v2575
    %v2660 = vpack.c.b16 %v2580, %v2576
    %v2661 = vpack.c.b16 %v2585, %v2581
    %v2662 = vpack.c.b16 %v2586, %v2582
    %v2663 = vpack.c.b16 %v2587, %v2583
    %v2664 = vpack.c.b16 %v2588, %v2584
    %v2665 = vpack.c.b16 %v2593, %v2589
    %v2666 = vpack.c.b16 %v2594, %v2590
    %v2667 = vpack.c.b16 %v2595, %v2591
    %v2668 = vpack.c.b16 %v2596, %v2592
    %v2669 = vpack.c.b16 %v2601, %v2597
    %v2670 = vpack.c.b16 %v2602, %v2598
    %v2671 = vpack.c.b16 %v2603, %v2599
    %v2672 = vpack.c.b16 %v2604, %v2600
    %v2673 = vpack.c.b16 %v2609, %v2605
    %v2674 = vpack.c.b16 %v2610, %v2606
    %v2675 = vpack.c.b16 %v2611, %v2607
    %v2676 = vpack.c.b16 %v2612, %v2608
    %2741 = vmatpush.bf16.msra.mxu0 %v2641
    %2742 = vmatpush.bf16.msra.mxu0 %v2637
    %2743 = vmatpush.bf16.msra.mxu0 %v2633
    %2744 = vmatpush.bf16.msra.mxu0 %v2629
    %2745 = vmatpush.bf16.msra.mxu0 %v2625
    %2746 = vmatpush.bf16.msra.mxu0 %v2621
    %2747 = vmatpush.bf16.msra.mxu0 %v2617
    %2748 = vmatpush.bf16.msra.mxu0 %v2613
    %2749 = vmatmul.bf16.gmra.mxu0 %v2345
    %v2750 = vpop.f32.mrf.mxu0
    %v2751 = vadd.f32 %v2413, %v2750
    %v2752 = vpop.f32.mrf.mxu0
    %2753 = vdwg.mxu0
    %2754 = vmatpush.bf16.msra.mxu0 %v2673
    %2755 = vmatpush.bf16.msra.mxu0 %v2669
    %2756 = vmatpush.bf16.msra.mxu0 %v2665
    %2757 = vmatpush.bf16.msra.mxu0 %v2661
    %2758 = vmatpush.bf16.msra.mxu0 %v2657
    %2759 = vmatpush.bf16.msra.mxu0 %v2653
    %2760 = vmatpush.bf16.msra.mxu0 %v2649
    %2761 = vmatpush.bf16.msra.mxu0 %v2645
    %2762 = vmatmul.bf16.gmra.mxu0 %v2346
    %v2763 = vpop.f32.mrf.mxu0
    %v2764 = vadd.f32 %v2751, %v2763
    %v2765 = vpop.f32.mrf.mxu0
    %2766 = vdwg.mxu0
    %2767 = vmatpush.bf16.msra.mxu0 %v2642
    %2768 = vmatpush.bf16.msra.mxu0 %v2638
    %2769 = vmatpush.bf16.msra.mxu0 %v2634
    %2770 = vmatpush.bf16.msra.mxu0 %v2630
    %2771 = vmatpush.bf16.msra.mxu0 %v2626
    %2772 = vmatpush.bf16.msra.mxu0 %v2622
    %2773 = vmatpush.bf16.msra.mxu0 %v2618
    %2774 = vmatpush.bf16.msra.mxu0 %v2614
    %2775 = vmatmul.bf16.gmra.mxu0 %v2345
    %v2776 = vpop.f32.mrf.mxu0
    %v2777 = vadd.f32 %v2414, %v2776
    %v2778 = vpop.f32.mrf.mxu0
    %2779 = vdwg.mxu0
    %2780 = vmatpush.bf16.msra.mxu0 %v2674
    %2781 = vmatpush.bf16.msra.mxu0 %v2670
    %2782 = vmatpush.bf16.msra.mxu0 %v2666
    %2783 = vmatpush.bf16.msra.mxu0 %v2662
    %2784 = vmatpush.bf16.msra.mxu0 %v2658
    %2785 = vmatpush.bf16.msra.mxu0 %v2654
    %2786 = vmatpush.bf16.msra.mxu0 %v2650
    %2787 = vmatpush.bf16.msra.mxu0 %v2646
    %2788 = vmatmul.bf16.gmra.mxu0 %v2346
    %v2789 = vpop.f32.mrf.mxu0
    %v2790 = vadd.f32 %v2777, %v2789
    %v2791 = vpop.f32.mrf.mxu0
    %2792 = vdwg.mxu0
    %2793 = vmatpush.bf16.msra.mxu0 %v2643
    %2794 = vmatpush.bf16.msra.mxu0 %v2639
    %2795 = vmatpush.bf16.msra.mxu0 %v2635
    %2796 = vmatpush.bf16.msra.mxu0 %v2631
    %2797 = vmatpush.bf16.msra.mxu0 %v2627
    %2798 = vmatpush.bf16.msra.mxu0 %v2623
    %2799 = vmatpush.bf16.msra.mxu0 %v2619
    %2800 = vmatpush.bf16.msra.mxu0 %v2615
    %2801 = vmatmul.bf16.gmra.mxu0 %v2345
    %v2802 = vpop.f32.mrf.mxu0
    %v2803 = vadd.f32 %v2415, %v2802
    %v2804 = vpop.f32.mrf.mxu0
    %2805 = vdwg.mxu0
    %2806 = vmatpush.bf16.msra.mxu0 %v2675
    %2807 = vmatpush.bf16.msra.mxu0 %v2671
    %2808 = vmatpush.bf16.msra.mxu0 %v2667
    %2809 = vmatpush.bf16.msra.mxu0 %v2663
    %2810 = vmatpush.bf16.msra.mxu0 %v2659
    %2811 = vmatpush.bf16.msra.mxu0 %v2655
    %2812 = vmatpush.bf16.msra.mxu0 %v2651
    %2813 = vmatpush.bf16.msra.mxu0 %v2647
    %2814 = vmatmul.bf16.gmra.mxu0 %v2346
    %v2815 = vpop.f32.mrf.mxu0
    %v2816 = vadd.f32 %v2803, %v2815
    %v2817 = vpop.f32.mrf.mxu0
    %2818 = vdwg.mxu0
    %2819 = vmatpush.bf16.msra.mxu0 %v2644
    %2820 = vmatpush.bf16.msra.mxu0 %v2640
    %2821 = vmatpush.bf16.msra.mxu0 %v2636
    %2822 = vmatpush.bf16.msra.mxu0 %v2632
    %2823 = vmatpush.bf16.msra.mxu0 %v2628
    %2824 = vmatpush.bf16.msra.mxu0 %v2624
    %2825 = vmatpush.bf16.msra.mxu0 %v2620
    %2826 = vmatpush.bf16.msra.mxu0 %v2616
    %2827 = vmatmul.bf16.gmra.mxu0 %v2345
    %v2828 = vpop.f32.mrf.mxu0
    %v2829 = vadd.f32 %v2416, %v2828
    %v2830 = vpop.f32.mrf.mxu0
    %2831 = vdwg.mxu0
    %2832 = vmatpush.bf16.msra.mxu0 %v2676
    %2833 = vmatpush.bf16.msra.mxu0 %v2672
    %2834 = vmatpush.bf16.msra.mxu0 %v2668
    %2835 = vmatpush.bf16.msra.mxu0 %v2664
    %2836 = vmatpush.bf16.msra.mxu0 %v2660
    %2837 = vmatpush.bf16.msra.mxu0 %v2656
    %2838 = vmatpush.bf16.msra.mxu0 %v2652
    %2839 = vmatpush.bf16.msra.mxu0 %v2648
    %2840 = vmatmul.bf16.gmra.mxu0 %v2346
    %v2841 = vpop.f32.mrf.mxu0
    %v2842 = vadd.f32 %v2829, %v2841
    %v2843 = vpop.f32.mrf.mxu0
    %2844 = vdwg.mxu0
    %v2845 = vmax.f32 %v2764, 0.0
    %v2846 = vmax.f32 %v2790, 0.0
    %v2847 = vmax.f32 %v2816, 0.0
    %v2848 = vmax.f32 %v2842, 0.0
    %v2849 = vpack.c.bf16 %v2845, %v2845
    %v2850 = vpack.c.bf16 %v2846, %v2846
    %v2851 = vpack.c.bf16 %v2847, %v2847
    %v2852 = vpack.c.bf16 %v2848, %v2848
    %v2853 = vld [vmem:[#allocation10] sm:$0xff]
    %v2854 = vld [vmem:[#allocation10 + $0x8] sm:$0xff]
    %v2855 = vld [vmem:[#allocation10 + $0x10] sm:$0xff]
    %v2856 = vld [vmem:[#allocation10 + $0x18] sm:$0xff]
    %v2857 = vld [vmem:[#allocation10 + $0x20] sm:$0xff]
    %v2858 = vld [vmem:[#allocation10 + $0x28] sm:$0xff]
    %v2859 = vld [vmem:[#allocation10 + $0x30] sm:$0xff]
    %v2860 = vld [vmem:[#allocation10 + $0x38] sm:$0xff]
    %v2861 = vld [vmem:[#allocation10 + $0x40] sm:$0xff]
    %v2862 = vld [vmem:[#allocation10 + $0x48] sm:$0xff]
    %v2863 = vld [vmem:[#allocation10 + $0x50] sm:$0xff]
    %v2864 = vld [vmem:[#allocation10 + $0x58] sm:$0xff]
    %v2865 = vld [vmem:[#allocation10 + $0x60] sm:$0xff]
    %v2866 = vld [vmem:[#allocation10 + $0x68] sm:$0xff]
    %v2867 = vld [vmem:[#allocation10 + $0x70] sm:$0xff]
    %v2868 = vld [vmem:[#allocation10 + $0x78] sm:$0xff]
    %v2869 = vld [vmem:[#allocation10 + $0x80] sm:$0xff]
    %v2870 = vld [vmem:[#allocation10 + $0x88] sm:$0xff]
    %v2871 = vld [vmem:[#allocation10 + $0x90] sm:$0xff]
    %v2872 = vld [vmem:[#allocation10 + $0x98] sm:$0xff]
    %v2873 = vld [vmem:[#allocation10 + $0xa0] sm:$0xff]
    %v2874 = vld [vmem:[#allocation10 + $0xa8] sm:$0xff]
    %v2875 = vld [vmem:[#allocation10 + $0xb0] sm:$0xff]
    %v2876 = vld [vmem:[#allocation10 + $0xb8] sm:$0xff]
    %v2877 = vld [vmem:[#allocation10 + $0xc0] sm:$0xff]
    %v2878 = vld [vmem:[#allocation10 + $0xc8] sm:$0xff]
    %v2879 = vld [vmem:[#allocation10 + $0xd0] sm:$0xff]
    %v2880 = vld [vmem:[#allocation10 + $0xd8] sm:$0xff]
    %v2881 = vld [vmem:[#allocation10 + $0xe0] sm:$0xff]
    %v2882 = vld [vmem:[#allocation10 + $0xe8] sm:$0xff]
    %v2883 = vld [vmem:[#allocation10 + $0xf0] sm:$0xff]
    %v2884 = vld [vmem:[#allocation10 + $0xf8] sm:$0xff]
    %v2885 = vld [vmem:[#allocation10 + $0x100] sm:$0xff]
    %v2886 = vld [vmem:[#allocation10 + $0x108] sm:$0xff]
    %v2887 = vld [vmem:[#allocation10 + $0x110] sm:$0xff]
    %v2888 = vld [vmem:[#allocation10 + $0x118] sm:$0xff]
    %v2889 = vld [vmem:[#allocation10 + $0x120] sm:$0xff]
    %v2890 = vld [vmem:[#allocation10 + $0x128] sm:$0xff]
    %v2891 = vld [vmem:[#allocation10 + $0x130] sm:$0xff]
    %v2892 = vld [vmem:[#allocation10 + $0x138] sm:$0xff]
    %v2893 = vld [vmem:[#allocation10 + $0x140] sm:$0xff]
    %v2894 = vld [vmem:[#allocation10 + $0x148] sm:$0xff]
    %v2895 = vld [vmem:[#allocation10 + $0x150] sm:$0xff]
    %v2896 = vld [vmem:[#allocation10 + $0x158] sm:$0xff]
    %v2897 = vld [vmem:[#allocation10 + $0x160] sm:$0xff]
    %v2898 = vld [vmem:[#allocation10 + $0x168] sm:$0xff]
    %v2899 = vld [vmem:[#allocation10 + $0x170] sm:$0xff]
    %v2900 = vld [vmem:[#allocation10 + $0x178] sm:$0xff]
    %v2901 = vld [vmem:[#allocation10 + $0x180] sm:$0xff]
    %v2902 = vld [vmem:[#allocation10 + $0x188] sm:$0xff]
    %v2903 = vld [vmem:[#allocation10 + $0x190] sm:$0xff]
    %v2904 = vld [vmem:[#allocation10 + $0x198] sm:$0xff]
    %v2905 = vld [vmem:[#allocation10 + $0x1a0] sm:$0xff]
    %v2906 = vld [vmem:[#allocation10 + $0x1a8] sm:$0xff]
    %v2907 = vld [vmem:[#allocation10 + $0x1b0] sm:$0xff]
    %v2908 = vld [vmem:[#allocation10 + $0x1b8] sm:$0xff]
    %v2909 = vld [vmem:[#allocation10 + $0x1c0] sm:$0xff]
    %v2910 = vld [vmem:[#allocation10 + $0x1c8] sm:$0xff]
    %v2911 = vld [vmem:[#allocation10 + $0x1d0] sm:$0xff]
    %v2912 = vld [vmem:[#allocation10 + $0x1d8] sm:$0xff]
    %v2913 = vld [vmem:[#allocation10 + $0x1e0] sm:$0xff]
    %v2914 = vld [vmem:[#allocation10 + $0x1e8] sm:$0xff]
    %v2915 = vld [vmem:[#allocation10 + $0x1f0] sm:$0xff]
    %v2916 = vld [vmem:[#allocation10 + $0x1f8] sm:$0xff]
    %v2917 = vld [vmem:[#allocation10 + $0x200] sm:$0xff]
    %v2918 = vld [vmem:[#allocation10 + $0x208] sm:$0xff]
    %v2919 = vld [vmem:[#allocation10 + $0x210] sm:$0xff]
    %v2920 = vld [vmem:[#allocation10 + $0x218] sm:$0xff]
    %v2921 = vld [vmem:[#allocation10 + $0x220] sm:$0xff]
    %v2922 = vld [vmem:[#allocation10 + $0x228] sm:$0xff]
    %v2923 = vld [vmem:[#allocation10 + $0x230] sm:$0xff]
    %v2924 = vld [vmem:[#allocation10 + $0x238] sm:$0xff]
    %v2925 = vld [vmem:[#allocation10 + $0x240] sm:$0xff]
    %v2926 = vld [vmem:[#allocation10 + $0x248] sm:$0xff]
    %v2927 = vld [vmem:[#allocation10 + $0x250] sm:$0xff]
    %v2928 = vld [vmem:[#allocation10 + $0x258] sm:$0xff]
    %v2929 = vld [vmem:[#allocation10 + $0x260] sm:$0xff]
    %v2930 = vld [vmem:[#allocation10 + $0x268] sm:$0xff]
    %v2931 = vld [vmem:[#allocation10 + $0x270] sm:$0xff]
    %v2932 = vld [vmem:[#allocation10 + $0x278] sm:$0xff]
    %v2933 = vld [vmem:[#allocation10 + $0x280] sm:$0xff]
    %v2934 = vld [vmem:[#allocation10 + $0x288] sm:$0xff]
    %v2935 = vld [vmem:[#allocation10 + $0x290] sm:$0xff]
    %v2936 = vld [vmem:[#allocation10 + $0x298] sm:$0xff]
    %v2937 = vld [vmem:[#allocation10 + $0x2a0] sm:$0xff]
    %v2938 = vld [vmem:[#allocation10 + $0x2a8] sm:$0xff]
    %v2939 = vld [vmem:[#allocation10 + $0x2b0] sm:$0xff]
    %v2940 = vld [vmem:[#allocation10 + $0x2b8] sm:$0xff]
    %v2941 = vld [vmem:[#allocation10 + $0x2c0] sm:$0xff]
    %v2942 = vld [vmem:[#allocation10 + $0x2c8] sm:$0xff]
    %v2943 = vld [vmem:[#allocation10 + $0x2d0] sm:$0xff]
    %v2944 = vld [vmem:[#allocation10 + $0x2d8] sm:$0xff]
    %v2945 = vld [vmem:[#allocation10 + $0x2e0] sm:$0xff]
    %v2946 = vld [vmem:[#allocation10 + $0x2e8] sm:$0xff]
    %v2947 = vld [vmem:[#allocation10 + $0x2f0] sm:$0xff]
    %v2948 = vld [vmem:[#allocation10 + $0x2f8] sm:$0xff]
    %v2949 = vld [vmem:[#allocation10 + $0x300] sm:$0xff]
    %v2950 = vld [vmem:[#allocation10 + $0x308] sm:$0xff]
    %v2951 = vld [vmem:[#allocation10 + $0x310] sm:$0xff]
    %v2952 = vld [vmem:[#allocation10 + $0x318] sm:$0xff]
    %v2953 = vld [vmem:[#allocation10 + $0x320] sm:$0xff]
    %v2954 = vld [vmem:[#allocation10 + $0x328] sm:$0xff]
    %v2955 = vld [vmem:[#allocation10 + $0x330] sm:$0xff]
    %v2956 = vld [vmem:[#allocation10 + $0x338] sm:$0xff]
    %v2957 = vld [vmem:[#allocation10 + $0x340] sm:$0xff]
    %v2958 = vld [vmem:[#allocation10 + $0x348] sm:$0xff]
    %v2959 = vld [vmem:[#allocation10 + $0x350] sm:$0xff]
    %v2960 = vld [vmem:[#allocation10 + $0x358] sm:$0xff]
    %v2961 = vld [vmem:[#allocation10 + $0x360] sm:$0xff]
    %v2962 = vld [vmem:[#allocation10 + $0x368] sm:$0xff]
    %v2963 = vld [vmem:[#allocation10 + $0x370] sm:$0xff]
    %v2964 = vld [vmem:[#allocation10 + $0x378] sm:$0xff]
    %v2965 = vld [vmem:[#allocation10 + $0x380] sm:$0xff]
    %v2966 = vld [vmem:[#allocation10 + $0x388] sm:$0xff]
    %v2967 = vld [vmem:[#allocation10 + $0x390] sm:$0xff]
    %v2968 = vld [vmem:[#allocation10 + $0x398] sm:$0xff]
    %v2969 = vld [vmem:[#allocation10 + $0x3a0] sm:$0xff]
    %v2970 = vld [vmem:[#allocation10 + $0x3a8] sm:$0xff]
    %v2971 = vld [vmem:[#allocation10 + $0x3b0] sm:$0xff]
    %v2972 = vld [vmem:[#allocation10 + $0x3b8] sm:$0xff]
    %v2973 = vld [vmem:[#allocation10 + $0x3c0] sm:$0xff]
    %v2974 = vld [vmem:[#allocation10 + $0x3c8] sm:$0xff]
    %v2975 = vld [vmem:[#allocation10 + $0x3d0] sm:$0xff]
    %v2976 = vld [vmem:[#allocation10 + $0x3d8] sm:$0xff]
    %v2977 = vld [vmem:[#allocation10 + $0x3e0] sm:$0xff]
    %v2978 = vld [vmem:[#allocation10 + $0x3e8] sm:$0xff]
    %v2979 = vld [vmem:[#allocation10 + $0x3f0] sm:$0xff]
    %v2980 = vld [vmem:[#allocation10 + $0x3f8] sm:$0xff]
    %v2981 = vld [vmem:[#allocation12] sm:$0xf]
    %v2983 = vperm.slane %v2981, 0
    %v2984 = vperm.slane %v2981, 1
    %v2985 = vperm.slane %v2981, 2
    %v2986 = vperm.slane %v2981, 3
    %v3119 = vunpack.c.l.b16 %v2853
    %v3120 = vunpack.c.h.b16 %v2853
    %v3121 = vunpack.c.l.b16 %v2854
    %v3122 = vunpack.c.h.b16 %v2854
    %v3123 = vunpack.c.l.b16 %v2855
    %v3124 = vunpack.c.h.b16 %v2855
    %v3125 = vunpack.c.l.b16 %v2856
    %v3126 = vunpack.c.h.b16 %v2856
    %v3127 = vunpack.c.l.b16 %v2857
    %v3128 = vunpack.c.h.b16 %v2857
    %v3129 = vunpack.c.l.b16 %v2858
    %v3130 = vunpack.c.h.b16 %v2858
    %v3131 = vunpack.c.l.b16 %v2859
    %v3132 = vunpack.c.h.b16 %v2859
    %v3133 = vunpack.c.l.b16 %v2860
    %v3134 = vunpack.c.h.b16 %v2860
    %v3135 = vunpack.c.l.b16 %v2861
    %v3136 = vunpack.c.h.b16 %v2861
    %v3137 = vunpack.c.l.b16 %v2862
    %v3138 = vunpack.c.h.b16 %v2862
    %v3139 = vunpack.c.l.b16 %v2863
    %v3140 = vunpack.c.h.b16 %v2863
    %v3141 = vunpack.c.l.b16 %v2864
    %v3142 = vunpack.c.h.b16 %v2864
    %v3143 = vunpack.c.l.b16 %v2865
    %v3144 = vunpack.c.h.b16 %v2865
    %v3145 = vunpack.c.l.b16 %v2866
    %v3146 = vunpack.c.h.b16 %v2866
    %v3147 = vunpack.c.l.b16 %v2867
    %v3148 = vunpack.c.h.b16 %v2867
    %v3149 = vunpack.c.l.b16 %v2868
    %v3150 = vunpack.c.h.b16 %v2868
    %v3151 = vunpack.c.l.b16 %v2869
    %v3152 = vunpack.c.h.b16 %v2869
    %v3153 = vunpack.c.l.b16 %v2870
    %v3154 = vunpack.c.h.b16 %v2870
    %v3155 = vunpack.c.l.b16 %v2871
    %v3156 = vunpack.c.h.b16 %v2871
    %v3157 = vunpack.c.l.b16 %v2872
    %v3158 = vunpack.c.h.b16 %v2872
    %v3159 = vunpack.c.l.b16 %v2873
    %v3160 = vunpack.c.h.b16 %v2873
    %v3161 = vunpack.c.l.b16 %v2874
    %v3162 = vunpack.c.h.b16 %v2874
    %v3163 = vunpack.c.l.b16 %v2875
    %v3164 = vunpack.c.h.b16 %v2875
    %v3165 = vunpack.c.l.b16 %v2876
    %v3166 = vunpack.c.h.b16 %v2876
    %v3167 = vunpack.c.l.b16 %v2877
    %v3168 = vunpack.c.h.b16 %v2877
    %v3169 = vunpack.c.l.b16 %v2878
    %v3170 = vunpack.c.h.b16 %v2878
    %v3171 = vunpack.c.l.b16 %v2879
    %v3172 = vunpack.c.h.b16 %v2879
    %v3173 = vunpack.c.l.b16 %v2880
    %v3174 = vunpack.c.h.b16 %v2880
    %v3175 = vunpack.c.l.b16 %v2881
    %v3176 = vunpack.c.h.b16 %v2881
    %v3177 = vunpack.c.l.b16 %v2882
    %v3178 = vunpack.c.h.b16 %v2882
    %v3179 = vunpack.c.l.b16 %v2883
    %v3180 = vunpack.c.h.b16 %v2883
    %v3181 = vunpack.c.l.b16 %v2884
    %v3182 = vunpack.c.h.b16 %v2884
    %v3183 = vunpack.c.l.b16 %v2885
    %v3184 = vunpack.c.h.b16 %v2885
    %v3185 = vunpack.c.l.b16 %v2886
    %v3186 = vunpack.c.h.b16 %v2886
    %v3187 = vunpack.c.l.b16 %v2887
    %v3188 = vunpack.c.h.b16 %v2887
    %v3189 = vunpack.c.l.b16 %v2888
    %v3190 = vunpack.c.h.b16 %v2888
    %v3191 = vunpack.c.l.b16 %v2889
    %v3192 = vunpack.c.h.b16 %v2889
    %v3193 = vunpack.c.l.b16 %v2890
    %v3194 = vunpack.c.h.b16 %v2890
    %v3195 = vunpack.c.l.b16 %v2891
    %v3196 = vunpack.c.h.b16 %v2891
    %v3197 = vunpack.c.l.b16 %v2892
    %v3198 = vunpack.c.h.b16 %v2892
    %v3199 = vunpack.c.l.b16 %v2893
    %v3200 = vunpack.c.h.b16 %v2893
    %v3201 = vunpack.c.l.b16 %v2894
    %v3202 = vunpack.c.h.b16 %v2894
    %v3203 = vunpack.c.l.b16 %v2895
    %v3204 = vunpack.c.h.b16 %v2895
    %v3205 = vunpack.c.l.b16 %v2896
    %v3206 = vunpack.c.h.b16 %v2896
    %v3207 = vunpack.c.l.b16 %v2897
    %v3208 = vunpack.c.h.b16 %v2897
    %v3209 = vunpack.c.l.b16 %v2898
    %v3210 = vunpack.c.h.b16 %v2898
    %v3211 = vunpack.c.l.b16 %v2899
    %v3212 = vunpack.c.h.b16 %v2899
    %v3213 = vunpack.c.l.b16 %v2900
    %v3214 = vunpack.c.h.b16 %v2900
    %v3215 = vunpack.c.l.b16 %v2901
    %v3216 = vunpack.c.h.b16 %v2901
    %v3217 = vunpack.c.l.b16 %v2902
    %v3218 = vunpack.c.h.b16 %v2902
    %v3219 = vunpack.c.l.b16 %v2903
    %v3220 = vunpack.c.h.b16 %v2903
    %v3221 = vunpack.c.l.b16 %v2904
    %v3222 = vunpack.c.h.b16 %v2904
    %v3223 = vunpack.c.l.b16 %v2905
    %v3224 = vunpack.c.h.b16 %v2905
    %v3225 = vunpack.c.l.b16 %v2906
    %v3226 = vunpack.c.h.b16 %v2906
    %v3227 = vunpack.c.l.b16 %v2907
    %v3228 = vunpack.c.h.b16 %v2907
    %v3229 = vunpack.c.l.b16 %v2908
    %v3230 = vunpack.c.h.b16 %v2908
    %v3231 = vunpack.c.l.b16 %v2909
    %v3232 = vunpack.c.h.b16 %v2909
    %v3233 = vunpack.c.l.b16 %v2910
    %v3234 = vunpack.c.h.b16 %v2910
    %v3235 = vunpack.c.l.b16 %v2911
    %v3236 = vunpack.c.h.b16 %v2911
    %v3237 = vunpack.c.l.b16 %v2912
    %v3238 = vunpack.c.h.b16 %v2912
    %v3239 = vunpack.c.l.b16 %v2913
    %v3240 = vunpack.c.h.b16 %v2913
    %v3241 = vunpack.c.l.b16 %v2914
    %v3242 = vunpack.c.h.b16 %v2914
    %v3243 = vunpack.c.l.b16 %v2915
    %v3244 = vunpack.c.h.b16 %v2915
    %v3245 = vunpack.c.l.b16 %v2916
    %v3246 = vunpack.c.h.b16 %v2916
    %v3247 = vunpack.c.l.b16 %v2917
    %v3248 = vunpack.c.h.b16 %v2917
    %v3249 = vunpack.c.l.b16 %v2918
    %v3250 = vunpack.c.h.b16 %v2918
    %v3251 = vunpack.c.l.b16 %v2919
    %v3252 = vunpack.c.h.b16 %v2919
    %v3253 = vunpack.c.l.b16 %v2920
    %v3254 = vunpack.c.h.b16 %v2920
    %v3255 = vunpack.c.l.b16 %v2921
    %v3256 = vunpack.c.h.b16 %v2921
    %v3257 = vunpack.c.l.b16 %v2922
    %v3258 = vunpack.c.h.b16 %v2922
    %v3259 = vunpack.c.l.b16 %v2923
    %v3260 = vunpack.c.h.b16 %v2923
    %v3261 = vunpack.c.l.b16 %v2924
    %v3262 = vunpack.c.h.b16 %v2924
    %v3263 = vunpack.c.l.b16 %v2925
    %v3264 = vunpack.c.h.b16 %v2925
    %v3265 = vunpack.c.l.b16 %v2926
    %v3266 = vunpack.c.h.b16 %v2926
    %v3267 = vunpack.c.l.b16 %v2927
    %v3268 = vunpack.c.h.b16 %v2927
    %v3269 = vunpack.c.l.b16 %v2928
    %v3270 = vunpack.c.h.b16 %v2928
    %v3271 = vunpack.c.l.b16 %v2929
    %v3272 = vunpack.c.h.b16 %v2929
    %v3273 = vunpack.c.l.b16 %v2930
    %v3274 = vunpack.c.h.b16 %v2930
    %v3275 = vunpack.c.l.b16 %v2931
    %v3276 = vunpack.c.h.b16 %v2931
    %v3277 = vunpack.c.l.b16 %v2932
    %v3278 = vunpack.c.h.b16 %v2932
    %v3279 = vunpack.c.l.b16 %v2933
    %v3280 = vunpack.c.h.b16 %v2933
    %v3281 = vunpack.c.l.b16 %v2934
    %v3282 = vunpack.c.h.b16 %v2934
    %v3283 = vunpack.c.l.b16 %v2935
    %v3284 = vunpack.c.h.b16 %v2935
    %v3285 = vunpack.c.l.b16 %v2936
    %v3286 = vunpack.c.h.b16 %v2936
    %v3287 = vunpack.c.l.b16 %v2937
    %v3288 = vunpack.c.h.b16 %v2937
    %v3289 = vunpack.c.l.b16 %v2938
    %v3290 = vunpack.c.h.b16 %v2938
    %v3291 = vunpack.c.l.b16 %v2939
    %v3292 = vunpack.c.h.b16 %v2939
    %v3293 = vunpack.c.l.b16 %v2940
    %v3294 = vunpack.c.h.b16 %v2940
    %v3295 = vunpack.c.l.b16 %v2941
    %v3296 = vunpack.c.h.b16 %v2941
    %v3297 = vunpack.c.l.b16 %v2942
    %v3298 = vunpack.c.h.b16 %v2942
    %v3299 = vunpack.c.l.b16 %v2943
    %v3300 = vunpack.c.h.b16 %v2943
    %v3301 = vunpack.c.l.b16 %v2944
    %v3302 = vunpack.c.h.b16 %v2944
    %v3303 = vunpack.c.l.b16 %v2945
    %v3304 = vunpack.c.h.b16 %v2945
    %v3305 = vunpack.c.l.b16 %v2946
    %v3306 = vunpack.c.h.b16 %v2946
    %v3307 = vunpack.c.l.b16 %v2947
    %v3308 = vunpack.c.h.b16 %v2947
    %v3309 = vunpack.c.l.b16 %v2948
    %v3310 = vunpack.c.h.b16 %v2948
    %v3311 = vunpack.c.l.b16 %v2949
    %v3312 = vunpack.c.h.b16 %v2949
    %v3313 = vunpack.c.l.b16 %v2950
    %v3314 = vunpack.c.h.b16 %v2950
    %v3315 = vunpack.c.l.b16 %v2951
    %v3316 = vunpack.c.h.b16 %v2951
    %v3317 = vunpack.c.l.b16 %v2952
    %v3318 = vunpack.c.h.b16 %v2952
    %v3319 = vunpack.c.l.b16 %v2953
    %v3320 = vunpack.c.h.b16 %v2953
    %v3321 = vunpack.c.l.b16 %v2954
    %v3322 = vunpack.c.h.b16 %v2954
    %v3323 = vunpack.c.l.b16 %v2955
    %v3324 = vunpack.c.h.b16 %v2955
    %v3325 = vunpack.c.l.b16 %v2956
    %v3326 = vunpack.c.h.b16 %v2956
    %v3327 = vunpack.c.l.b16 %v2957
    %v3328 = vunpack.c.h.b16 %v2957
    %v3329 = vunpack.c.l.b16 %v2958
    %v3330 = vunpack.c.h.b16 %v2958
    %v3331 = vunpack.c.l.b16 %v2959
    %v3332 = vunpack.c.h.b16 %v2959
    %v3333 = vunpack.c.l.b16 %v2960
    %v3334 = vunpack.c.h.b16 %v2960
    %v3335 = vunpack.c.l.b16 %v2961
    %v3336 = vunpack.c.h.b16 %v2961
    %v3337 = vunpack.c.l.b16 %v2962
    %v3338 = vunpack.c.h.b16 %v2962
    %v3339 = vunpack.c.l.b16 %v2963
    %v3340 = vunpack.c.h.b16 %v2963
    %v3341 = vunpack.c.l.b16 %v2964
    %v3342 = vunpack.c.h.b16 %v2964
    %v3343 = vunpack.c.l.b16 %v2965
    %v3344 = vunpack.c.h.b16 %v2965
    %v3345 = vunpack.c.l.b16 %v2966
    %v3346 = vunpack.c.h.b16 %v2966
    %v3347 = vunpack.c.l.b16 %v2967
    %v3348 = vunpack.c.h.b16 %v2967
    %v3349 = vunpack.c.l.b16 %v2968
    %v3350 = vunpack.c.h.b16 %v2968
    %v3351 = vunpack.c.l.b16 %v2969
    %v3352 = vunpack.c.h.b16 %v2969
    %v3353 = vunpack.c.l.b16 %v2970
    %v3354 = vunpack.c.h.b16 %v2970
    %v3355 = vunpack.c.l.b16 %v2971
    %v3356 = vunpack.c.h.b16 %v2971
    %v3357 = vunpack.c.l.b16 %v2972
    %v3358 = vunpack.c.h.b16 %v2972
    %v3359 = vunpack.c.l.b16 %v2973
    %v3360 = vunpack.c.h.b16 %v2973
    %v3361 = vunpack.c.l.b16 %v2974
    %v3362 = vunpack.c.h.b16 %v2974
    %v3363 = vunpack.c.l.b16 %v2975
    %v3364 = vunpack.c.h.b16 %v2975
    %v3365 = vunpack.c.l.b16 %v2976
    %v3366 = vunpack.c.h.b16 %v2976
    %v3367 = vunpack.c.l.b16 %v2977
    %v3368 = vunpack.c.h.b16 %v2977
    %v3369 = vunpack.c.l.b16 %v2978
    %v3370 = vunpack.c.h.b16 %v2978
    %v3371 = vunpack.c.l.b16 %v2979
    %v3372 = vunpack.c.h.b16 %v2979
    %v3373 = vunpack.c.l.b16 %v2980
    %v3374 = vunpack.c.h.b16 %v2980
    %v3375 = vpack.c.b16 %v3123, %v3119
    %v3376 = vpack.c.b16 %v3124, %v3120
    %v3377 = vpack.c.b16 %v3125, %v3121
    %v3378 = vpack.c.b16 %v3126, %v3122
    %v3379 = vpack.c.b16 %v3131, %v3127
    %v3380 = vpack.c.b16 %v3132, %v3128
    %v3381 = vpack.c.b16 %v3133, %v3129
    %v3382 = vpack.c.b16 %v3134, %v3130
    %v3383 = vpack.c.b16 %v3139, %v3135
    %v3384 = vpack.c.b16 %v3140, %v3136
    %v3385 = vpack.c.b16 %v3141, %v3137
    %v3386 = vpack.c.b16 %v3142, %v3138
    %v3387 = vpack.c.b16 %v3147, %v3143
    %v3388 = vpack.c.b16 %v3148, %v3144
    %v3389 = vpack.c.b16 %v3149, %v3145
    %v3390 = vpack.c.b16 %v3150, %v3146
    %v3391 = vpack.c.b16 %v3155, %v3151
    %v3392 = vpack.c.b16 %v3156, %v3152
    %v3393 = vpack.c.b16 %v3157, %v3153
    %v3394 = vpack.c.b16 %v3158, %v3154
    %v3395 = vpack.c.b16 %v3163, %v3159
    %v3396 = vpack.c.b16 %v3164, %v3160
    %v3397 = vpack.c.b16 %v3165, %v3161
    %v3398 = vpack.c.b16 %v3166, %v3162
    %v3399 = vpack.c.b16 %v3171, %v3167
    %v3400 = vpack.c.b16 %v3172, %v3168
    %v3401 = vpack.c.b16 %v3173, %v3169
    %v3402 = vpack.c.b16 %v3174, %v3170
    %v3403 = vpack.c.b16 %v3179, %v3175
    %v3404 = vpack.c.b16 %v3180, %v3176
    %v3405 = vpack.c.b16 %v3181, %v3177
    %v3406 = vpack.c.b16 %v3182, %v3178
    %v3407 = vpack.c.b16 %v3187, %v3183
    %v3408 = vpack.c.b16 %v3188, %v3184
    %v3409 = vpack.c.b16 %v3189, %v3185
    %v3410 = vpack.c.b16 %v3190, %v3186
    %v3411 = vpack.c.b16 %v3195, %v3191
    %v3412 = vpack.c.b16 %v3196, %v3192
    %v3413 = vpack.c.b16 %v3197, %v3193
    %v3414 = vpack.c.b16 %v3198, %v3194
    %v3415 = vpack.c.b16 %v3203, %v3199
    %v3416 = vpack.c.b16 %v3204, %v3200
    %v3417 = vpack.c.b16 %v3205, %v3201
    %v3418 = vpack.c.b16 %v3206, %v3202
    %v3419 = vpack.c.b16 %v3211, %v3207
    %v3420 = vpack.c.b16 %v3212, %v3208
    %v3421 = vpack.c.b16 %v3213, %v3209
    %v3422 = vpack.c.b16 %v3214, %v3210
    %v3423 = vpack.c.b16 %v3219, %v3215
    %v3424 = vpack.c.b16 %v3220, %v3216
    %v3425 = vpack.c.b16 %v3221, %v3217
    %v3426 = vpack.c.b16 %v3222, %v3218
    %v3427 = vpack.c.b16 %v3227, %v3223
    %v3428 = vpack.c.b16 %v3228, %v3224
    %v3429 = vpack.c.b16 %v3229, %v3225
    %v3430 = vpack.c.b16 %v3230, %v3226
    %v3431 = vpack.c.b16 %v3235, %v3231
    %v3432 = vpack.c.b16 %v3236, %v3232
    %v3433 = vpack.c.b16 %v3237, %v3233
    %v3434 = vpack.c.b16 %v3238, %v3234
    %v3435 = vpack.c.b16 %v3243, %v3239
    %v3436 = vpack.c.b16 %v3244, %v3240
    %v3437 = vpack.c.b16 %v3245, %v3241
    %v3438 = vpack.c.b16 %v3246, %v3242
    %v3439 = vpack.c.b16 %v3251, %v3247
    %v3440 = vpack.c.b16 %v3252, %v3248
    %v3441 = vpack.c.b16 %v3253, %v3249
    %v3442 = vpack.c.b16 %v3254, %v3250
    %v3443 = vpack.c.b16 %v3259, %v3255
    %v3444 = vpack.c.b16 %v3260, %v3256
    %v3445 = vpack.c.b16 %v3261, %v3257
    %v3446 = vpack.c.b16 %v3262, %v3258
    %v3447 = vpack.c.b16 %v3267, %v3263
    %v3448 = vpack.c.b16 %v3268, %v3264
    %v3449 = vpack.c.b16 %v3269, %v3265
    %v3450 = vpack.c.b16 %v3270, %v3266
    %v3451 = vpack.c.b16 %v3275, %v3271
    %v3452 = vpack.c.b16 %v3276, %v3272
    %v3453 = vpack.c.b16 %v3277, %v3273
    %v3454 = vpack.c.b16 %v3278, %v3274
    %v3455 = vpack.c.b16 %v3283, %v3279
    %v3456 = vpack.c.b16 %v3284, %v3280
    %v3457 = vpack.c.b16 %v3285, %v3281
    %v3458 = vpack.c.b16 %v3286, %v3282
    %v3459 = vpack.c.b16 %v3291, %v3287
    %v3460 = vpack.c.b16 %v3292, %v3288
    %v3461 = vpack.c.b16 %v3293, %v3289
    %v3462 = vpack.c.b16 %v3294, %v3290
    %v3463 = vpack.c.b16 %v3299, %v3295
    %v3464 = vpack.c.b16 %v3300, %v3296
    %v3465 = vpack.c.b16 %v3301, %v3297
    %v3466 = vpack.c.b16 %v3302, %v3298
    %v3467 = vpack.c.b16 %v3307, %v3303
    %v3468 = vpack.c.b16 %v3308, %v3304
    %v3469 = vpack.c.b16 %v3309, %v3305
    %v3470 = vpack.c.b16 %v3310, %v3306
    %v3471 = vpack.c.b16 %v3315, %v3311
    %v3472 = vpack.c.b16 %v3316, %v3312
    %v3473 = vpack.c.b16 %v3317, %v3313
    %v3474 = vpack.c.b16 %v3318, %v3314
    %v3475 = vpack.c.b16 %v3323, %v3319
    %v3476 = vpack.c.b16 %v3324, %v3320
    %v3477 = vpack.c.b16 %v3325, %v3321
    %v3478 = vpack.c.b16 %v3326, %v3322
    %v3479 = vpack.c.b16 %v3331, %v3327
    %v3480 = vpack.c.b16 %v3332, %v3328
    %v3481 = vpack.c.b16 %v3333, %v3329
    %v3482 = vpack.c.b16 %v3334, %v3330
    %v3483 = vpack.c.b16 %v3339, %v3335
    %v3484 = vpack.c.b16 %v3340, %v3336
    %v3485 = vpack.c.b16 %v3341, %v3337
    %v3486 = vpack.c.b16 %v3342, %v3338
    %v3487 = vpack.c.b16 %v3347, %v3343
    %v3488 = vpack.c.b16 %v3348, %v3344
    %v3489 = vpack.c.b16 %v3349, %v3345
    %v3490 = vpack.c.b16 %v3350, %v3346
    %v3491 = vpack.c.b16 %v3355, %v3351
    %v3492 = vpack.c.b16 %v3356, %v3352
    %v3493 = vpack.c.b16 %v3357, %v3353
    %v3494 = vpack.c.b16 %v3358, %v3354
    %v3495 = vpack.c.b16 %v3363, %v3359
    %v3496 = vpack.c.b16 %v3364, %v3360
    %v3497 = vpack.c.b16 %v3365, %v3361
    %v3498 = vpack.c.b16 %v3366, %v3362
    %v3499 = vpack.c.b16 %v3371, %v3367
    %v3500 = vpack.c.b16 %v3372, %v3368
    %v3501 = vpack.c.b16 %v3373, %v3369
    %v3502 = vpack.c.b16 %v3374, %v3370
    %3631 = vmatpush.bf16.msra.mxu0 %v3403
    %3632 = vmatpush.bf16.msra.mxu0 %v3399
    %3633 = vmatpush.bf16.msra.mxu0 %v3395
    %3634 = vmatpush.bf16.msra.mxu0 %v3391
    %3635 = vmatpush.bf16.msra.mxu0 %v3387
    %3636 = vmatpush.bf16.msra.mxu0 %v3383
    %3637 = vmatpush.bf16.msra.mxu0 %v3379
    %3638 = vmatpush.bf16.msra.mxu0 %v3375
    %3639 = vmatmul.bf16.gmra.mxu0 %v2849
    %v3640 = vpop.f32.mrf.mxu0
    %v3641 = vadd.f32 %v2983, %v3640
    %v3642 = vpop.f32.mrf.mxu0
    %3643 = vdwg.mxu0
    %3644 = vmatpush.bf16.msra.mxu0 %v3435
    %3645 = vmatpush.bf16.msra.mxu0 %v3431
    %3646 = vmatpush.bf16.msra.mxu0 %v3427
    %3647 = vmatpush.bf16.msra.mxu0 %v3423
    %3648 = vmatpush.bf16.msra.mxu0 %v3419
    %3649 = vmatpush.bf16.msra.mxu0 %v3415
    %3650 = vmatpush.bf16.msra.mxu0 %v3411
    %3651 = vmatpush.bf16.msra.mxu0 %v3407
    %3652 = vmatmul.bf16.gmra.mxu0 %v2850
    %v3653 = vpop.f32.mrf.mxu0
    %v3654 = vadd.f32 %v3641, %v3653
    %v3655 = vpop.f32.mrf.mxu0
    %3656 = vdwg.mxu0
    %3657 = vmatpush.bf16.msra.mxu0 %v3467
    %3658 = vmatpush.bf16.msra.mxu0 %v3463
    %3659 = vmatpush.bf16.msra.mxu0 %v3459
    %3660 = vmatpush.bf16.msra.mxu0 %v3455
    %3661 = vmatpush.bf16.msra.mxu0 %v3451
    %3662 = vmatpush.bf16.msra.mxu0 %v3447
    %3663 = vmatpush.bf16.msra.mxu0 %v3443
    %3664 = vmatpush.bf16.msra.mxu0 %v3439
    %3665 = vmatmul.bf16.gmra.mxu0 %v2851
    %v3666 = vpop.f32.mrf.mxu0
    %v3667 = vadd.f32 %v3654, %v3666
    %v3668 = vpop.f32.mrf.mxu0
    %3669 = vdwg.mxu0
    %3670 = vmatpush.bf16.msra.mxu0 %v3499
    %3671 = vmatpush.bf16.msra.mxu0 %v3495
    %3672 = vmatpush.bf16.msra.mxu0 %v3491
    %3673 = vmatpush.bf16.msra.mxu0 %v3487
    %3674 = vmatpush.bf16.msra.mxu0 %v3483
    %3675 = vmatpush.bf16.msra.mxu0 %v3479
    %3676 = vmatpush.bf16.msra.mxu0 %v3475
    %3677 = vmatpush.bf16.msra.mxu0 %v3471
    %3678 = vmatmul.bf16.gmra.mxu0 %v2852
    %v3679 = vpop.f32.mrf.mxu0
    %v3680 = vadd.f32 %v3667, %v3679
    %v3681 = vpop.f32.mrf.mxu0
    %3682 = vdwg.mxu0
    %3683 = vmatpush.bf16.msra.mxu0 %v3404
    %3684 = vmatpush.bf16.msra.mxu0 %v3400
    %3685 = vmatpush.bf16.msra.mxu0 %v3396
    %3686 = vmatpush.bf16.msra.mxu0 %v3392
    %3687 = vmatpush.bf16.msra.mxu0 %v3388
    %3688 = vmatpush.bf16.msra.mxu0 %v3384
    %3689 = vmatpush.bf16.msra.mxu0 %v3380
    %3690 = vmatpush.bf16.msra.mxu0 %v3376
    %3691 = vmatmul.bf16.gmra.mxu0 %v2849
    %v3692 = vpop.f32.mrf.mxu0
    %v3693 = vadd.f32 %v2984, %v3692
    %v3694 = vpop.f32.mrf.mxu0
    %3695 = vdwg.mxu0
    %3696 = vmatpush.bf16.msra.mxu0 %v3436
    %3697 = vmatpush.bf16.msra.mxu0 %v3432
    %3698 = vmatpush.bf16.msra.mxu0 %v3428
    %3699 = vmatpush.bf16.msra.mxu0 %v3424
    %3700 = vmatpush.bf16.msra.mxu0 %v3420
    %3701 = vmatpush.bf16.msra.mxu0 %v3416
    %3702 = vmatpush.bf16.msra.mxu0 %v3412
    %3703 = vmatpush.bf16.msra.mxu0 %v3408
    %3704 = vmatmul.bf16.gmra.mxu0 %v2850
    %v3705 = vpop.f32.mrf.mxu0
    %v3706 = vadd.f32 %v3693, %v3705
    %v3707 = vpop.f32.mrf.mxu0
    %3708 = vdwg.mxu0
    %3709 = vmatpush.bf16.msra.mxu0 %v3468
    %3710 = vmatpush.bf16.msra.mxu0 %v3464
    %3711 = vmatpush.bf16.msra.mxu0 %v3460
    %3712 = vmatpush.bf16.msra.mxu0 %v3456
    %3713 = vmatpush.bf16.msra.mxu0 %v3452
    %3714 = vmatpush.bf16.msra.mxu0 %v3448
    %3715 = vmatpush.bf16.msra.mxu0 %v3444
    %3716 = vmatpush.bf16.msra.mxu0 %v3440
    %3717 = vmatmul.bf16.gmra.mxu0 %v2851
    %v3718 = vpop.f32.mrf.mxu0
    %v3719 = vadd.f32 %v3706, %v3718
    %v3720 = vpop.f32.mrf.mxu0
    %3721 = vdwg.mxu0
    %3722 = vmatpush.bf16.msra.mxu0 %v3500
    %3723 = vmatpush.bf16.msra.mxu0 %v3496
    %3724 = vmatpush.bf16.msra.mxu0 %v3492
    %3725 = vmatpush.bf16.msra.mxu0 %v3488
    %3726 = vmatpush.bf16.msra.mxu0 %v3484
    %3727 = vmatpush.bf16.msra.mxu0 %v3480
    %3728 = vmatpush.bf16.msra.mxu0 %v3476
    %3729 = vmatpush.bf16.msra.mxu0 %v3472
    %3730 = vmatmul.bf16.gmra.mxu0 %v2852
    %v3731 = vpop.f32.mrf.mxu0
    %v3732 = vadd.f32 %v3719, %v3731
    %v3733 = vpop.f32.mrf.mxu0
    %3734 = vdwg.mxu0
    %3735 = vmatpush.bf16.msra.mxu0 %v3405
    %3736 = vmatpush.bf16.msra.mxu0 %v3401
    %3737 = vmatpush.bf16.msra.mxu0 %v3397
    %3738 = vmatpush.bf16.msra.mxu0 %v3393
    %3739 = vmatpush.bf16.msra.mxu0 %v3389
    %3740 = vmatpush.bf16.msra.mxu0 %v3385
    %3741 = vmatpush.bf16.msra.mxu0 %v3381
    %3742 = vmatpush.bf16.msra.mxu0 %v3377
    %3743 = vmatmul.bf16.gmra.mxu0 %v2849
    %v3744 = vpop.f32.mrf.mxu0
    %v3745 = vadd.f32 %v2985, %v3744
    %v3746 = vpop.f32.mrf.mxu0
    %3747 = vdwg.mxu0
    %3748 = vmatpush.bf16.msra.mxu0 %v3437
    %3749 = vmatpush.bf16.msra.mxu0 %v3433
    %3750 = vmatpush.bf16.msra.mxu0 %v3429
    %3751 = vmatpush.bf16.msra.mxu0 %v3425
    %3752 = vmatpush.bf16.msra.mxu0 %v3421
    %3753 = vmatpush.bf16.msra.mxu0 %v3417
    %3754 = vmatpush.bf16.msra.mxu0 %v3413
    %3755 = vmatpush.bf16.msra.mxu0 %v3409
    %3756 = vmatmul.bf16.gmra.mxu0 %v2850
    %v3757 = vpop.f32.mrf.mxu0
    %v3758 = vadd.f32 %v3745, %v3757
    %v3759 = vpop.f32.mrf.mxu0
    %3760 = vdwg.mxu0
    %3761 = vmatpush.bf16.msra.mxu0 %v3469
    %3762 = vmatpush.bf16.msra.mxu0 %v3465
    %3763 = vmatpush.bf16.msra.mxu0 %v3461
    %3764 = vmatpush.bf16.msra.mxu0 %v3457
    %3765 = vmatpush.bf16.msra.mxu0 %v3453
    %3766 = vmatpush.bf16.msra.mxu0 %v3449
    %3767 = vmatpush.bf16.msra.mxu0 %v3445
    %3768 = vmatpush.bf16.msra.mxu0 %v3441
    %3769 = vmatmul.bf16.gmra.mxu0 %v2851
    %v3770 = vpop.f32.mrf.mxu0
    %v3771 = vadd.f32 %v3758, %v3770
    %v3772 = vpop.f32.mrf.mxu0
    %3773 = vdwg.mxu0
    %3774 = vmatpush.bf16.msra.mxu0 %v3501
    %3775 = vmatpush.bf16.msra.mxu0 %v3497
    %3776 = vmatpush.bf16.msra.mxu0 %v3493
    %3777 = vmatpush.bf16.msra.mxu0 %v3489
    %3778 = vmatpush.bf16.msra.mxu0 %v3485
    %3779 = vmatpush.bf16.msra.mxu0 %v3481
    %3780 = vmatpush.bf16.msra.mxu0 %v3477
    %3781 = vmatpush.bf16.msra.mxu0 %v3473
    %3782 = vmatmul.bf16.gmra.mxu0 %v2852
    %v3783 = vpop.f32.mrf.mxu0
    %v3784 = vadd.f32 %v3771, %v3783
    %v3785 = vpop.f32.mrf.mxu0
    %3786 = vdwg.mxu0
    %3787 = vmatpush.bf16.msra.mxu0 %v3406
    %3788 = vmatpush.bf16.msra.mxu0 %v3402
    %3789 = vmatpush.bf16.msra.mxu0 %v3398
    %3790 = vmatpush.bf16.msra.mxu0 %v3394
    %3791 = vmatpush.bf16.msra.mxu0 %v3390
    %3792 = vmatpush.bf16.msra.mxu0 %v3386
    %3793 = vmatpush.bf16.msra.mxu0 %v3382
    %3794 = vmatpush.bf16.msra.mxu0 %v3378
    %3795 = vmatmul.bf16.gmra.mxu0 %v2849
    %v3796 = vpop.f32.mrf.mxu0
    %v3797 = vadd.f32 %v2986, %v3796
    %v3798 = vpop.f32.mrf.mxu0
    %3799 = vdwg.mxu0
    %3800 = vmatpush.bf16.msra.mxu0 %v3438
    %3801 = vmatpush.bf16.msra.mxu0 %v3434
    %3802 = vmatpush.bf16.msra.mxu0 %v3430
    %3803 = vmatpush.bf16.msra.mxu0 %v3426
    %3804 = vmatpush.bf16.msra.mxu0 %v3422
    %3805 = vmatpush.bf16.msra.mxu0 %v3418
    %3806 = vmatpush.bf16.msra.mxu0 %v3414
    %3807 = vmatpush.bf16.msra.mxu0 %v3410
    %3808 = vmatmul.bf16.gmra.mxu0 %v2850
    %v3809 = vpop.f32.mrf.mxu0
    %v3810 = vadd.f32 %v3797, %v3809
    %v3811 = vpop.f32.mrf.mxu0
    %3812 = vdwg.mxu0
    %3813 = vmatpush.bf16.msra.mxu0 %v3470
    %3814 = vmatpush.bf16.msra.mxu0 %v3466
    %3815 = vmatpush.bf16.msra.mxu0 %v3462
    %3816 = vmatpush.bf16.msra.mxu0 %v3458
    %3817 = vmatpush.bf16.msra.mxu0 %v3454
    %3818 = vmatpush.bf16.msra.mxu0 %v3450
    %3819 = vmatpush.bf16.msra.mxu0 %v3446
    %3820 = vmatpush.bf16.msra.mxu0 %v3442
    %3821 = vmatmul.bf16.gmra.mxu0 %v2851
    %v3822 = vpop.f32.mrf.mxu0
    %v3823 = vadd.f32 %v3810, %v3822
    %v3824 = vpop.f32.mrf.mxu0
    %3825 = vdwg.mxu0
    %3826 = vmatpush.bf16.msra.mxu0 %v3502
    %3827 = vmatpush.bf16.msra.mxu0 %v3498
    %3828 = vmatpush.bf16.msra.mxu0 %v3494
    %3829 = vmatpush.bf16.msra.mxu0 %v3490
    %3830 = vmatpush.bf16.msra.mxu0 %v3486
    %3831 = vmatpush.bf16.msra.mxu0 %v3482
    %3832 = vmatpush.bf16.msra.mxu0 %v3478
    %3833 = vmatpush.bf16.msra.mxu0 %v3474
    %3834 = vmatmul.bf16.gmra.mxu0 %v2852
    %v3835 = vpop.f32.mrf.mxu0
    %v3836 = vadd.f32 %v3823, %v3835
    %v3837 = vpop.f32.mrf.mxu0
    %3838 = vdwg.mxu0
    %v3839 = vmax.f32 %v3680, 0.0
    %v3840 = vmax.f32 %v3732, 0.0
    %v3841 = vmax.f32 %v3784, 0.0
    %v3842 = vmax.f32 %v3836, 0.0
    %v3843 = vpack.c.bf16 %v3839, %v3839
    %v3844 = vpack.c.bf16 %v3840, %v3840
    %v3845 = vpack.c.bf16 %v3841, %v3841
    %v3846 = vpack.c.bf16 %v3842, %v3842
    %v3847 = vld [vmem:[#allocation13] sm:$0xff]
    %v3848 = vld [vmem:[#allocation13 + $0x8] sm:$0xff]
    %v3849 = vld [vmem:[#allocation13 + $0x10] sm:$0xff]
    %v3850 = vld [vmem:[#allocation13 + $0x18] sm:$0xff]
    %v3851 = vld [vmem:[#allocation13 + $0x20] sm:$0xff]
    %v3852 = vld [vmem:[#allocation13 + $0x28] sm:$0xff]
    %v3853 = vld [vmem:[#allocation13 + $0x30] sm:$0xff]
    %v3854 = vld [vmem:[#allocation13 + $0x38] sm:$0xff]
    %v3855 = vld [vmem:[#allocation13 + $0x40] sm:$0xff]
    %v3856 = vld [vmem:[#allocation13 + $0x48] sm:$0xff]
    %v3857 = vld [vmem:[#allocation13 + $0x50] sm:$0xff]
    %v3858 = vld [vmem:[#allocation13 + $0x58] sm:$0xff]
    %v3859 = vld [vmem:[#allocation13 + $0x60] sm:$0xff]
    %v3860 = vld [vmem:[#allocation13 + $0x68] sm:$0xff]
    %v3861 = vld [vmem:[#allocation13 + $0x70] sm:$0xff]
    %v3862 = vld [vmem:[#allocation13 + $0x78] sm:$0xff]
    %v3863 = vld [vmem:[#allocation13 + $0x80] sm:$0xff]
    %v3864 = vld [vmem:[#allocation13 + $0x88] sm:$0xff]
    %v3865 = vld [vmem:[#allocation13 + $0x90] sm:$0xff]
    %v3866 = vld [vmem:[#allocation13 + $0x98] sm:$0xff]
    %v3867 = vld [vmem:[#allocation13 + $0xa0] sm:$0xff]
    %v3868 = vld [vmem:[#allocation13 + $0xa8] sm:$0xff]
    %v3869 = vld [vmem:[#allocation13 + $0xb0] sm:$0xff]
    %v3870 = vld [vmem:[#allocation13 + $0xb8] sm:$0xff]
    %v3871 = vld [vmem:[#allocation13 + $0xc0] sm:$0xff]
    %v3872 = vld [vmem:[#allocation13 + $0xc8] sm:$0xff]
    %v3873 = vld [vmem:[#allocation13 + $0xd0] sm:$0xff]
    %v3874 = vld [vmem:[#allocation13 + $0xd8] sm:$0xff]
    %v3875 = vld [vmem:[#allocation13 + $0xe0] sm:$0xff]
    %v3876 = vld [vmem:[#allocation13 + $0xe8] sm:$0xff]
    %v3877 = vld [vmem:[#allocation13 + $0xf0] sm:$0xff]
    %v3878 = vld [vmem:[#allocation13 + $0xf8] sm:$0xff]
    %v3879 = vld [vmem:[#allocation13 + $0x100] sm:$0xff]
    %v3880 = vld [vmem:[#allocation13 + $0x108] sm:$0xff]
    %v3881 = vld [vmem:[#allocation13 + $0x110] sm:$0xff]
    %v3882 = vld [vmem:[#allocation13 + $0x118] sm:$0xff]
    %v3883 = vld [vmem:[#allocation13 + $0x120] sm:$0xff]
    %v3884 = vld [vmem:[#allocation13 + $0x128] sm:$0xff]
    %v3885 = vld [vmem:[#allocation13 + $0x130] sm:$0xff]
    %v3886 = vld [vmem:[#allocation13 + $0x138] sm:$0xff]
    %v3887 = vld [vmem:[#allocation13 + $0x140] sm:$0xff]
    %v3888 = vld [vmem:[#allocation13 + $0x148] sm:$0xff]
    %v3889 = vld [vmem:[#allocation13 + $0x150] sm:$0xff]
    %v3890 = vld [vmem:[#allocation13 + $0x158] sm:$0xff]
    %v3891 = vld [vmem:[#allocation13 + $0x160] sm:$0xff]
    %v3892 = vld [vmem:[#allocation13 + $0x168] sm:$0xff]
    %v3893 = vld [vmem:[#allocation13 + $0x170] sm:$0xff]
    %v3894 = vld [vmem:[#allocation13 + $0x178] sm:$0xff]
    %v3895 = vld [vmem:[#allocation13 + $0x180] sm:$0xff]
    %v3896 = vld [vmem:[#allocation13 + $0x188] sm:$0xff]
    %v3897 = vld [vmem:[#allocation13 + $0x190] sm:$0xff]
    %v3898 = vld [vmem:[#allocation13 + $0x198] sm:$0xff]
    %v3899 = vld [vmem:[#allocation13 + $0x1a0] sm:$0xff]
    %v3900 = vld [vmem:[#allocation13 + $0x1a8] sm:$0xff]
    %v3901 = vld [vmem:[#allocation13 + $0x1b0] sm:$0xff]
    %v3902 = vld [vmem:[#allocation13 + $0x1b8] sm:$0xff]
    %v3903 = vld [vmem:[#allocation13 + $0x1c0] sm:$0xff]
    %v3904 = vld [vmem:[#allocation13 + $0x1c8] sm:$0xff]
    %v3905 = vld [vmem:[#allocation13 + $0x1d0] sm:$0xff]
    %v3906 = vld [vmem:[#allocation13 + $0x1d8] sm:$0xff]
    %v3907 = vld [vmem:[#allocation13 + $0x1e0] sm:$0xff]
    %v3908 = vld [vmem:[#allocation13 + $0x1e8] sm:$0xff]
    %v3909 = vld [vmem:[#allocation13 + $0x1f0] sm:$0xff]
    %v3910 = vld [vmem:[#allocation13 + $0x1f8] sm:$0xff]
    %v3911 = vld [vmem:[#allocation15] sm:$0x3]
    %v3913 = vperm.slane %v3911, 0
    %v3914 = vperm.slane %v3911, 1
    %v3981 = vunpack.c.l.b16 %v3847
    %v3982 = vunpack.c.h.b16 %v3847
    %v3983 = vunpack.c.l.b16 %v3848
    %v3984 = vunpack.c.h.b16 %v3848
    %v3985 = vunpack.c.l.b16 %v3849
    %v3986 = vunpack.c.h.b16 %v3849
    %v3987 = vunpack.c.l.b16 %v3850
    %v3988 = vunpack.c.h.b16 %v3850
    %v3989 = vunpack.c.l.b16 %v3851
    %v3990 = vunpack.c.h.b16 %v3851
    %v3991 = vunpack.c.l.b16 %v3852
    %v3992 = vunpack.c.h.b16 %v3852
    %v3993 = vunpack.c.l.b16 %v3853
    %v3994 = vunpack.c.h.b16 %v3853
    %v3995 = vunpack.c.l.b16 %v3854
    %v3996 = vunpack.c.h.b16 %v3854
    %v3997 = vunpack.c.l.b16 %v3855
    %v3998 = vunpack.c.h.b16 %v3855
    %v3999 = vunpack.c.l.b16 %v3856
    %v4000 = vunpack.c.h.b16 %v3856
    %v4001 = vunpack.c.l.b16 %v3857
    %v4002 = vunpack.c.h.b16 %v3857
    %v4003 = vunpack.c.l.b16 %v3858
    %v4004 = vunpack.c.h.b16 %v3858
    %v4005 = vunpack.c.l.b16 %v3859
    %v4006 = vunpack.c.h.b16 %v3859
    %v4007 = vunpack.c.l.b16 %v3860
    %v4008 = vunpack.c.h.b16 %v3860
    %v4009 = vunpack.c.l.b16 %v3861
    %v4010 = vunpack.c.h.b16 %v3861
    %v4011 = vunpack.c.l.b16 %v3862
    %v4012 = vunpack.c.h.b16 %v3862
    %v4013 = vunpack.c.l.b16 %v3863
    %v4014 = vunpack.c.h.b16 %v3863
    %v4015 = vunpack.c.l.b16 %v3864
    %v4016 = vunpack.c.h.b16 %v3864
    %v4017 = vunpack.c.l.b16 %v3865
    %v4018 = vunpack.c.h.b16 %v3865
    %v4019 = vunpack.c.l.b16 %v3866
    %v4020 = vunpack.c.h.b16 %v3866
    %v4021 = vunpack.c.l.b16 %v3867
    %v4022 = vunpack.c.h.b16 %v3867
    %v4023 = vunpack.c.l.b16 %v3868
    %v4024 = vunpack.c.h.b16 %v3868
    %v4025 = vunpack.c.l.b16 %v3869
    %v4026 = vunpack.c.h.b16 %v3869
    %v4027 = vunpack.c.l.b16 %v3870
    %v4028 = vunpack.c.h.b16 %v3870
    %v4029 = vunpack.c.l.b16 %v3871
    %v4030 = vunpack.c.h.b16 %v3871
    %v4031 = vunpack.c.l.b16 %v3872
    %v4032 = vunpack.c.h.b16 %v3872
    %v4033 = vunpack.c.l.b16 %v3873
    %v4034 = vunpack.c.h.b16 %v3873
    %v4035 = vunpack.c.l.b16 %v3874
    %v4036 = vunpack.c.h.b16 %v3874
    %v4037 = vunpack.c.l.b16 %v3875
    %v4038 = vunpack.c.h.b16 %v3875
    %v4039 = vunpack.c.l.b16 %v3876
    %v4040 = vunpack.c.h.b16 %v3876
    %v4041 = vunpack.c.l.b16 %v3877
    %v4042 = vunpack.c.h.b16 %v3877
    %v4043 = vunpack.c.l.b16 %v3878
    %v4044 = vunpack.c.h.b16 %v3878
    %v4045 = vunpack.c.l.b16 %v3879
    %v4046 = vunpack.c.h.b16 %v3879
    %v4047 = vunpack.c.l.b16 %v3880
    %v4048 = vunpack.c.h.b16 %v3880
    %v4049 = vunpack.c.l.b16 %v3881
    %v4050 = vunpack.c.h.b16 %v3881
    %v4051 = vunpack.c.l.b16 %v3882
    %v4052 = vunpack.c.h.b16 %v3882
    %v4053 = vunpack.c.l.b16 %v3883
    %v4054 = vunpack.c.h.b16 %v3883
    %v4055 = vunpack.c.l.b16 %v3884
    %v4056 = vunpack.c.h.b16 %v3884
    %v4057 = vunpack.c.l.b16 %v3885
    %v4058 = vunpack.c.h.b16 %v3885
    %v4059 = vunpack.c.l.b16 %v3886
    %v4060 = vunpack.c.h.b16 %v3886
    %v4061 = vunpack.c.l.b16 %v3887
    %v4062 = vunpack.c.h.b16 %v3887
    %v4063 = vunpack.c.l.b16 %v3888
    %v4064 = vunpack.c.h.b16 %v3888
    %v4065 = vunpack.c.l.b16 %v3889
    %v4066 = vunpack.c.h.b16 %v3889
    %v4067 = vunpack.c.l.b16 %v3890
    %v4068 = vunpack.c.h.b16 %v3890
    %v4069 = vunpack.c.l.b16 %v3891
    %v4070 = vunpack.c.h.b16 %v3891
    %v4071 = vunpack.c.l.b16 %v3892
    %v4072 = vunpack.c.h.b16 %v3892
    %v4073 = vunpack.c.l.b16 %v3893
    %v4074 = vunpack.c.h.b16 %v3893
    %v4075 = vunpack.c.l.b16 %v3894
    %v4076 = vunpack.c.h.b16 %v3894
    %v4077 = vunpack.c.l.b16 %v3895
    %v4078 = vunpack.c.h.b16 %v3895
    %v4079 = vunpack.c.l.b16 %v3896
    %v4080 = vunpack.c.h.b16 %v3896
    %v4081 = vunpack.c.l.b16 %v3897
    %v4082 = vunpack.c.h.b16 %v3897
    %v4083 = vunpack.c.l.b16 %v3898
    %v4084 = vunpack.c.h.b16 %v3898
    %v4085 = vunpack.c.l.b16 %v3899
    %v4086 = vunpack.c.h.b16 %v3899
    %v4087 = vunpack.c.l.b16 %v3900
    %v4088 = vunpack.c.h.b16 %v3900
    %v4089 = vunpack.c.l.b16 %v3901
    %v4090 = vunpack.c.h.b16 %v3901
    %v4091 = vunpack.c.l.b16 %v3902
    %v4092 = vunpack.c.h.b16 %v3902
    %v4093 = vunpack.c.l.b16 %v3903
    %v4094 = vunpack.c.h.b16 %v3903
    %v4095 = vunpack.c.l.b16 %v3904
    %v4096 = vunpack.c.h.b16 %v3904
    %v4097 = vunpack.c.l.b16 %v3905
    %v4098 = vunpack.c.h.b16 %v3905
    %v4099 = vunpack.c.l.b16 %v3906
    %v4100 = vunpack.c.h.b16 %v3906
    %v4101 = vunpack.c.l.b16 %v3907
    %v4102 = vunpack.c.h.b16 %v3907
    %v4103 = vunpack.c.l.b16 %v3908
    %v4104 = vunpack.c.h.b16 %v3908
    %v4105 = vunpack.c.l.b16 %v3909
    %v4106 = vunpack.c.h.b16 %v3909
    %v4107 = vunpack.c.l.b16 %v3910
    %v4108 = vunpack.c.h.b16 %v3910
    %v4109 = vpack.c.b16 %v3983, %v3981
    %v4110 = vpack.c.b16 %v3984, %v3982
    %v4111 = vpack.c.b16 %v3987, %v3985
    %v4112 = vpack.c.b16 %v3988, %v3986
    %v4113 = vpack.c.b16 %v3991, %v3989
    %v4114 = vpack.c.b16 %v3992, %v3990
    %v4115 = vpack.c.b16 %v3995, %v3993
    %v4116 = vpack.c.b16 %v3996, %v3994
    %v4117 = vpack.c.b16 %v3999, %v3997
    %v4118 = vpack.c.b16 %v4000, %v3998
    %v4119 = vpack.c.b16 %v4003, %v4001
    %v4120 = vpack.c.b16 %v4004, %v4002
    %v4121 = vpack.c.b16 %v4007, %v4005
    %v4122 = vpack.c.b16 %v4008, %v4006
    %v4123 = vpack.c.b16 %v4011, %v4009
    %v4124 = vpack.c.b16 %v4012, %v4010
    %v4125 = vpack.c.b16 %v4015, %v4013
    %v4126 = vpack.c.b16 %v4016, %v4014
    %v4127 = vpack.c.b16 %v4019, %v4017
    %v4128 = vpack.c.b16 %v4020, %v4018
    %v4129 = vpack.c.b16 %v4023, %v4021
    %v4130 = vpack.c.b16 %v4024, %v4022
    %v4131 = vpack.c.b16 %v4027, %v4025
    %v4132 = vpack.c.b16 %v4028, %v4026
    %v4133 = vpack.c.b16 %v4031, %v4029
    %v4134 = vpack.c.b16 %v4032, %v4030
    %v4135 = vpack.c.b16 %v4035, %v4033
    %v4136 = vpack.c.b16 %v4036, %v4034
    %v4137 = vpack.c.b16 %v4039, %v4037
    %v4138 = vpack.c.b16 %v4040, %v4038
    %v4139 = vpack.c.b16 %v4043, %v4041
    %v4140 = vpack.c.b16 %v4044, %v4042
    %v4141 = vpack.c.b16 %v4047, %v4045
    %v4142 = vpack.c.b16 %v4048, %v4046
    %v4143 = vpack.c.b16 %v4051, %v4049
    %v4144 = vpack.c.b16 %v4052, %v4050
    %v4145 = vpack.c.b16 %v4055, %v4053
    %v4146 = vpack.c.b16 %v4056, %v4054
    %v4147 = vpack.c.b16 %v4059, %v4057
    %v4148 = vpack.c.b16 %v4060, %v4058
    %v4149 = vpack.c.b16 %v4063, %v4061
    %v4150 = vpack.c.b16 %v4064, %v4062
    %v4151 = vpack.c.b16 %v4067, %v4065
    %v4152 = vpack.c.b16 %v4068, %v4066
    %v4153 = vpack.c.b16 %v4071, %v4069
    %v4154 = vpack.c.b16 %v4072, %v4070
    %v4155 = vpack.c.b16 %v4075, %v4073
    %v4156 = vpack.c.b16 %v4076, %v4074
    %v4157 = vpack.c.b16 %v4079, %v4077
    %v4158 = vpack.c.b16 %v4080, %v4078
    %v4159 = vpack.c.b16 %v4083, %v4081
    %v4160 = vpack.c.b16 %v4084, %v4082
    %v4161 = vpack.c.b16 %v4087, %v4085
    %v4162 = vpack.c.b16 %v4088, %v4086
    %v4163 = vpack.c.b16 %v4091, %v4089
    %v4164 = vpack.c.b16 %v4092, %v4090
    %v4165 = vpack.c.b16 %v4095, %v4093
    %v4166 = vpack.c.b16 %v4096, %v4094
    %v4167 = vpack.c.b16 %v4099, %v4097
    %v4168 = vpack.c.b16 %v4100, %v4098
    %v4169 = vpack.c.b16 %v4103, %v4101
    %v4170 = vpack.c.b16 %v4104, %v4102
    %v4171 = vpack.c.b16 %v4107, %v4105
    %v4172 = vpack.c.b16 %v4108, %v4106
    %4237 = vmatpush.bf16.msra.mxu0 %v4123
    %4238 = vmatpush.bf16.msra.mxu0 %v4121
    %4239 = vmatpush.bf16.msra.mxu0 %v4119
    %4240 = vmatpush.bf16.msra.mxu0 %v4117
    %4241 = vmatpush.bf16.msra.mxu0 %v4115
    %4242 = vmatpush.bf16.msra.mxu0 %v4113
    %4243 = vmatpush.bf16.msra.mxu0 %v4111
    %4244 = vmatpush.bf16.msra.mxu0 %v4109
    %4245 = vmatmul.bf16.gmra.mxu0 %v3843
    %v4246 = vpop.f32.mrf.mxu0
    %v4247 = vadd.f32 %v3913, %v4246
    %v4248 = vpop.f32.mrf.mxu0
    %4249 = vdwg.mxu0
    %4250 = vmatpush.bf16.msra.mxu0 %v4139
    %4251 = vmatpush.bf16.msra.mxu0 %v4137
    %4252 = vmatpush.bf16.msra.mxu0 %v4135
    %4253 = vmatpush.bf16.msra.mxu0 %v4133
    %4254 = vmatpush.bf16.msra.mxu0 %v4131
    %4255 = vmatpush.bf16.msra.mxu0 %v4129
    %4256 = vmatpush.bf16.msra.mxu0 %v4127
    %4257 = vmatpush.bf16.msra.mxu0 %v4125
    %4258 = vmatmul.bf16.gmra.mxu0 %v3844
    %v4259 = vpop.f32.mrf.mxu0
    %v4260 = vadd.f32 %v4247, %v4259
    %v4261 = vpop.f32.mrf.mxu0
    %4262 = vdwg.mxu0
    %4263 = vmatpush.bf16.msra.mxu0 %v4155
    %4264 = vmatpush.bf16.msra.mxu0 %v4153
    %4265 = vmatpush.bf16.msra.mxu0 %v4151
    %4266 = vmatpush.bf16.msra.mxu0 %v4149
    %4267 = vmatpush.bf16.msra.mxu0 %v4147
    %4268 = vmatpush.bf16.msra.mxu0 %v4145
    %4269 = vmatpush.bf16.msra.mxu0 %v4143
    %4270 = vmatpush.bf16.msra.mxu0 %v4141
    %4271 = vmatmul.bf16.gmra.mxu0 %v3845
    %v4272 = vpop.f32.mrf.mxu0
    %v4273 = vadd.f32 %v4260, %v4272
    %v4274 = vpop.f32.mrf.mxu0
    %4275 = vdwg.mxu0
    %4276 = vmatpush.bf16.msra.mxu0 %v4171
    %4277 = vmatpush.bf16.msra.mxu0 %v4169
    %4278 = vmatpush.bf16.msra.mxu0 %v4167
    %4279 = vmatpush.bf16.msra.mxu0 %v4165
    %4280 = vmatpush.bf16.msra.mxu0 %v4163
    %4281 = vmatpush.bf16.msra.mxu0 %v4161
    %4282 = vmatpush.bf16.msra.mxu0 %v4159
    %4283 = vmatpush.bf16.msra.mxu0 %v4157
    %4284 = vmatmul.bf16.gmra.mxu0 %v3846
    %v4285 = vpop.f32.mrf.mxu0
    %v4286 = vadd.f32 %v4273, %v4285
    %v4287 = vpop.f32.mrf.mxu0
    %4288 = vdwg.mxu0
    %4289 = vmatpush.bf16.msra.mxu0 %v4124
    %4290 = vmatpush.bf16.msra.mxu0 %v4122
    %4291 = vmatpush.bf16.msra.mxu0 %v4120
    %4292 = vmatpush.bf16.msra.mxu0 %v4118
    %4293 = vmatpush.bf16.msra.mxu0 %v4116
    %4294 = vmatpush.bf16.msra.mxu0 %v4114
    %4295 = vmatpush.bf16.msra.mxu0 %v4112
    %4296 = vmatpush.bf16.msra.mxu0 %v4110
    %4297 = vmatmul.bf16.gmra.mxu0 %v3843
    %v4298 = vpop.f32.mrf.mxu0
    %v4299 = vadd.f32 %v3914, %v4298
    %v4300 = vpop.f32.mrf.mxu0
    %4301 = vdwg.mxu0
    %4302 = vmatpush.bf16.msra.mxu0 %v4140
    %4303 = vmatpush.bf16.msra.mxu0 %v4138
    %4304 = vmatpush.bf16.msra.mxu0 %v4136
    %4305 = vmatpush.bf16.msra.mxu0 %v4134
    %4306 = vmatpush.bf16.msra.mxu0 %v4132
    %4307 = vmatpush.bf16.msra.mxu0 %v4130
    %4308 = vmatpush.bf16.msra.mxu0 %v4128
    %4309 = vmatpush.bf16.msra.mxu0 %v4126
    %4310 = vmatmul.bf16.gmra.mxu0 %v3844
    %v4311 = vpop.f32.mrf.mxu0
    %v4312 = vadd.f32 %v4299, %v4311
    %v4313 = vpop.f32.mrf.mxu0
    %4314 = vdwg.mxu0
    %4315 = vmatpush.bf16.msra.mxu0 %v4156
    %4316 = vmatpush.bf16.msra.mxu0 %v4154
    %4317 = vmatpush.bf16.msra.mxu0 %v4152
    %4318 = vmatpush.bf16.msra.mxu0 %v4150
    %4319 = vmatpush.bf16.msra.mxu0 %v4148
    %4320 = vmatpush.bf16.msra.mxu0 %v4146
    %4321 = vmatpush.bf16.msra.mxu0 %v4144
    %4322 = vmatpush.bf16.msra.mxu0 %v4142
    %4323 = vmatmul.bf16.gmra.mxu0 %v3845
    %v4324 = vpop.f32.mrf.mxu0
    %v4325 = vadd.f32 %v4312, %v4324
    %v4326 = vpop.f32.mrf.mxu0
    %4327 = vdwg.mxu0
    %4328 = vmatpush.bf16.msra.mxu0 %v4172
    %4329 = vmatpush.bf16.msra.mxu0 %v4170
    %4330 = vmatpush.bf16.msra.mxu0 %v4168
    %4331 = vmatpush.bf16.msra.mxu0 %v4166
    %4332 = vmatpush.bf16.msra.mxu0 %v4164
    %4333 = vmatpush.bf16.msra.mxu0 %v4162
    %4334 = vmatpush.bf16.msra.mxu0 %v4160
    %4335 = vmatpush.bf16.msra.mxu0 %v4158
    %4336 = vmatmul.bf16.gmra.mxu0 %v3846
    %v4337 = vpop.f32.mrf.mxu0
    %v4338 = vadd.f32 %v4325, %v4337
    %v4339 = vpop.f32.mrf.mxu0
    %4340 = vdwg.mxu0
    %v4341 = vpack.c.bf16 %v2343, %v2343
    %v4342 = vpack.c.bf16 %v2344, %v2344
    %v4343 = vld [vmem:[#allocation16] sm:$0xf]
    %v4344 = vld [vmem:[#allocation16 + $0x4] sm:$0xf]
    %v4345 = vld [vmem:[#allocation16 + $0x8] sm:$0xf]
    %v4346 = vld [vmem:[#allocation16 + $0xc] sm:$0xf]
    %v4347 = vld [vmem:[#allocation16 + $0x10] sm:$0xf]
    %v4348 = vld [vmem:[#allocation16 + $0x14] sm:$0xf]
    %v4349 = vld [vmem:[#allocation16 + $0x18] sm:$0xf]
    %v4350 = vld [vmem:[#allocation16 + $0x1c] sm:$0xf]
    %v4351 = vld [vmem:[#allocation16 + $0x20] sm:$0xf]
    %v4352 = vld [vmem:[#allocation16 + $0x24] sm:$0xf]
    %v4353 = vld [vmem:[#allocation16 + $0x28] sm:$0xf]
    %v4354 = vld [vmem:[#allocation16 + $0x2c] sm:$0xf]
    %v4355 = vld [vmem:[#allocation16 + $0x30] sm:$0xf]
    %v4356 = vld [vmem:[#allocation16 + $0x34] sm:$0xf]
    %v4357 = vld [vmem:[#allocation16 + $0x38] sm:$0xf]
    %v4358 = vld [vmem:[#allocation16 + $0x3c] sm:$0xf]
    %v4359 = vld [vmem:[#allocation16 + $0x40] sm:$0xf]
    %v4360 = vld [vmem:[#allocation16 + $0x44] sm:$0xf]
    %v4361 = vld [vmem:[#allocation16 + $0x48] sm:$0xf]
    %v4362 = vld [vmem:[#allocation16 + $0x4c] sm:$0xf]
    %v4363 = vld [vmem:[#allocation16 + $0x50] sm:$0xf]
    %v4364 = vld [vmem:[#allocation16 + $0x54] sm:$0xf]
    %v4365 = vld [vmem:[#allocation16 + $0x58] sm:$0xf]
    %v4366 = vld [vmem:[#allocation16 + $0x5c] sm:$0xf]
    %v4367 = vld [vmem:[#allocation16 + $0x60] sm:$0xf]
    %v4368 = vld [vmem:[#allocation16 + $0x64] sm:$0xf]
    %v4369 = vld [vmem:[#allocation16 + $0x68] sm:$0xf]
    %v4370 = vld [vmem:[#allocation16 + $0x6c] sm:$0xf]
    %v4371 = vld [vmem:[#allocation16 + $0x70] sm:$0xf]
    %v4372 = vld [vmem:[#allocation16 + $0x74] sm:$0xf]
    %v4373 = vld [vmem:[#allocation16 + $0x78] sm:$0xf]
    %v4374 = vld [vmem:[#allocation16 + $0x7c] sm:$0xf]
    %v4375 = vpack.c.bf16 %v4286, %v4286
    %v4376 = vpack.c.bf16 %v4338, %v4338
    %v4377 = vld [vmem:[#allocation18] sm:$0xf]
    %v4378 = vld [vmem:[#allocation18 + $0x4] sm:$0xf]
    %v4379 = vld [vmem:[#allocation18 + $0x8] sm:$0xf]
    %v4380 = vld [vmem:[#allocation18 + $0xc] sm:$0xf]
    %v4381 = vld [vmem:[#allocation18 + $0x10] sm:$0xf]
    %v4382 = vld [vmem:[#allocation18 + $0x14] sm:$0xf]
    %v4383 = vld [vmem:[#allocation18 + $0x18] sm:$0xf]
    %v4384 = vld [vmem:[#allocation18 + $0x1c] sm:$0xf]
    %v4385 = vld [vmem:[#allocation18 + $0x20] sm:$0xf]
    %v4386 = vld [vmem:[#allocation18 + $0x24] sm:$0xf]
    %v4387 = vld [vmem:[#allocation18 + $0x28] sm:$0xf]
    %v4388 = vld [vmem:[#allocation18 + $0x2c] sm:$0xf]
    %v4389 = vld [vmem:[#allocation18 + $0x30] sm:$0xf]
    %v4390 = vld [vmem:[#allocation18 + $0x34] sm:$0xf]
    %v4391 = vld [vmem:[#allocation18 + $0x38] sm:$0xf]
    %v4392 = vld [vmem:[#allocation18 + $0x3c] sm:$0xf]
    %v4393 = vld [vmem:[#allocation18 + $0x40] sm:$0xf]
    %v4394 = vld [vmem:[#allocation18 + $0x44] sm:$0xf]
    %v4395 = vld [vmem:[#allocation18 + $0x48] sm:$0xf]
    %v4396 = vld [vmem:[#allocation18 + $0x4c] sm:$0xf]
    %v4397 = vld [vmem:[#allocation18 + $0x50] sm:$0xf]
    %v4398 = vld [vmem:[#allocation18 + $0x54] sm:$0xf]
    %v4399 = vld [vmem:[#allocation18 + $0x58] sm:$0xf]
    %v4400 = vld [vmem:[#allocation18 + $0x5c] sm:$0xf]
    %v4401 = vld [vmem:[#allocation18 + $0x60] sm:$0xf]
    %v4402 = vld [vmem:[#allocation18 + $0x64] sm:$0xf]
    %v4403 = vld [vmem:[#allocation18 + $0x68] sm:$0xf]
    %v4404 = vld [vmem:[#allocation18 + $0x6c] sm:$0xf]
    %v4405 = vld [vmem:[#allocation18 + $0x70] sm:$0xf]
    %v4406 = vld [vmem:[#allocation18 + $0x74] sm:$0xf]
    %v4407 = vld [vmem:[#allocation18 + $0x78] sm:$0xf]
    %v4408 = vld [vmem:[#allocation18 + $0x7c] sm:$0xf]
    %v4441 = vunpack.c.l.b16 %v4377
    %v4442 = vunpack.c.l.b16 %v4378
    %v4443 = vunpack.c.l.b16 %v4379
    %v4444 = vunpack.c.l.b16 %v4380
    %v4445 = vunpack.c.l.b16 %v4381
    %v4446 = vunpack.c.l.b16 %v4382
    %v4447 = vunpack.c.l.b16 %v4383
    %v4448 = vunpack.c.l.b16 %v4384
    %v4449 = vunpack.c.l.b16 %v4385
    %v4450 = vunpack.c.l.b16 %v4386
    %v4451 = vunpack.c.l.b16 %v4387
    %v4452 = vunpack.c.l.b16 %v4388
    %v4453 = vunpack.c.l.b16 %v4389
    %v4454 = vunpack.c.l.b16 %v4390
    %v4455 = vunpack.c.l.b16 %v4391
    %v4456 = vunpack.c.l.b16 %v4392
    %v4457 = vunpack.c.l.b16 %v4393
    %v4458 = vunpack.c.l.b16 %v4394
    %v4459 = vunpack.c.l.b16 %v4395
    %v4460 = vunpack.c.l.b16 %v4396
    %v4461 = vunpack.c.l.b16 %v4397
    %v4462 = vunpack.c.l.b16 %v4398
    %v4463 = vunpack.c.l.b16 %v4399
    %v4464 = vunpack.c.l.b16 %v4400
    %v4465 = vunpack.c.l.b16 %v4401
    %v4466 = vunpack.c.l.b16 %v4402
    %v4467 = vunpack.c.l.b16 %v4403
    %v4468 = vunpack.c.l.b16 %v4404
    %v4469 = vunpack.c.l.b16 %v4405
    %v4470 = vunpack.c.l.b16 %v4406
    %v4471 = vunpack.c.l.b16 %v4407
    %v4472 = vunpack.c.l.b16 %v4408
    %v4473 = vpack.c.b16 %v4442, %v4441
    %v4474 = vpack.c.b16 %v4444, %v4443
    %v4475 = vpack.c.b16 %v4446, %v4445
    %v4476 = vpack.c.b16 %v4448, %v4447
    %v4477 = vpack.c.b16 %v4450, %v4449
    %v4478 = vpack.c.b16 %v4452, %v4451
    %v4479 = vpack.c.b16 %v4454, %v4453
    %v4480 = vpack.c.b16 %v4456, %v4455
    %v4481 = vpack.c.b16 %v4458, %v4457
    %v4482 = vpack.c.b16 %v4460, %v4459
    %v4483 = vpack.c.b16 %v4462, %v4461
    %v4484 = vpack.c.b16 %v4464, %v4463
    %v4485 = vpack.c.b16 %v4466, %v4465
    %v4486 = vpack.c.b16 %v4468, %v4467
    %v4487 = vpack.c.b16 %v4470, %v4469
    %v4488 = vpack.c.b16 %v4472, %v4471
    %4505 = vmatpush.bf16.msra.mxu0 %v4480
    %4506 = vmatpush.bf16.msra.mxu0 %v4479
    %4507 = vmatpush.bf16.msra.mxu0 %v4478
    %4508 = vmatpush.bf16.msra.mxu0 %v4477
    %4509 = vmatpush.bf16.msra.mxu0 %v4476
    %4510 = vmatpush.bf16.msra.mxu0 %v4475
    %4511 = vmatpush.bf16.msra.mxu0 %v4474
    %4512 = vmatpush.bf16.msra.mxu0 %v4473
    %4513 = vmatmul.bf16.gmra.mxu0 %v4375
    %v4514 = vpop.f32.mrf.mxu0
    %v4515 = vadd.f32 0.0, %v4514
    %v4516 = vpop.f32.mrf.mxu0
    %4517 = vdwg.mxu0
    %4518 = vmatpush.bf16.msra.mxu0 %v4488
    %4519 = vmatpush.bf16.msra.mxu0 %v4487
    %4520 = vmatpush.bf16.msra.mxu0 %v4486
    %4521 = vmatpush.bf16.msra.mxu0 %v4485
    %4522 = vmatpush.bf16.msra.mxu0 %v4484
    %4523 = vmatpush.bf16.msra.mxu0 %v4483
    %4524 = vmatpush.bf16.msra.mxu0 %v4482
    %4525 = vmatpush.bf16.msra.mxu0 %v4481
    %4526 = vmatmul.bf16.gmra.mxu0 %v4376
    %v4527 = vpop.f32.mrf.mxu0
    %v4528 = vadd.f32 %v4515, %v4527
    %v4529 = vpop.f32.mrf.mxu0
    %4530 = vdwg.mxu0
    %v4563 = vunpack.c.l.b16 %v4343
    %v4564 = vunpack.c.l.b16 %v4344
    %v4565 = vunpack.c.l.b16 %v4345
    %v4566 = vunpack.c.l.b16 %v4346
    %v4567 = vunpack.c.l.b16 %v4347
    %v4568 = vunpack.c.l.b16 %v4348
    %v4569 = vunpack.c.l.b16 %v4349
    %v4570 = vunpack.c.l.b16 %v4350
    %v4571 = vunpack.c.l.b16 %v4351
    %v4572 = vunpack.c.l.b16 %v4352
    %v4573 = vunpack.c.l.b16 %v4353
    %v4574 = vunpack.c.l.b16 %v4354
    %v4575 = vunpack.c.l.b16 %v4355
    %v4576 = vunpack.c.l.b16 %v4356
    %v4577 = vunpack.c.l.b16 %v4357
    %v4578 = vunpack.c.l.b16 %v4358
    %v4579 = vunpack.c.l.b16 %v4359
    %v4580 = vunpack.c.l.b16 %v4360
    %v4581 = vunpack.c.l.b16 %v4361
    %v4582 = vunpack.c.l.b16 %v4362
    %v4583 = vunpack.c.l.b16 %v4363
    %v4584 = vunpack.c.l.b16 %v4364
    %v4585 = vunpack.c.l.b16 %v4365
    %v4586 = vunpack.c.l.b16 %v4366
    %v4587 = vunpack.c.l.b16 %v4367
    %v4588 = vunpack.c.l.b16 %v4368
    %v4589 = vunpack.c.l.b16 %v4369
    %v4590 = vunpack.c.l.b16 %v4370
    %v4591 = vunpack.c.l.b16 %v4371
    %v4592 = vunpack.c.l.b16 %v4372
    %v4593 = vunpack.c.l.b16 %v4373
    %v4594 = vunpack.c.l.b16 %v4374
    %v4595 = vpack.c.b16 %v4564, %v4563
    %v4596 = vpack.c.b16 %v4566, %v4565
    %v4597 = vpack.c.b16 %v4568, %v4567
    %v4598 = vpack.c.b16 %v4570, %v4569
    %v4599 = vpack.c.b16 %v4572, %v4571
    %v4600 = vpack.c.b16 %v4574, %v4573
    %v4601 = vpack.c.b16 %v4576, %v4575
    %v4602 = vpack.c.b16 %v4578, %v4577
    %v4603 = vpack.c.b16 %v4580, %v4579
    %v4604 = vpack.c.b16 %v4582, %v4581
    %v4605 = vpack.c.b16 %v4584, %v4583
    %v4606 = vpack.c.b16 %v4586, %v4585
    %v4607 = vpack.c.b16 %v4588, %v4587
    %v4608 = vpack.c.b16 %v4590, %v4589
    %v4609 = vpack.c.b16 %v4592, %v4591
    %v4610 = vpack.c.b16 %v4594, %v4593
    %4627 = vmatpush.bf16.msra.mxu0 %v4602
    %4628 = vmatpush.bf16.msra.mxu0 %v4601
    %4629 = vmatpush.bf16.msra.mxu0 %v4600
    %4630 = vmatpush.bf16.msra.mxu0 %v4599
    %4631 = vmatpush.bf16.msra.mxu0 %v4598
    %4632 = vmatpush.bf16.msra.mxu0 %v4597
    %4633 = vmatpush.bf16.msra.mxu0 %v4596
    %4634 = vmatpush.bf16.msra.mxu0 %v4595
    %4635 = vmatmul.bf16.gmra.mxu0 %v4341
    %v4636 = vpop.f32.mrf.mxu0
    %v4637 = vadd.f32 %v4528, %v4636
    %v4638 = vpop.f32.mrf.mxu0
    %4639 = vdwg.mxu0
    %4640 = vmatpush.bf16.msra.mxu0 %v4610
    %4641 = vmatpush.bf16.msra.mxu0 %v4609
    %4642 = vmatpush.bf16.msra.mxu0 %v4608
    %4643 = vmatpush.bf16.msra.mxu0 %v4607
    %4644 = vmatpush.bf16.msra.mxu0 %v4606
    %4645 = vmatpush.bf16.msra.mxu0 %v4605
    %4646 = vmatpush.bf16.msra.mxu0 %v4604
    %4647 = vmatpush.bf16.msra.mxu0 %v4603
    %4648 = vmatmul.bf16.gmra.mxu0 %v4342
    %v4649 = vpop.f32.mrf.mxu0
    %v4650 = vadd.f32 %v4637, %v4649
    %v4651 = vpop.f32.mrf.mxu0
    %4652 = vdwg.mxu0
    %v4653 = vld [vmem:[%s17] sm:$0x1]
    %v4655 = vperm.slane %v4653, 0
    %v4657 = vadd.f32 %v4650, %v4655
    %4658 = vst [vmem:[%s18] sm:$0xff] %v4657
    // Predicated region
    $region118: #{qnetwork_forward.1} parent=1 // pred_check
      _
    $region119: #{qnetwork_forward.1} parent=1 // pred_check_branch
      %4660 = sbr.rel (0) target = $region121
    $region120: #{qnetwork_forward.1} parent=1 // pred_region
      _
    $region121: #{qnetwork_forward.1} parent=1 // pred_fallthru
      _
    // Predicated region
    $region122: #{qnetwork_forward.1} parent=1 // pred_check
      _
    $region123: #{qnetwork_forward.1} parent=1 // pred_check_branch
      %4662 = sbr.rel (0) target = $region125
    $region124: #{qnetwork_forward.1} parent=1 // pred_region
      _
    $region125: #{qnetwork_forward.1} parent=1 // pred_fallthru
      _
    %4663 = vsyncpa [#allocation3], 1
    %4664 = vsyncpa [#allocation5], 1
    %4665 = vsyncpa [#allocation8], 1
    %4666 = vsyncpa [#allocation11], 1
    %4667 = vsyncpa [#allocation14], 1
    %4668 = vsyncpa [#allocation17], 1

</llo_original>
